<compile_context>
chip_gen: v7x
topology: tpu7x:2x2x1
jax: 0.10.0
libtpu: 0.0.40
codegen_flags: <defaults>
</compile_context>

<pallas_src>
import functools
import math

import jax
import jax.numpy as jnp
from jax import lax
from jax.experimental import pallas as pl
from jax.experimental.pallas import tpu as pltpu

LANE = 128       # lane width (last dim)
T_BLK_CAP = 32   # max time steps per grid step


def _round_up(x, m):
    return (x + m - 1) // m * m


def _sublane(dtype):
    # bf16 packs 2 rows per sublane -> keep the batch pad a multiple of 16.
    return 16 if jnp.dtype(dtype).itemsize == 2 else 8


def _choose_t_blk(t, bp):
    """Time-block size. Targets ~256 MXU rows (t_blk*bp) for the hoisted block
    projection (fills the 256-wide v6e/v7x MXU; on v5e extra rows just
    serialize but grid-step overhead still drops). Never degenerates to 1 for
    awkward T: prefer an exact divisor of T if it is not tiny, otherwise pad T
    up to a multiple of the target and mask the padded steps."""
    target = max(1, min(T_BLK_CAP, 256 // bp, t))
    for d in range(target, 0, -1):
        if t % d == 0 and 2 * d >= target:
            return d
    return target


@functools.lru_cache(maxsize=None)
def _vmem_limit_bytes():
    # Generation-aware VMEM limit: ~85% of physical (leaves headroom for Mosaic
    # internal scratch on v7x's 64 MiB), never more than 100 MiB on v5e/v6e.
    try:
        cap = pltpu.get_tpu_info().vmem_capacity_bytes
    except Exception:
        cap = 128 * 1024 * 1024
    return int(min(cap * 0.85, 100 * 1024 * 1024))


def _compiler_params():
    return pltpu.CompilerParams(
        dimension_semantics=("arbitrary",),   # h/c carry -> sequential time grid
        vmem_limit_bytes=_vmem_limit_bytes(),
    )


def _lstm_cost(t, bp, d, hp):
    matmul = 2 * t * bp * (d + hp) * 4 * hp
    elem = 10 * t * bp * hp
    return pl.CostEstimate(
        flops=matmul + elem,
        transcendentals=5 * t * bp * hp,
        bytes_accessed=4 * (t * bp * d + (d + hp + 1) * 4 * hp + t * bp * hp),
    )


# ---------------------------------------------------------------------------
# Shared recurrent block body.
#   x_ref   : (t_blk, BP, D)   current time block
#   wih_ref : (D, 4*HP)        whole-array VMEM resident
#   whh_ref : (HP, 4*HP)       whole-array VMEM resident
#   b_ref   : (1, 4*HP) f32    b_ih + b_hh (gate-padded)
#   h_scr/c_scr : (BP, HP) f32 persistent state across the time grid
#   xg_scr  : (t_blk, BP, 4*HP) f32 scratch for the hoisted projection
# PyTorch gate order [i, f, g, o]; each gate is HP (128-aligned) lanes wide.
# ---------------------------------------------------------------------------
def _lstm_block_steps(x_ref, wih_ref, whh_ref, b_ref, h_scr, c_scr, xg_scr,
                      emit, *, t_valid):
    t_blk, bp, d = x_ref.shape
    hp = h_scr.shape[-1]
    w_dtype = wih_ref.dtype

    # Hoisted input projection: one (t_blk*bp, d) x (d, 4hp) MXU matmul for the
    # whole time block (bias folded in), stored to VMEM scratch so the per-step
    # loop indexes a ref (keeps live ranges bounded for large HP).
    xg_scr[...] = (
        jnp.dot(x_ref[...].reshape(t_blk * bp, d).astype(w_dtype),
                wih_ref[...], preferred_element_type=jnp.float32)
        + b_ref[...]
    ).reshape(t_blk, bp, 4 * hp)

    whh = whh_ref[...]
    t0 = pl.program_id(0) * t_blk

    def step(t, carry):
        h, c = carry
        gates = xg_scr[t] + jnp.dot(h.astype(w_dtype), whh,
                                    preferred_element_type=jnp.float32)
        i_g = jax.nn.sigmoid(gates[:, 0 * hp:1 * hp])
        f_g = jax.nn.sigmoid(gates[:, 1 * hp:2 * hp])
        g_g = jnp.tanh(gates[:, 2 * hp:3 * hp])
        o_g = jax.nn.sigmoid(gates[:, 3 * hp:4 * hp])
        c_new = f_g * c + i_g * g_g
        h_new = o_g * jnp.tanh(c_new)
        if t_valid is not None:
            # Padded tail steps must NOT advance the recurrence.
            valid = (t0 + t) < t_valid
            h_new = jnp.where(valid, h_new, h)
            c_new = jnp.where(valid, c_new, c)
        emit(t, h_new)
        return (h_new, c_new)

    # unroll=True keeps LLO scheduler visibility; use a partial unroll (e.g. 4)
    # for very large HP if register pressure becomes an issue.
    h, c = lax.fori_loop(0, t_blk, step, (h_scr[...], c_scr[...]), unroll=True)
    h_scr[...] = h
    c_scr[...] = c


# --- kernel A: emit the full hidden sequence (feeds the next LSTM layer) -----
def lstm_seq_kernel(x_ref, wih_ref, whh_ref, b_ref, out_ref,
                    h_scr, c_scr, xg_scr, *, t_valid):
    @pl.when(pl.program_id(0) == 0)
    def _():
        h_scr[...] = jnp.zeros_like(h_scr)   # h0 = 0
        c_scr[...] = jnp.zeros_like(c_scr)   # c0 = 0

    def emit(t, h):
        out_ref[t] = h.astype(out_ref.dtype)

    _lstm_block_steps(x_ref, wih_ref, whh_ref, b_ref, h_scr, c_scr, xg_scr,
                      emit, t_valid=t_valid)


# --- kernel B: last layer, fused Linear(H, 1) on the final hidden state ------
def lstm_last_kernel(x_ref, wih_ref, whh_ref, b_ref, fcw_ref, fcb_ref,
                     out_ref, h_scr, c_scr, xg_scr, *, t_valid):
    @pl.when(pl.program_id(0) == 0)
    def _():
        h_scr[...] = jnp.zeros_like(h_scr)
        c_scr[...] = jnp.zeros_like(c_scr)

    _lstm_block_steps(x_ref, wih_ref, whh_ref, b_ref, h_scr, c_scr, xg_scr,
                      lambda t, h: None, t_valid=t_valid)

    @pl.when(pl.program_id(0) == pl.num_programs(0) - 1)
    def _():
        h = h_scr[...]
        out_ref[...] = (
            jnp.dot(h.astype(fcw_ref.dtype), fcw_ref[...],
                    preferred_element_type=jnp.float32)
            + fcb_ref[...]
        ).astype(out_ref.dtype)


# ---------------------------------------------------------------------------
# pallas_call wrappers
# ---------------------------------------------------------------------------
# Grid-invariant operands: whole-array VMEM residency -> a single copy for the
# entire grid (implements the reviewer's "single-buffer the weights" request).
_RESIDENT = pl.BlockSpec(memory_space=pltpu.MemorySpace.VMEM)


def lstm_layer_seq(x_tbd, wih_t, whh_t, bias, *, t_blk, t_valid, out_dtype):
    """x_tbd: (TP, BP, D) -> (TP, BP, HP) hidden states of this layer."""
    TP, BP, D = x_tbd.shape
    G = wih_t.shape[1]
    HP = G // 4
    kernel = functools.partial(
        lstm_seq_kernel, t_valid=None if t_valid == TP else t_valid)
    return pl.pallas_call(
        kernel,
        out_shape=jax.ShapeDtypeStruct((TP, BP, HP), out_dtype),
        grid_spec=pltpu.PrefetchScalarGridSpec(
            num_scalar_prefetch=0,
            grid=(TP // t_blk,),
            in_specs=[
                pl.BlockSpec((t_blk, BP, D), lambda i: (i, 0, 0)),
                _RESIDENT,   # wih_t
                _RESIDENT,   # whh_t
                _RESIDENT,   # bias
            ],
            out_specs=pl.BlockSpec((t_blk, BP, HP), lambda i: (i, 0, 0)),
            scratch_shapes=[
                pltpu.VMEM((BP, HP), jnp.float32),
                pltpu.VMEM((BP, HP), jnp.float32),
                pltpu.VMEM((t_blk, BP, 4 * HP), jnp.float32),
            ],
        ),
        compiler_params=_compiler_params(),
        cost_estimate=_lstm_cost(TP, BP, D, HP),
    )(x_tbd, wih_t, whh_t, bias)


def lstm_layer_last(x_tbd, wih_t, whh_t, bias, fc_w_t, fc_b, *, t_blk, t_valid):
    """Last LSTM layer fused with Linear(H, 1): (TP, BP, D) -> (BP, 1)."""
    TP, BP, D = x_tbd.shape
    G = wih_t.shape[1]
    HP = G // 4
    kernel = functools.partial(
        lstm_last_kernel, t_valid=None if t_valid == TP else t_valid)
    return pl.pallas_call(
        kernel,
        out_shape=jax.ShapeDtypeStruct((BP, 1), jnp.float32),
        grid_spec=pltpu.PrefetchScalarGridSpec(
            num_scalar_prefetch=0,
            grid=(TP // t_blk,),
            in_specs=[
                pl.BlockSpec((t_blk, BP, D), lambda i: (i, 0, 0)),
                _RESIDENT,   # wih_t
                _RESIDENT,   # whh_t
                _RESIDENT,   # bias
                _RESIDENT,   # fc_w_t
                _RESIDENT,   # fc_b
            ],
            out_specs=pl.BlockSpec((BP, 1), lambda i: (0, 0)),
            scratch_shapes=[
                pltpu.VMEM((BP, HP), jnp.float32),
                pltpu.VMEM((BP, HP), jnp.float32),
                pltpu.VMEM((t_blk, BP, 4 * HP), jnp.float32),
            ],
        ),
        compiler_params=_compiler_params(),
        cost_estimate=_lstm_cost(TP, BP, D, HP),
    )(x_tbd, wih_t, whh_t, bias, fc_w_t, fc_b)


# ---------------------------------------------------------------------------
# Parameters: PyTorch-style raw params + padded/transposed kernel params.
# ---------------------------------------------------------------------------
def init_params(key, input_dim, hidden_dim, num_layers):
    bound = 1.0 / math.sqrt(hidden_dim)
    layers = []
    for layer in range(num_layers):
        d_in = input_dim if layer == 0 else hidden_dim
        key, k1, k2, k3, k4 = jax.random.split(key, 5)
        layers.append(dict(
            w_ih=jax.random.uniform(k1, (4 * hidden_dim, d_in), jnp.float32,
                                    -bound, bound),
            w_hh=jax.random.uniform(k2, (4 * hidden_dim, hidden_dim),
                                    jnp.float32, -bound, bound),
            b_ih=jax.random.uniform(k3, (4 * hidden_dim,), jnp.float32,
                                    -bound, bound),
            b_hh=jax.random.uniform(k4, (4 * hidden_dim,), jnp.float32,
                                    -bound, bound),
        ))
    key, k5, k6 = jax.random.split(key, 3)
    fc_w = jax.random.uniform(k5, (1, hidden_dim), jnp.float32, -bound, bound)
    fc_b = jax.random.uniform(k6, (1,), jnp.float32, -bound, bound)
    return dict(layers=layers, fc_w=fc_w, fc_b=fc_b,
                input_dim=input_dim, hidden_dim=hidden_dim)


def _pad_gate_cols(w_t, h, hp):
    """w_t: (rows, 4h) with gate blocks [i|f|g|o]; zero-pad each block to hp."""
    rows = w_t.shape[0]
    w4 = w_t.reshape(rows, 4, h)
    w4 = jnp.pad(w4, ((0, 0), (0, 0), (0, hp - h)))
    return w4.reshape(rows, 4 * hp)


def prepare_params(raw, *, dtype=jnp.float32):
    """Padded, kernel-layout parameter tree (arrays only).

    dtype=jnp.bfloat16 halves the resident weight VMEM and inter-layer HBM
    traffic (v7x feedback); matmuls keep f32 accumulation, gate math and the
    final FC stay f32."""
    H = raw["hidden_dim"]
    D = raw["input_dim"]
    HP = _round_up(H, LANE)
    DP = _round_up(D, LANE)       # lane-dense layer-0 projection LHS
    layers = []
    for idx, lp in enumerate(raw["layers"]):
        wih_t = _pad_gate_cols(lp["w_ih"].T, H, HP)               # (d_in, 4HP)
        rows_to = DP if idx == 0 else HP
        wih_t = jnp.pad(wih_t, ((0, rows_to - wih_t.shape[0]), (0, 0)))
        whh_t = _pad_gate_cols(lp["w_hh"].T, H, HP)
        whh_t = jnp.pad(whh_t, ((0, HP - H), (0, 0)))              # (HP, 4HP)
        bias = _pad_gate_cols((lp["b_ih"] + lp["b_hh"]).reshape(1, 4 * H),
                              H, HP)                               # (1, 4HP)
        layers.append(dict(wih_t=wih_t.astype(dtype),
                           whh_t=whh_t.astype(dtype),
                           bias=bias.astype(jnp.float32)))
    fc_w_t = jnp.pad(raw["fc_w"].T, ((0, HP - H), (0, 0)))         # (HP, 1)
    fc_b = raw["fc_b"].reshape(1, 1)                               # (1, 1)
    return dict(layers=layers, fc_w_t=fc_w_t, fc_b=fc_b)


# ---------------------------------------------------------------------------
# Forward pass (matches LSTMModel.forward): (B, T, D) -> (B,)
# ---------------------------------------------------------------------------
def lstm_model_forward(kparams, x_btd):
    B, T, D = x_btd.shape
    layers = kparams["layers"]
    act_dtype = layers[0]["whh_t"].dtype        # inter-layer activation dtype
    BP = _round_up(B, _sublane(act_dtype))
    DP = layers[0]["wih_t"].shape[0]
    t_blk = _choose_t_blk(T, BP)
    TP = _round_up(T, t_blk)

    # Single materialized copy: time-major, then one fused pad of the time
    # (block multiple), batch (sublane multiple) and feature (lane multiple)
    # axes. Zero padding is exact: padded hidden lanes / batch rows stay 0 and
    # padded time steps are masked out of the recurrence in-kernel.
    seq = jnp.transpose(x_btd, (1, 0, 2))                          # (T, B, D)
    seq = jnp.pad(seq, ((0, TP - T), (0, BP - B), (0, DP - D)))    # (TP,BP,DP)

    n_layers = len(layers)
    for idx, lp in enumerate(layers):
        if idx == n_layers - 1:
            y = lstm_layer_last(seq, lp["wih_t"], lp["whh_t"], lp["bias"],
                                kparams["fc_w_t"], kparams["fc_b"],
                                t_blk=t_blk, t_valid=T)             # (BP, 1)
            return y[:B, 0]                                         # .squeeze(-1)
        seq = lstm_layer_seq(seq, lp["wih_t"], lp["whh_t"], lp["bias"],
                             t_blk=t_blk, t_valid=T,
                             out_dtype=act_dtype)                   # (TP,BP,HP)


# ---------------------------------------------------------------------------
# Pure-JAX reference (unpadded math) for sanity checking.
# ---------------------------------------------------------------------------
def reference_forward(raw, x_btd):
    B, T, _ = x_btd.shape
    H = raw["hidden_dim"]
    seq = jnp.transpose(x_btd, (1, 0, 2))
    for lp in raw["layers"]:
        wih_t, whh_t = lp["w_ih"].T, lp["w_hh"].T
        bias = (lp["b_ih"] + lp["b_hh"])[None, :]
        h = jnp.zeros((B, H), jnp.float32)
        c = jnp.zeros((B, H), jnp.float32)
        outs = []
        for t in range(T):
            gates = seq[t] @ wih_t + h @ whh_t + bias
            i = jax.nn.sigmoid(gates[:, :H])
            f = jax.nn.sigmoid(gates[:, H:2 * H])
            g = jnp.tanh(gates[:, 2 * H:3 * H])
            o = jax.nn.sigmoid(gates[:, 3 * H:4 * H])
            c = f * c + i * g
            h = o * jnp.tanh(c)
            outs.append(h)
        seq = jnp.stack(outs, axis=0)
    y = seq[-1] @ raw["fc_w"].T + raw["fc_b"]
    return y[:, 0]


if __name__ == "__main__":
    B, T, D, H, L = 2, 8, 16, 32, 2

    key = jax.random.PRNGKey(0)
    key, kx = jax.random.split(key)
    x = jax.random.normal(kx, (B, T, D), jnp.float32)

    raw_params = init_params(key, input_dim=D, hidden_dim=H, num_layers=L)
    ref = reference_forward(raw_params, x)

    fwd = jax.jit(lstm_model_forward)

    # 1) f32 weights / activations: must match the f32 reference tightly.
    kp32 = prepare_params(raw_params)
    out32 = jax.block_until_ready(fwd(kp32, x))
    assert out32.shape == (B,)
    assert jnp.allclose(out32, ref, atol=1e-4, rtol=1e-4), (out32, ref)

    # 2) bf16 weights + bf16 inter-layer activations (v7x VMEM/HBM saver);
    #    f32 accumulation and f32 gate math are retained -> small deviation.
    kp16 = prepare_params(raw_params, dtype=jnp.bfloat16)
    out16 = jax.block_until_ready(fwd(kp16, x))
    assert out16.shape == (B,)
    assert jnp.allclose(out16, ref, atol=5e-2, rtol=5e-2), (out16, ref)

    # 3) Awkward (prime) sequence length: exercises the padded-T path where
    #    tail steps are masked out of the recurrence instead of falling back
    #    to a degenerate t_blk=1 grid.
    T2 = 37
    key, kx2 = jax.random.split(key)
    x2 = jax.random.normal(kx2, (B, T2, D), jnp.float32)
    ref2 = reference_forward(raw_params, x2)
    out2 = jax.block_until_ready(fwd(kp32, x2))
    assert out2.shape == (B,)
    assert jnp.allclose(out2, ref2, atol=2e-3, rtol=2e-3), (out2, ref2)

    print("KERNEL_OK")
</pallas_src>

<mosaic_0001>
module attributes {stable_mosaic.version = 11 : i64} {
  func.func @lstm_seq_kernel(%arg0: i32, %arg1: memref<8x8x128xf32, #tpu.memory_space<vmem>>, %arg2: memref<128x512xf32, #tpu.memory_space<vmem>>, %arg3: memref<128x512xf32, #tpu.memory_space<vmem>>, %arg4: memref<1x512xf32, #tpu.memory_space<vmem>>, %arg5: memref<8x8x128xf32, #tpu.memory_space<vmem>>, %arg6: memref<8x128xf32, #tpu.memory_space<vmem>>, %arg7: memref<8x128xf32, #tpu.memory_space<vmem>>, %arg8: memref<8x8x512xf32, #tpu.memory_space<vmem>>) attributes {dimension_semantics = [#tpu.dimension_semantics<arbitrary>], iteration_bounds = array<i64: 1>, scalar_prefetch = 0 : i64, scratch_operands = 3 : i64, tpu.core_type = #tpu.core_type<tc>, window_params = [{transform_indices = @transform_0, window_bounds = array<i64: 8, 8, 128>}, {pipeline_mode = #tpu.pipeline_mode<synchronous>, transform_indices = @transform_1, window_bounds = array<i64: 128, 512>}, {pipeline_mode = #tpu.pipeline_mode<synchronous>, transform_indices = @transform_2, window_bounds = array<i64: 128, 512>}, {pipeline_mode = #tpu.pipeline_mode<synchronous>, transform_indices = @transform_3, window_bounds = array<i64: 1, 512>}, {transform_indices = @transform_4, window_bounds = array<i64: 8, 8, 128>}]} {
    %c0_i32 = arith.constant 0 : i32
    %0 = arith.cmpi eq, %arg0, %c0_i32 : i32
    %1 = arith.extui %0 : i1 to i32
    %c0_i32_0 = arith.constant 0 : i32
    %2 = arith.cmpi ne, %1, %c0_i32_0 : i32
    scf.if %2 {
      %cst_85 = arith.constant 0.000000e+00 : f32
      %289 = vector.broadcast %cst_85 : f32 to vector<8x128xf32>
      %c0_86 = arith.constant 0 : index
      %c0_87 = arith.constant 0 : index
      %290 = vector.load %arg6[%c0_86, %c0_87] : memref<8x128xf32, #tpu.memory_space<vmem>>, vector<8x128xf32>
      tpu.vector_store %arg6[%c0_86, %c0_87], %289 {strides = array<i32>} : memref<8x128xf32, #tpu.memory_space<vmem>>, vector<8x128xf32>,
      %cst_88 = arith.constant 0.000000e+00 : f32
      %291 = vector.broadcast %cst_88 : f32 to vector<8x128xf32>
      %c0_89 = arith.constant 0 : index
      %c0_90 = arith.constant 0 : index
      %292 = vector.load %arg7[%c0_89, %c0_90] : memref<8x128xf32, #tpu.memory_space<vmem>>, vector<8x128xf32>
      tpu.vector_store %arg7[%c0_89, %c0_90], %291 {strides = array<i32>} : memref<8x128xf32, #tpu.memory_space<vmem>>, vector<8x128xf32>,
    } else {
    }
    %c0 = arith.constant 0 : index
    %c0_1 = arith.constant 0 : index
    %c0_2 = arith.constant 0 : index
    %3 = vector.load %arg1[%c0, %c0_1, %c0_2] : memref<8x8x128xf32, #tpu.memory_space<vmem>>, vector<8x8x128xf32>
    %4 = vector.shape_cast %3 : vector<8x8x128xf32> to vector<64x128xf32>
    %c0_3 = arith.constant 0 : index
    %c0_4 = arith.constant 0 : index
    %5 = vector.load %arg2[%c0_3, %c0_4] : memref<128x512xf32, #tpu.memory_space<vmem>>, vector<128x512xf32>
    %cst = arith.constant dense<0.000000e+00> : vector<64x512xf32>
    %6 = tpu.matmul %4, %5, %cst {dimension_numbers = #tpu.dot_dimension_numbers<[1], [0], [0], [1], [0, 0, 1, 1], [], []>} : vector<64x128xf32>, vector<128x512xf32>, vector<64x512xf32> -> vector<64x512xf32>
    %c0_5 = arith.constant 0 : index
    %c0_6 = arith.constant 0 : index
    %7 = vector.load %arg4[%c0_5, %c0_6] : memref<1x512xf32, #tpu.memory_space<vmem>>, vector<1x512xf32>
    %8 = vector.broadcast %7 : vector<1x512xf32> to vector<64x512xf32>
    %9 = arith.addf %6, %8 : vector<64x512xf32>
    %10 = vector.shape_cast %9 : vector<64x512xf32> to vector<8x8x512xf32>
    %c0_7 = arith.constant 0 : index
    %c0_8 = arith.constant 0 : index
    %c0_9 = arith.constant 0 : index
    %11 = vector.load %arg8[%c0_7, %c0_8, %c0_9] : memref<8x8x512xf32, #tpu.memory_space<vmem>>, vector<8x8x512xf32>
    tpu.vector_store %arg8[%c0_7, %c0_8, %c0_9], %10 {strides = array<i32>} : memref<8x8x512xf32, #tpu.memory_space<vmem>>, vector<8x8x512xf32>,
    %c0_10 = arith.constant 0 : index
    %c0_11 = arith.constant 0 : index
    %12 = vector.load %arg3[%c0_10, %c0_11] : memref<128x512xf32, #tpu.memory_space<vmem>>, vector<128x512xf32>
    %c0_12 = arith.constant 0 : index
    %c0_13 = arith.constant 0 : index
    %13 = vector.load %arg6[%c0_12, %c0_13] : memref<8x128xf32, #tpu.memory_space<vmem>>, vector<8x128xf32>
    %c0_14 = arith.constant 0 : index
    %c0_15 = arith.constant 0 : index
    %14 = vector.load %arg7[%c0_14, %c0_15] : memref<8x128xf32, #tpu.memory_space<vmem>>, vector<8x128xf32>
    %c0_i32_16 = arith.constant 0 : i32
    %15 = arith.index_cast %c0_i32_16 : i32 to index
    %c0_17 = arith.constant 0 : index
    %c0_18 = arith.constant 0 : index
    %16 = vector.load %arg8[%15, %c0_17, %c0_18] : memref<8x8x512xf32, #tpu.memory_space<vmem>>, vector<1x8x512xf32>
    %17 = vector.shape_cast %16 : vector<1x8x512xf32> to vector<8x512xf32>
    %cst_19 = arith.constant dense<0.000000e+00> : vector<8x512xf32>
    %18 = tpu.matmul %13, %12, %cst_19 {dimension_numbers = #tpu.dot_dimension_numbers<[1], [0], [0], [1], [0, 0, 1, 1], [], []>} : vector<8x128xf32>, vector<128x512xf32>, vector<8x512xf32> -> vector<8x512xf32>
    %19 = arith.addf %17, %18 : vector<8x512xf32>
    %20 = vector.extract_strided_slice %19 {offsets = [0, 0], sizes = [8, 128], strides = [1, 1]} : vector<8x512xf32> to vector<8x128xf32>
    %21 = arith.negf %20 : vector<8x128xf32>
    %22 = math.exp %21 : vector<8x128xf32>
    %cst_20 = arith.constant 1.000000e+00 : f32
    %23 = vector.broadcast %cst_20 : f32 to vector<8x128xf32>
    %24 = arith.addf %23, %22 : vector<8x128xf32>
    %25 = arith.divf %23, %24 : vector<8x128xf32>
    %26 = vector.extract_strided_slice %19 {offsets = [0, 128], sizes = [8, 128], strides = [1, 1]} : vector<8x512xf32> to vector<8x128xf32>
    %27 = arith.negf %26 : vector<8x128xf32>
    %28 = math.exp %27 : vector<8x128xf32>
    %cst_21 = arith.constant 1.000000e+00 : f32
    %29 = vector.broadcast %cst_21 : f32 to vector<8x128xf32>
    %30 = arith.addf %29, %28 : vector<8x128xf32>
    %31 = arith.divf %29, %30 : vector<8x128xf32>
    %32 = vector.extract_strided_slice %19 {offsets = [0, 256], sizes = [8, 128], strides = [1, 1]} : vector<8x512xf32> to vector<8x128xf32>
    %33 = math.tanh %32 : vector<8x128xf32>
    %34 = vector.extract_strided_slice %19 {offsets = [0, 384], sizes = [8, 128], strides = [1, 1]} : vector<8x512xf32> to vector<8x128xf32>
    %35 = arith.negf %34 : vector<8x128xf32>
    %36 = math.exp %35 : vector<8x128xf32>
    %cst_22 = arith.constant 1.000000e+00 : f32
    %37 = vector.broadcast %cst_22 : f32 to vector<8x128xf32>
    %38 = arith.addf %37, %36 : vector<8x128xf32>
    %39 = arith.divf %37, %38 : vector<8x128xf32>
    %40 = arith.mulf %31, %14 : vector<8x128xf32>
    %41 = arith.mulf %25, %33 : vector<8x128xf32>
    %42 = arith.addf %40, %41 : vector<8x128xf32>
    %43 = math.tanh %42 : vector<8x128xf32>
    %44 = arith.mulf %39, %43 : vector<8x128xf32>
    %45 = arith.index_cast %c0_i32_16 : i32 to index
    %c0_23 = arith.constant 0 : index
    %c0_24 = arith.constant 0 : index
    %46 = vector.load %arg5[%45, %c0_23, %c0_24] : memref<8x8x128xf32, #tpu.memory_space<vmem>>, vector<1x8x128xf32>
    %47 = vector.shape_cast %46 : vector<1x8x128xf32> to vector<8x128xf32>
    %48 = vector.shape_cast %44 : vector<8x128xf32> to vector<1x8x128xf32>
    tpu.vector_store %arg5[%45, %c0_23, %c0_24], %48 {strides = array<i32>} : memref<8x8x128xf32, #tpu.memory_space<vmem>>, vector<1x8x128xf32>,
    %c1_i32 = arith.constant 1 : i32
    %49 = arith.index_cast %c1_i32 : i32 to index
    %c0_25 = arith.constant 0 : index
    %c0_26 = arith.constant 0 : index
    %50 = vector.load %arg8[%49, %c0_25, %c0_26] : memref<8x8x512xf32, #tpu.memory_space<vmem>>, vector<1x8x512xf32>
    %51 = vector.shape_cast %50 : vector<1x8x512xf32> to vector<8x512xf32>
    %cst_27 = arith.constant dense<0.000000e+00> : vector<8x512xf32>
    %52 = tpu.matmul %44, %12, %cst_27 {dimension_numbers = #tpu.dot_dimension_numbers<[1], [0], [0], [1], [0, 0, 1, 1], [], []>} : vector<8x128xf32>, vector<128x512xf32>, vector<8x512xf32> -> vector<8x512xf32>
    %53 = arith.addf %51, %52 : vector<8x512xf32>
    %54 = vector.extract_strided_slice %53 {offsets = [0, 0], sizes = [8, 128], strides = [1, 1]} : vector<8x512xf32> to vector<8x128xf32>
    %55 = arith.negf %54 : vector<8x128xf32>
    %56 = math.exp %55 : vector<8x128xf32>
    %cst_28 = arith.constant 1.000000e+00 : f32
    %57 = vector.broadcast %cst_28 : f32 to vector<8x128xf32>
    %58 = arith.addf %57, %56 : vector<8x128xf32>
    %59 = arith.divf %57, %58 : vector<8x128xf32>
    %60 = vector.extract_strided_slice %53 {offsets = [0, 128], sizes = [8, 128], strides = [1, 1]} : vector<8x512xf32> to vector<8x128xf32>
    %61 = arith.negf %60 : vector<8x128xf32>
    %62 = math.exp %61 : vector<8x128xf32>
    %cst_29 = arith.constant 1.000000e+00 : f32
    %63 = vector.broadcast %cst_29 : f32 to vector<8x128xf32>
    %64 = arith.addf %63, %62 : vector<8x128xf32>
    %65 = arith.divf %63, %64 : vector<8x128xf32>
    %66 = vector.extract_strided_slice %53 {offsets = [0, 256], sizes = [8, 128], strides = [1, 1]} : vector<8x512xf32> to vector<8x128xf32>
    %67 = math.tanh %66 : vector<8x128xf32>
    %68 = vector.extract_strided_slice %53 {offsets = [0, 384], sizes = [8, 128], strides = [1, 1]} : vector<8x512xf32> to vector<8x128xf32>
    %69 = arith.negf %68 : vector<8x128xf32>
    %70 = math.exp %69 : vector<8x128xf32>
    %cst_30 = arith.constant 1.000000e+00 : f32
    %71 = vector.broadcast %cst_30 : f32 to vector<8x128xf32>
    %72 = arith.addf %71, %70 : vector<8x128xf32>
    %73 = arith.divf %71, %72 : vector<8x128xf32>
    %74 = arith.mulf %65, %42 : vector<8x128xf32>
    %75 = arith.mulf %59, %67 : vector<8x128xf32>
    %76 = arith.addf %74, %75 : vector<8x128xf32>
    %77 = math.tanh %76 : vector<8x128xf32>
    %78 = arith.mulf %73, %77 : vector<8x128xf32>
    %79 = arith.index_cast %c1_i32 : i32 to index
    %c0_31 = arith.constant 0 : index
    %c0_32 = arith.constant 0 : index
    %80 = vector.load %arg5[%79, %c0_31, %c0_32] : memref<8x8x128xf32, #tpu.memory_space<vmem>>, vector<1x8x128xf32>
    %81 = vector.shape_cast %80 : vector<1x8x128xf32> to vector<8x128xf32>
    %82 = vector.shape_cast %78 : vector<8x128xf32> to vector<1x8x128xf32>
    tpu.vector_store %arg5[%79, %c0_31, %c0_32], %82 {strides = array<i32>} : memref<8x8x128xf32, #tpu.memory_space<vmem>>, vector<1x8x128xf32>,
    %c2_i32 = arith.constant 2 : i32
    %83 = arith.index_cast %c2_i32 : i32 to index
    %c0_33 = arith.constant 0 : index
    %c0_34 = arith.constant 0 : index
    %84 = vector.load %arg8[%83, %c0_33, %c0_34] : memref<8x8x512xf32, #tpu.memory_space<vmem>>, vector<1x8x512xf32>
    %85 = vector.shape_cast %84 : vector<1x8x512xf32> to vector<8x512xf32>
    %cst_35 = arith.constant dense<0.000000e+00> : vector<8x512xf32>
    %86 = tpu.matmul %78, %12, %cst_35 {dimension_numbers = #tpu.dot_dimension_numbers<[1], [0], [0], [1], [0, 0, 1, 1], [], []>} : vector<8x128xf32>, vector<128x512xf32>, vector<8x512xf32> -> vector<8x512xf32>
    %87 = arith.addf %85, %86 : vector<8x512xf32>
    %88 = vector.extract_strided_slice %87 {offsets = [0, 0], sizes = [8, 128], strides = [1, 1]} : vector<8x512xf32> to vector<8x128xf32>
    %89 = arith.negf %88 : vector<8x128xf32>
    %90 = math.exp %89 : vector<8x128xf32>
    %cst_36 = arith.constant 1.000000e+00 : f32
    %91 = vector.broadcast %cst_36 : f32 to vector<8x128xf32>
    %92 = arith.addf %91, %90 : vector<8x128xf32>
    %93 = arith.divf %91, %92 : vector<8x128xf32>
    %94 = vector.extract_strided_slice %87 {offsets = [0, 128], sizes = [8, 128], strides = [1, 1]} : vector<8x512xf32> to vector<8x128xf32>
    %95 = arith.negf %94 : vector<8x128xf32>
    %96 = math.exp %95 : vector<8x128xf32>
    %cst_37 = arith.constant 1.000000e+00 : f32
    %97 = vector.broadcast %cst_37 : f32 to vector<8x128xf32>
    %98 = arith.addf %97, %96 : vector<8x128xf32>
    %99 = arith.divf %97, %98 : vector<8x128xf32>
    %100 = vector.extract_strided_slice %87 {offsets = [0, 256], sizes = [8, 128], strides = [1, 1]} : vector<8x512xf32> to vector<8x128xf32>
    %101 = math.tanh %100 : vector<8x128xf32>
    %102 = vector.extract_strided_slice %87 {offsets = [0, 384], sizes = [8, 128], strides = [1, 1]} : vector<8x512xf32> to vector<8x128xf32>
    %103 = arith.negf %102 : vector<8x128xf32>
    %104 = math.exp %103 : vector<8x128xf32>
    %cst_38 = arith.constant 1.000000e+00 : f32
    %105 = vector.broadcast %cst_38 : f32 to vector<8x128xf32>
    %106 = arith.addf %105, %104 : vector<8x128xf32>
    %107 = arith.divf %105, %106 : vector<8x128xf32>
    %108 = arith.mulf %99, %76 : vector<8x128xf32>
    %109 = arith.mulf %93, %101 : vector<8x128xf32>
    %110 = arith.addf %108, %109 : vector<8x128xf32>
    %111 = math.tanh %110 : vector<8x128xf32>
    %112 = arith.mulf %107, %111 : vector<8x128xf32>
    %113 = arith.index_cast %c2_i32 : i32 to index
    %c0_39 = arith.constant 0 : index
    %c0_40 = arith.constant 0 : index
    %114 = vector.load %arg5[%113, %c0_39, %c0_40] : memref<8x8x128xf32, #tpu.memory_space<vmem>>, vector<1x8x128xf32>
    %115 = vector.shape_cast %114 : vector<1x8x128xf32> to vector<8x128xf32>
    %116 = vector.shape_cast %112 : vector<8x128xf32> to vector<1x8x128xf32>
    tpu.vector_store %arg5[%113, %c0_39, %c0_40], %116 {strides = array<i32>} : memref<8x8x128xf32, #tpu.memory_space<vmem>>, vector<1x8x128xf32>,
    %c3_i32 = arith.constant 3 : i32
    %117 = arith.index_cast %c3_i32 : i32 to index
    %c0_41 = arith.constant 0 : index
    %c0_42 = arith.constant 0 : index
    %118 = vector.load %arg8[%117, %c0_41, %c0_42] : memref<8x8x512xf32, #tpu.memory_space<vmem>>, vector<1x8x512xf32>
    %119 = vector.shape_cast %118 : vector<1x8x512xf32> to vector<8x512xf32>
    %cst_43 = arith.constant dense<0.000000e+00> : vector<8x512xf32>
    %120 = tpu.matmul %112, %12, %cst_43 {dimension_numbers = #tpu.dot_dimension_numbers<[1], [0], [0], [1], [0, 0, 1, 1], [], []>} : vector<8x128xf32>, vector<128x512xf32>, vector<8x512xf32> -> vector<8x512xf32>
    %121 = arith.addf %119, %120 : vector<8x512xf32>
    %122 = vector.extract_strided_slice %121 {offsets = [0, 0], sizes = [8, 128], strides = [1, 1]} : vector<8x512xf32> to vector<8x128xf32>
    %123 = arith.negf %122 : vector<8x128xf32>
    %124 = math.exp %123 : vector<8x128xf32>
    %cst_44 = arith.constant 1.000000e+00 : f32
    %125 = vector.broadcast %cst_44 : f32 to vector<8x128xf32>
    %126 = arith.addf %125, %124 : vector<8x128xf32>
    %127 = arith.divf %125, %126 : vector<8x128xf32>
    %128 = vector.extract_strided_slice %121 {offsets = [0, 128], sizes = [8, 128], strides = [1, 1]} : vector<8x512xf32> to vector<8x128xf32>
    %129 = arith.negf %128 : vector<8x128xf32>
    %130 = math.exp %129 : vector<8x128xf32>
    %cst_45 = arith.constant 1.000000e+00 : f32
    %131 = vector.broadcast %cst_45 : f32 to vector<8x128xf32>
    %132 = arith.addf %131, %130 : vector<8x128xf32>
    %133 = arith.divf %131, %132 : vector<8x128xf32>
    %134 = vector.extract_strided_slice %121 {offsets = [0, 256], sizes = [8, 128], strides = [1, 1]} : vector<8x512xf32> to vector<8x128xf32>
    %135 = math.tanh %134 : vector<8x128xf32>
    %136 = vector.extract_strided_slice %121 {offsets = [0, 384], sizes = [8, 128], strides = [1, 1]} : vector<8x512xf32> to vector<8x128xf32>
    %137 = arith.negf %136 : vector<8x128xf32>
    %138 = math.exp %137 : vector<8x128xf32>
    %cst_46 = arith.constant 1.000000e+00 : f32
    %139 = vector.broadcast %cst_46 : f32 to vector<8x128xf32>
    %140 = arith.addf %139, %138 : vector<8x128xf32>
    %141 = arith.divf %139, %140 : vector<8x128xf32>
    %142 = arith.mulf %133, %110 : vector<8x128xf32>
    %143 = arith.mulf %127, %135 : vector<8x128xf32>
    %144 = arith.addf %142, %143 : vector<8x128xf32>
    %145 = math.tanh %144 : vector<8x128xf32>
    %146 = arith.mulf %141, %145 : vector<8x128xf32>
    %147 = arith.index_cast %c3_i32 : i32 to index
    %c0_47 = arith.constant 0 : index
    %c0_48 = arith.constant 0 : index
    %148 = vector.load %arg5[%147, %c0_47, %c0_48] : memref<8x8x128xf32, #tpu.memory_space<vmem>>, vector<1x8x128xf32>
    %149 = vector.shape_cast %148 : vector<1x8x128xf32> to vector<8x128xf32>
    %150 = vector.shape_cast %146 : vector<8x128xf32> to vector<1x8x128xf32>
    tpu.vector_store %arg5[%147, %c0_47, %c0_48], %150 {strides = array<i32>} : memref<8x8x128xf32, #tpu.memory_space<vmem>>, vector<1x8x128xf32>,
    %c4_i32 = arith.constant 4 : i32
    %151 = arith.index_cast %c4_i32 : i32 to index
    %c0_49 = arith.constant 0 : index
    %c0_50 = arith.constant 0 : index
    %152 = vector.load %arg8[%151, %c0_49, %c0_50] : memref<8x8x512xf32, #tpu.memory_space<vmem>>, vector<1x8x512xf32>
    %153 = vector.shape_cast %152 : vector<1x8x512xf32> to vector<8x512xf32>
    %cst_51 = arith.constant dense<0.000000e+00> : vector<8x512xf32>
    %154 = tpu.matmul %146, %12, %cst_51 {dimension_numbers = #tpu.dot_dimension_numbers<[1], [0], [0], [1], [0, 0, 1, 1], [], []>} : vector<8x128xf32>, vector<128x512xf32>, vector<8x512xf32> -> vector<8x512xf32>
    %155 = arith.addf %153, %154 : vector<8x512xf32>
    %156 = vector.extract_strided_slice %155 {offsets = [0, 0], sizes = [8, 128], strides = [1, 1]} : vector<8x512xf32> to vector<8x128xf32>
    %157 = arith.negf %156 : vector<8x128xf32>
    %158 = math.exp %157 : vector<8x128xf32>
    %cst_52 = arith.constant 1.000000e+00 : f32
    %159 = vector.broadcast %cst_52 : f32 to vector<8x128xf32>
    %160 = arith.addf %159, %158 : vector<8x128xf32>
    %161 = arith.divf %159, %160 : vector<8x128xf32>
    %162 = vector.extract_strided_slice %155 {offsets = [0, 128], sizes = [8, 128], strides = [1, 1]} : vector<8x512xf32> to vector<8x128xf32>
    %163 = arith.negf %162 : vector<8x128xf32>
    %164 = math.exp %163 : vector<8x128xf32>
    %cst_53 = arith.constant 1.000000e+00 : f32
    %165 = vector.broadcast %cst_53 : f32 to vector<8x128xf32>
    %166 = arith.addf %165, %164 : vector<8x128xf32>
    %167 = arith.divf %165, %166 : vector<8x128xf32>
    %168 = vector.extract_strided_slice %155 {offsets = [0, 256], sizes = [8, 128], strides = [1, 1]} : vector<8x512xf32> to vector<8x128xf32>
    %169 = math.tanh %168 : vector<8x128xf32>
    %170 = vector.extract_strided_slice %155 {offsets = [0, 384], sizes = [8, 128], strides = [1, 1]} : vector<8x512xf32> to vector<8x128xf32>
    %171 = arith.negf %170 : vector<8x128xf32>
    %172 = math.exp %171 : vector<8x128xf32>
    %cst_54 = arith.constant 1.000000e+00 : f32
    %173 = vector.broadcast %cst_54 : f32 to vector<8x128xf32>
    %174 = arith.addf %173, %172 : vector<8x128xf32>
    %175 = arith.divf %173, %174 : vector<8x128xf32>
    %176 = arith.mulf %167, %144 : vector<8x128xf32>
    %177 = arith.mulf %161, %169 : vector<8x128xf32>
    %178 = arith.addf %176, %177 : vector<8x128xf32>
    %179 = math.tanh %178 : vector<8x128xf32>
    %180 = arith.mulf %175, %179 : vector<8x128xf32>
    %181 = arith.index_cast %c4_i32 : i32 to index
    %c0_55 = arith.constant 0 : index
    %c0_56 = arith.constant 0 : index
    %182 = vector.load %arg5[%181, %c0_55, %c0_56] : memref<8x8x128xf32, #tpu.memory_space<vmem>>, vector<1x8x128xf32>
    %183 = vector.shape_cast %182 : vector<1x8x128xf32> to vector<8x128xf32>
    %184 = vector.shape_cast %180 : vector<8x128xf32> to vector<1x8x128xf32>
    tpu.vector_store %arg5[%181, %c0_55, %c0_56], %184 {strides = array<i32>} : memref<8x8x128xf32, #tpu.memory_space<vmem>>, vector<1x8x128xf32>,
    %c5_i32 = arith.constant 5 : i32
    %185 = arith.index_cast %c5_i32 : i32 to index
    %c0_57 = arith.constant 0 : index
    %c0_58 = arith.constant 0 : index
    %186 = vector.load %arg8[%185, %c0_57, %c0_58] : memref<8x8x512xf32, #tpu.memory_space<vmem>>, vector<1x8x512xf32>
    %187 = vector.shape_cast %186 : vector<1x8x512xf32> to vector<8x512xf32>
    %cst_59 = arith.constant dense<0.000000e+00> : vector<8x512xf32>
    %188 = tpu.matmul %180, %12, %cst_59 {dimension_numbers = #tpu.dot_dimension_numbers<[1], [0], [0], [1], [0, 0, 1, 1], [], []>} : vector<8x128xf32>, vector<128x512xf32>, vector<8x512xf32> -> vector<8x512xf32>
    %189 = arith.addf %187, %188 : vector<8x512xf32>
    %190 = vector.extract_strided_slice %189 {offsets = [0, 0], sizes = [8, 128], strides = [1, 1]} : vector<8x512xf32> to vector<8x128xf32>
    %191 = arith.negf %190 : vector<8x128xf32>
    %192 = math.exp %191 : vector<8x128xf32>
    %cst_60 = arith.constant 1.000000e+00 : f32
    %193 = vector.broadcast %cst_60 : f32 to vector<8x128xf32>
    %194 = arith.addf %193, %192 : vector<8x128xf32>
    %195 = arith.divf %193, %194 : vector<8x128xf32>
    %196 = vector.extract_strided_slice %189 {offsets = [0, 128], sizes = [8, 128], strides = [1, 1]} : vector<8x512xf32> to vector<8x128xf32>
    %197 = arith.negf %196 : vector<8x128xf32>
    %198 = math.exp %197 : vector<8x128xf32>
    %cst_61 = arith.constant 1.000000e+00 : f32
    %199 = vector.broadcast %cst_61 : f32 to vector<8x128xf32>
    %200 = arith.addf %199, %198 : vector<8x128xf32>
    %201 = arith.divf %199, %200 : vector<8x128xf32>
    %202 = vector.extract_strided_slice %189 {offsets = [0, 256], sizes = [8, 128], strides = [1, 1]} : vector<8x512xf32> to vector<8x128xf32>
    %203 = math.tanh %202 : vector<8x128xf32>
    %204 = vector.extract_strided_slice %189 {offsets = [0, 384], sizes = [8, 128], strides = [1, 1]} : vector<8x512xf32> to vector<8x128xf32>
    %205 = arith.negf %204 : vector<8x128xf32>
    %206 = math.exp %205 : vector<8x128xf32>
    %cst_62 = arith.constant 1.000000e+00 : f32
    %207 = vector.broadcast %cst_62 : f32 to vector<8x128xf32>
    %208 = arith.addf %207, %206 : vector<8x128xf32>
    %209 = arith.divf %207, %208 : vector<8x128xf32>
    %210 = arith.mulf %201, %178 : vector<8x128xf32>
    %211 = arith.mulf %195, %203 : vector<8x128xf32>
    %212 = arith.addf %210, %211 : vector<8x128xf32>
    %213 = math.tanh %212 : vector<8x128xf32>
    %214 = arith.mulf %209, %213 : vector<8x128xf32>
    %215 = arith.index_cast %c5_i32 : i32 to index
    %c0_63 = arith.constant 0 : index
    %c0_64 = arith.constant 0 : index
    %216 = vector.load %arg5[%215, %c0_63, %c0_64] : memref<8x8x128xf32, #tpu.memory_space<vmem>>, vector<1x8x128xf32>
    %217 = vector.shape_cast %216 : vector<1x8x128xf32> to vector<8x128xf32>
    %218 = vector.shape_cast %214 : vector<8x128xf32> to vector<1x8x128xf32>
    tpu.vector_store %arg5[%215, %c0_63, %c0_64], %218 {strides = array<i32>} : memref<8x8x128xf32, #tpu.memory_space<vmem>>, vector<1x8x128xf32>,
    %c6_i32 = arith.constant 6 : i32
    %219 = arith.index_cast %c6_i32 : i32 to index
    %c0_65 = arith.constant 0 : index
    %c0_66 = arith.constant 0 : index
    %220 = vector.load %arg8[%219, %c0_65, %c0_66] : memref<8x8x512xf32, #tpu.memory_space<vmem>>, vector<1x8x512xf32>
    %221 = vector.shape_cast %220 : vector<1x8x512xf32> to vector<8x512xf32>
    %cst_67 = arith.constant dense<0.000000e+00> : vector<8x512xf32>
    %222 = tpu.matmul %214, %12, %cst_67 {dimension_numbers = #tpu.dot_dimension_numbers<[1], [0], [0], [1], [0, 0, 1, 1], [], []>} : vector<8x128xf32>, vector<128x512xf32>, vector<8x512xf32> -> vector<8x512xf32>
    %223 = arith.addf %221, %222 : vector<8x512xf32>
    %224 = vector.extract_strided_slice %223 {offsets = [0, 0], sizes = [8, 128], strides = [1, 1]} : vector<8x512xf32> to vector<8x128xf32>
    %225 = arith.negf %224 : vector<8x128xf32>
    %226 = math.exp %225 : vector<8x128xf32>
    %cst_68 = arith.constant 1.000000e+00 : f32
    %227 = vector.broadcast %cst_68 : f32 to vector<8x128xf32>
    %228 = arith.addf %227, %226 : vector<8x128xf32>
    %229 = arith.divf %227, %228 : vector<8x128xf32>
    %230 = vector.extract_strided_slice %223 {offsets = [0, 128], sizes = [8, 128], strides = [1, 1]} : vector<8x512xf32> to vector<8x128xf32>
    %231 = arith.negf %230 : vector<8x128xf32>
    %232 = math.exp %231 : vector<8x128xf32>
    %cst_69 = arith.constant 1.000000e+00 : f32
    %233 = vector.broadcast %cst_69 : f32 to vector<8x128xf32>
    %234 = arith.addf %233, %232 : vector<8x128xf32>
    %235 = arith.divf %233, %234 : vector<8x128xf32>
    %236 = vector.extract_strided_slice %223 {offsets = [0, 256], sizes = [8, 128], strides = [1, 1]} : vector<8x512xf32> to vector<8x128xf32>
    %237 = math.tanh %236 : vector<8x128xf32>
    %238 = vector.extract_strided_slice %223 {offsets = [0, 384], sizes = [8, 128], strides = [1, 1]} : vector<8x512xf32> to vector<8x128xf32>
    %239 = arith.negf %238 : vector<8x128xf32>
    %240 = math.exp %239 : vector<8x128xf32>
    %cst_70 = arith.constant 1.000000e+00 : f32
    %241 = vector.broadcast %cst_70 : f32 to vector<8x128xf32>
    %242 = arith.addf %241, %240 : vector<8x128xf32>
    %243 = arith.divf %241, %242 : vector<8x128xf32>
    %244 = arith.mulf %235, %212 : vector<8x128xf32>
    %245 = arith.mulf %229, %237 : vector<8x128xf32>
    %246 = arith.addf %244, %245 : vector<8x128xf32>
    %247 = math.tanh %246 : vector<8x128xf32>
    %248 = arith.mulf %243, %247 : vector<8x128xf32>
    %249 = arith.index_cast %c6_i32 : i32 to index
    %c0_71 = arith.constant 0 : index
    %c0_72 = arith.constant 0 : index
    %250 = vector.load %arg5[%249, %c0_71, %c0_72] : memref<8x8x128xf32, #tpu.memory_space<vmem>>, vector<1x8x128xf32>
    %251 = vector.shape_cast %250 : vector<1x8x128xf32> to vector<8x128xf32>
    %252 = vector.shape_cast %248 : vector<8x128xf32> to vector<1x8x128xf32>
    tpu.vector_store %arg5[%249, %c0_71, %c0_72], %252 {strides = array<i32>} : memref<8x8x128xf32, #tpu.memory_space<vmem>>, vector<1x8x128xf32>,
    %c7_i32 = arith.constant 7 : i32
    %253 = arith.index_cast %c7_i32 : i32 to index
    %c0_73 = arith.constant 0 : index
    %c0_74 = arith.constant 0 : index
    %254 = vector.load %arg8[%253, %c0_73, %c0_74] : memref<8x8x512xf32, #tpu.memory_space<vmem>>, vector<1x8x512xf32>
    %255 = vector.shape_cast %254 : vector<1x8x512xf32> to vector<8x512xf32>
    %cst_75 = arith.constant dense<0.000000e+00> : vector<8x512xf32>
    %256 = tpu.matmul %248, %12, %cst_75 {dimension_numbers = #tpu.dot_dimension_numbers<[1], [0], [0], [1], [0, 0, 1, 1], [], []>} : vector<8x128xf32>, vector<128x512xf32>, vector<8x512xf32> -> vector<8x512xf32>
    %257 = arith.addf %255, %256 : vector<8x512xf32>
    %258 = vector.extract_strided_slice %257 {offsets = [0, 0], sizes = [8, 128], strides = [1, 1]} : vector<8x512xf32> to vector<8x128xf32>
    %259 = arith.negf %258 : vector<8x128xf32>
    %260 = math.exp %259 : vector<8x128xf32>
    %cst_76 = arith.constant 1.000000e+00 : f32
    %261 = vector.broadcast %cst_76 : f32 to vector<8x128xf32>
    %262 = arith.addf %261, %260 : vector<8x128xf32>
    %263 = arith.divf %261, %262 : vector<8x128xf32>
    %264 = vector.extract_strided_slice %257 {offsets = [0, 128], sizes = [8, 128], strides = [1, 1]} : vector<8x512xf32> to vector<8x128xf32>
    %265 = arith.negf %264 : vector<8x128xf32>
    %266 = math.exp %265 : vector<8x128xf32>
    %cst_77 = arith.constant 1.000000e+00 : f32
    %267 = vector.broadcast %cst_77 : f32 to vector<8x128xf32>
    %268 = arith.addf %267, %266 : vector<8x128xf32>
    %269 = arith.divf %267, %268 : vector<8x128xf32>
    %270 = vector.extract_strided_slice %257 {offsets = [0, 256], sizes = [8, 128], strides = [1, 1]} : vector<8x512xf32> to vector<8x128xf32>
    %271 = math.tanh %270 : vector<8x128xf32>
    %272 = vector.extract_strided_slice %257 {offsets = [0, 384], sizes = [8, 128], strides = [1, 1]} : vector<8x512xf32> to vector<8x128xf32>
    %273 = arith.negf %272 : vector<8x128xf32>
    %274 = math.exp %273 : vector<8x128xf32>
    %cst_78 = arith.constant 1.000000e+00 : f32
    %275 = vector.broadcast %cst_78 : f32 to vector<8x128xf32>
    %276 = arith.addf %275, %274 : vector<8x128xf32>
    %277 = arith.divf %275, %276 : vector<8x128xf32>
    %278 = arith.mulf %269, %246 : vector<8x128xf32>
    %279 = arith.mulf %263, %271 : vector<8x128xf32>
    %280 = arith.addf %278, %279 : vector<8x128xf32>
    %281 = math.tanh %280 : vector<8x128xf32>
    %282 = arith.mulf %277, %281 : vector<8x128xf32>
    %283 = arith.index_cast %c7_i32 : i32 to index
    %c0_79 = arith.constant 0 : index
    %c0_80 = arith.constant 0 : index
    %284 = vector.load %arg5[%283, %c0_79, %c0_80] : memref<8x8x128xf32, #tpu.memory_space<vmem>>, vector<1x8x128xf32>
    %285 = vector.shape_cast %284 : vector<1x8x128xf32> to vector<8x128xf32>
    %286 = vector.shape_cast %282 : vector<8x128xf32> to vector<1x8x128xf32>
    tpu.vector_store %arg5[%283, %c0_79, %c0_80], %286 {strides = array<i32>} : memref<8x8x128xf32, #tpu.memory_space<vmem>>, vector<1x8x128xf32>,
    %c8_i32 = arith.constant 8 : i32
    %c0_81 = arith.constant 0 : index
    %c0_82 = arith.constant 0 : index
    %287 = vector.load %arg6[%c0_81, %c0_82] : memref<8x128xf32, #tpu.memory_space<vmem>>, vector<8x128xf32>
    tpu.vector_store %arg6[%c0_81, %c0_82], %282 {strides = array<i32>} : memref<8x128xf32, #tpu.memory_space<vmem>>, vector<8x128xf32>,
    %c0_83 = arith.constant 0 : index
    %c0_84 = arith.constant 0 : index
    %288 = vector.load %arg7[%c0_83, %c0_84] : memref<8x128xf32, #tpu.memory_space<vmem>>, vector<8x128xf32>
    tpu.vector_store %arg7[%c0_83, %c0_84], %280 {strides = array<i32>} : memref<8x128xf32, #tpu.memory_space<vmem>>, vector<8x128xf32>,
    return
  }
  func.func @transform_0(%arg0: i32) -> (i32, i32, i32) {
    %c0_i32 = arith.constant 0 : i32
    %c0_i32_0 = arith.constant 0 : i32
    %c0_i32_1 = arith.constant 0 : i32
    return %arg0, %c0_i32, %c0_i32_0 : i32, i32, i32
  }
  func.func @transform_1(%arg0: i32) -> (i32, i32) {
    %c0_i32 = arith.constant 0 : i32
    %c0_i32_0 = arith.constant 0 : i32
    %c0_i32_1 = arith.constant 0 : i32
    return %c0_i32, %c0_i32_0 : i32, i32
  }
  func.func @transform_2(%arg0: i32) -> (i32, i32) {
    %c0_i32 = arith.constant 0 : i32
    %c0_i32_0 = arith.constant 0 : i32
    %c0_i32_1 = arith.constant 0 : i32
    return %c0_i32, %c0_i32_0 : i32, i32
  }
  func.func @transform_3(%arg0: i32) -> (i32, i32) {
    %c0_i32 = arith.constant 0 : i32
    %c0_i32_0 = arith.constant 0 : i32
    %c0_i32_1 = arith.constant 0 : i32
    return %c0_i32, %c0_i32_0 : i32, i32
  }
  func.func @transform_4(%arg0: i32) -> (i32, i32, i32) {
    %c0_i32 = arith.constant 0 : i32
    %c0_i32_0 = arith.constant 0 : i32
    %c0_i32_1 = arith.constant 0 : i32
    return %arg0, %c0_i32, %c0_i32_0 : i32, i32, i32
  }
}

module attributes {stable_mosaic.version = 11 : i64} {
  func.func @lstm_last_kernel(%arg0: i32, %arg1: memref<8x8x128xf32, #tpu.memory_space<vmem>>, %arg2: memref<128x512xf32, #tpu.memory_space<vmem>>, %arg3: memref<128x512xf32, #tpu.memory_space<vmem>>, %arg4: memref<1x512xf32, #tpu.memory_space<vmem>>, %arg5: memref<128x1xf32, #tpu.memory_space<vmem>>, %arg6: memref<1x1xf32, #tpu.memory_space<vmem>>, %arg7: memref<8x1xf32, #tpu.memory_space<vmem>>, %arg8: memref<8x128xf32, #tpu.memory_space<vmem>>, %arg9: memref<8x128xf32, #tpu.memory_space<vmem>>, %arg10: memref<8x8x512xf32, #tpu.memory_space<vmem>>) attributes {dimension_semantics = [#tpu.dimension_semantics<arbitrary>], iteration_bounds = array<i64: 1>, scalar_prefetch = 0 : i64, scratch_operands = 3 : i64, tpu.core_type = #tpu.core_type<tc>, window_params = [{transform_indices = @transform_0, window_bounds = array<i64: 8, 8, 128>}, {pipeline_mode = #tpu.pipeline_mode<synchronous>, transform_indices = @transform_1, window_bounds = array<i64: 128, 512>}, {pipeline_mode = #tpu.pipeline_mode<synchronous>, transform_indices = @transform_2, window_bounds = array<i64: 128, 512>}, {pipeline_mode = #tpu.pipeline_mode<synchronous>, transform_indices = @transform_3, window_bounds = array<i64: 1, 512>}, {pipeline_mode = #tpu.pipeline_mode<synchronous>, transform_indices = @transform_4, window_bounds = array<i64: 128, 1>}, {pipeline_mode = #tpu.pipeline_mode<synchronous>, transform_indices = @transform_5, window_bounds = array<i64: 1, 1>}, {pipeline_mode = #tpu.pipeline_mode<synchronous>, transform_indices = @transform_6, window_bounds = array<i64: 8, 1>}]} {
    %c0_i32 = arith.constant 0 : i32
    %0 = arith.cmpi eq, %arg0, %c0_i32 : i32
    %1 = arith.extui %0 : i1 to i32
    %c0_i32_0 = arith.constant 0 : i32
    %2 = arith.cmpi ne, %1, %c0_i32_0 : i32
    scf.if %2 {
      %cst_71 = arith.constant 0.000000e+00 : f32
      %260 = vector.broadcast %cst_71 : f32 to vector<8x128xf32>
      %c0_72 = arith.constant 0 : index
      %c0_73 = arith.constant 0 : index
      %261 = vector.load %arg8[%c0_72, %c0_73] : memref<8x128xf32, #tpu.memory_space<vmem>>, vector<8x128xf32>
      tpu.vector_store %arg8[%c0_72, %c0_73], %260 {strides = array<i32>} : memref<8x128xf32, #tpu.memory_space<vmem>>, vector<8x128xf32>,
      %cst_74 = arith.constant 0.000000e+00 : f32
      %262 = vector.broadcast %cst_74 : f32 to vector<8x128xf32>
      %c0_75 = arith.constant 0 : index
      %c0_76 = arith.constant 0 : index
      %263 = vector.load %arg9[%c0_75, %c0_76] : memref<8x128xf32, #tpu.memory_space<vmem>>, vector<8x128xf32>
      tpu.vector_store %arg9[%c0_75, %c0_76], %262 {strides = array<i32>} : memref<8x128xf32, #tpu.memory_space<vmem>>, vector<8x128xf32>,
    } else {
    }
    %c0 = arith.constant 0 : index
    %c0_1 = arith.constant 0 : index
    %c0_2 = arith.constant 0 : index
    %3 = vector.load %arg1[%c0, %c0_1, %c0_2] : memref<8x8x128xf32, #tpu.memory_space<vmem>>, vector<8x8x128xf32>
    %4 = vector.shape_cast %3 : vector<8x8x128xf32> to vector<64x128xf32>
    %c0_3 = arith.constant 0 : index
    %c0_4 = arith.constant 0 : index
    %5 = vector.load %arg2[%c0_3, %c0_4] : memref<128x512xf32, #tpu.memory_space<vmem>>, vector<128x512xf32>
    %cst = arith.constant dense<0.000000e+00> : vector<64x512xf32>
    %6 = tpu.matmul %4, %5, %cst {dimension_numbers = #tpu.dot_dimension_numbers<[1], [0], [0], [1], [0, 0, 1, 1], [], []>} : vector<64x128xf32>, vector<128x512xf32>, vector<64x512xf32> -> vector<64x512xf32>
    %c0_5 = arith.constant 0 : index
    %c0_6 = arith.constant 0 : index
    %7 = vector.load %arg4[%c0_5, %c0_6] : memref<1x512xf32, #tpu.memory_space<vmem>>, vector<1x512xf32>
    %8 = vector.broadcast %7 : vector<1x512xf32> to vector<64x512xf32>
    %9 = arith.addf %6, %8 : vector<64x512xf32>
    %10 = vector.shape_cast %9 : vector<64x512xf32> to vector<8x8x512xf32>
    %c0_7 = arith.constant 0 : index
    %c0_8 = arith.constant 0 : index
    %c0_9 = arith.constant 0 : index
    %11 = vector.load %arg10[%c0_7, %c0_8, %c0_9] : memref<8x8x512xf32, #tpu.memory_space<vmem>>, vector<8x8x512xf32>
    tpu.vector_store %arg10[%c0_7, %c0_8, %c0_9], %10 {strides = array<i32>} : memref<8x8x512xf32, #tpu.memory_space<vmem>>, vector<8x8x512xf32>,
    %c0_10 = arith.constant 0 : index
    %c0_11 = arith.constant 0 : index
    %12 = vector.load %arg3[%c0_10, %c0_11] : memref<128x512xf32, #tpu.memory_space<vmem>>, vector<128x512xf32>
    %c0_12 = arith.constant 0 : index
    %c0_13 = arith.constant 0 : index
    %13 = vector.load %arg8[%c0_12, %c0_13] : memref<8x128xf32, #tpu.memory_space<vmem>>, vector<8x128xf32>
    %c0_14 = arith.constant 0 : index
    %c0_15 = arith.constant 0 : index
    %14 = vector.load %arg9[%c0_14, %c0_15] : memref<8x128xf32, #tpu.memory_space<vmem>>, vector<8x128xf32>
    %c0_i32_16 = arith.constant 0 : i32
    %15 = arith.index_cast %c0_i32_16 : i32 to index
    %c0_17 = arith.constant 0 : index
    %c0_18 = arith.constant 0 : index
    %16 = vector.load %arg10[%15, %c0_17, %c0_18] : memref<8x8x512xf32, #tpu.memory_space<vmem>>, vector<1x8x512xf32>
    %17 = vector.shape_cast %16 : vector<1x8x512xf32> to vector<8x512xf32>
    %cst_19 = arith.constant dense<0.000000e+00> : vector<8x512xf32>
    %18 = tpu.matmul %13, %12, %cst_19 {dimension_numbers = #tpu.dot_dimension_numbers<[1], [0], [0], [1], [0, 0, 1, 1], [], []>} : vector<8x128xf32>, vector<128x512xf32>, vector<8x512xf32> -> vector<8x512xf32>
    %19 = arith.addf %17, %18 : vector<8x512xf32>
    %20 = vector.extract_strided_slice %19 {offsets = [0, 0], sizes = [8, 128], strides = [1, 1]} : vector<8x512xf32> to vector<8x128xf32>
    %21 = arith.negf %20 : vector<8x128xf32>
    %22 = math.exp %21 : vector<8x128xf32>
    %cst_20 = arith.constant 1.000000e+00 : f32
    %23 = vector.broadcast %cst_20 : f32 to vector<8x128xf32>
    %24 = arith.addf %23, %22 : vector<8x128xf32>
    %25 = arith.divf %23, %24 : vector<8x128xf32>
    %26 = vector.extract_strided_slice %19 {offsets = [0, 128], sizes = [8, 128], strides = [1, 1]} : vector<8x512xf32> to vector<8x128xf32>
    %27 = arith.negf %26 : vector<8x128xf32>
    %28 = math.exp %27 : vector<8x128xf32>
    %cst_21 = arith.constant 1.000000e+00 : f32
    %29 = vector.broadcast %cst_21 : f32 to vector<8x128xf32>
    %30 = arith.addf %29, %28 : vector<8x128xf32>
    %31 = arith.divf %29, %30 : vector<8x128xf32>
    %32 = vector.extract_strided_slice %19 {offsets = [0, 256], sizes = [8, 128], strides = [1, 1]} : vector<8x512xf32> to vector<8x128xf32>
    %33 = math.tanh %32 : vector<8x128xf32>
    %34 = vector.extract_strided_slice %19 {offsets = [0, 384], sizes = [8, 128], strides = [1, 1]} : vector<8x512xf32> to vector<8x128xf32>
    %35 = arith.negf %34 : vector<8x128xf32>
    %36 = math.exp %35 : vector<8x128xf32>
    %cst_22 = arith.constant 1.000000e+00 : f32
    %37 = vector.broadcast %cst_22 : f32 to vector<8x128xf32>
    %38 = arith.addf %37, %36 : vector<8x128xf32>
    %39 = arith.divf %37, %38 : vector<8x128xf32>
    %40 = arith.mulf %31, %14 : vector<8x128xf32>
    %41 = arith.mulf %25, %33 : vector<8x128xf32>
    %42 = arith.addf %40, %41 : vector<8x128xf32>
    %43 = math.tanh %42 : vector<8x128xf32>
    %44 = arith.mulf %39, %43 : vector<8x128xf32>
    %c1_i32 = arith.constant 1 : i32
    %45 = arith.index_cast %c1_i32 : i32 to index
    %c0_23 = arith.constant 0 : index
    %c0_24 = arith.constant 0 : index
    %46 = vector.load %arg10[%45, %c0_23, %c0_24] : memref<8x8x512xf32, #tpu.memory_space<vmem>>, vector<1x8x512xf32>
    %47 = vector.shape_cast %46 : vector<1x8x512xf32> to vector<8x512xf32>
    %cst_25 = arith.constant dense<0.000000e+00> : vector<8x512xf32>
    %48 = tpu.matmul %44, %12, %cst_25 {dimension_numbers = #tpu.dot_dimension_numbers<[1], [0], [0], [1], [0, 0, 1, 1], [], []>} : vector<8x128xf32>, vector<128x512xf32>, vector<8x512xf32> -> vector<8x512xf32>
    %49 = arith.addf %47, %48 : vector<8x512xf32>
    %50 = vector.extract_strided_slice %49 {offsets = [0, 0], sizes = [8, 128], strides = [1, 1]} : vector<8x512xf32> to vector<8x128xf32>
    %51 = arith.negf %50 : vector<8x128xf32>
    %52 = math.exp %51 : vector<8x128xf32>
    %cst_26 = arith.constant 1.000000e+00 : f32
    %53 = vector.broadcast %cst_26 : f32 to vector<8x128xf32>
    %54 = arith.addf %53, %52 : vector<8x128xf32>
    %55 = arith.divf %53, %54 : vector<8x128xf32>
    %56 = vector.extract_strided_slice %49 {offsets = [0, 128], sizes = [8, 128], strides = [1, 1]} : vector<8x512xf32> to vector<8x128xf32>
    %57 = arith.negf %56 : vector<8x128xf32>
    %58 = math.exp %57 : vector<8x128xf32>
    %cst_27 = arith.constant 1.000000e+00 : f32
    %59 = vector.broadcast %cst_27 : f32 to vector<8x128xf32>
    %60 = arith.addf %59, %58 : vector<8x128xf32>
    %61 = arith.divf %59, %60 : vector<8x128xf32>
    %62 = vector.extract_strided_slice %49 {offsets = [0, 256], sizes = [8, 128], strides = [1, 1]} : vector<8x512xf32> to vector<8x128xf32>
    %63 = math.tanh %62 : vector<8x128xf32>
    %64 = vector.extract_strided_slice %49 {offsets = [0, 384], sizes = [8, 128], strides = [1, 1]} : vector<8x512xf32> to vector<8x128xf32>
    %65 = arith.negf %64 : vector<8x128xf32>
    %66 = math.exp %65 : vector<8x128xf32>
    %cst_28 = arith.constant 1.000000e+00 : f32
    %67 = vector.broadcast %cst_28 : f32 to vector<8x128xf32>
    %68 = arith.addf %67, %66 : vector<8x128xf32>
    %69 = arith.divf %67, %68 : vector<8x128xf32>
    %70 = arith.mulf %61, %42 : vector<8x128xf32>
    %71 = arith.mulf %55, %63 : vector<8x128xf32>
    %72 = arith.addf %70, %71 : vector<8x128xf32>
    %73 = math.tanh %72 : vector<8x128xf32>
    %74 = arith.mulf %69, %73 : vector<8x128xf32>
    %c2_i32 = arith.constant 2 : i32
    %75 = arith.index_cast %c2_i32 : i32 to index
    %c0_29 = arith.constant 0 : index
    %c0_30 = arith.constant 0 : index
    %76 = vector.load %arg10[%75, %c0_29, %c0_30] : memref<8x8x512xf32, #tpu.memory_space<vmem>>, vector<1x8x512xf32>
    %77 = vector.shape_cast %76 : vector<1x8x512xf32> to vector<8x512xf32>
    %cst_31 = arith.constant dense<0.000000e+00> : vector<8x512xf32>
    %78 = tpu.matmul %74, %12, %cst_31 {dimension_numbers = #tpu.dot_dimension_numbers<[1], [0], [0], [1], [0, 0, 1, 1], [], []>} : vector<8x128xf32>, vector<128x512xf32>, vector<8x512xf32> -> vector<8x512xf32>
    %79 = arith.addf %77, %78 : vector<8x512xf32>
    %80 = vector.extract_strided_slice %79 {offsets = [0, 0], sizes = [8, 128], strides = [1, 1]} : vector<8x512xf32> to vector<8x128xf32>
    %81 = arith.negf %80 : vector<8x128xf32>
    %82 = math.exp %81 : vector<8x128xf32>
    %cst_32 = arith.constant 1.000000e+00 : f32
    %83 = vector.broadcast %cst_32 : f32 to vector<8x128xf32>
    %84 = arith.addf %83, %82 : vector<8x128xf32>
    %85 = arith.divf %83, %84 : vector<8x128xf32>
    %86 = vector.extract_strided_slice %79 {offsets = [0, 128], sizes = [8, 128], strides = [1, 1]} : vector<8x512xf32> to vector<8x128xf32>
    %87 = arith.negf %86 : vector<8x128xf32>
    %88 = math.exp %87 : vector<8x128xf32>
    %cst_33 = arith.constant 1.000000e+00 : f32
    %89 = vector.broadcast %cst_33 : f32 to vector<8x128xf32>
    %90 = arith.addf %89, %88 : vector<8x128xf32>
    %91 = arith.divf %89, %90 : vector<8x128xf32>
    %92 = vector.extract_strided_slice %79 {offsets = [0, 256], sizes = [8, 128], strides = [1, 1]} : vector<8x512xf32> to vector<8x128xf32>
    %93 = math.tanh %92 : vector<8x128xf32>
    %94 = vector.extract_strided_slice %79 {offsets = [0, 384], sizes = [8, 128], strides = [1, 1]} : vector<8x512xf32> to vector<8x128xf32>
    %95 = arith.negf %94 : vector<8x128xf32>
    %96 = math.exp %95 : vector<8x128xf32>
    %cst_34 = arith.constant 1.000000e+00 : f32
    %97 = vector.broadcast %cst_34 : f32 to vector<8x128xf32>
    %98 = arith.addf %97, %96 : vector<8x128xf32>
    %99 = arith.divf %97, %98 : vector<8x128xf32>
    %100 = arith.mulf %91, %72 : vector<8x128xf32>
    %101 = arith.mulf %85, %93 : vector<8x128xf32>
    %102 = arith.addf %100, %101 : vector<8x128xf32>
    %103 = math.tanh %102 : vector<8x128xf32>
    %104 = arith.mulf %99, %103 : vector<8x128xf32>
    %c3_i32 = arith.constant 3 : i32
    %105 = arith.index_cast %c3_i32 : i32 to index
    %c0_35 = arith.constant 0 : index
    %c0_36 = arith.constant 0 : index
    %106 = vector.load %arg10[%105, %c0_35, %c0_36] : memref<8x8x512xf32, #tpu.memory_space<vmem>>, vector<1x8x512xf32>
    %107 = vector.shape_cast %106 : vector<1x8x512xf32> to vector<8x512xf32>
    %cst_37 = arith.constant dense<0.000000e+00> : vector<8x512xf32>
    %108 = tpu.matmul %104, %12, %cst_37 {dimension_numbers = #tpu.dot_dimension_numbers<[1], [0], [0], [1], [0, 0, 1, 1], [], []>} : vector<8x128xf32>, vector<128x512xf32>, vector<8x512xf32> -> vector<8x512xf32>
    %109 = arith.addf %107, %108 : vector<8x512xf32>
    %110 = vector.extract_strided_slice %109 {offsets = [0, 0], sizes = [8, 128], strides = [1, 1]} : vector<8x512xf32> to vector<8x128xf32>
    %111 = arith.negf %110 : vector<8x128xf32>
    %112 = math.exp %111 : vector<8x128xf32>
    %cst_38 = arith.constant 1.000000e+00 : f32
    %113 = vector.broadcast %cst_38 : f32 to vector<8x128xf32>
    %114 = arith.addf %113, %112 : vector<8x128xf32>
    %115 = arith.divf %113, %114 : vector<8x128xf32>
    %116 = vector.extract_strided_slice %109 {offsets = [0, 128], sizes = [8, 128], strides = [1, 1]} : vector<8x512xf32> to vector<8x128xf32>
    %117 = arith.negf %116 : vector<8x128xf32>
    %118 = math.exp %117 : vector<8x128xf32>
    %cst_39 = arith.constant 1.000000e+00 : f32
    %119 = vector.broadcast %cst_39 : f32 to vector<8x128xf32>
    %120 = arith.addf %119, %118 : vector<8x128xf32>
    %121 = arith.divf %119, %120 : vector<8x128xf32>
    %122 = vector.extract_strided_slice %109 {offsets = [0, 256], sizes = [8, 128], strides = [1, 1]} : vector<8x512xf32> to vector<8x128xf32>
    %123 = math.tanh %122 : vector<8x128xf32>
    %124 = vector.extract_strided_slice %109 {offsets = [0, 384], sizes = [8, 128], strides = [1, 1]} : vector<8x512xf32> to vector<8x128xf32>
    %125 = arith.negf %124 : vector<8x128xf32>
    %126 = math.exp %125 : vector<8x128xf32>
    %cst_40 = arith.constant 1.000000e+00 : f32
    %127 = vector.broadcast %cst_40 : f32 to vector<8x128xf32>
    %128 = arith.addf %127, %126 : vector<8x128xf32>
    %129 = arith.divf %127, %128 : vector<8x128xf32>
    %130 = arith.mulf %121, %102 : vector<8x128xf32>
    %131 = arith.mulf %115, %123 : vector<8x128xf32>
    %132 = arith.addf %130, %131 : vector<8x128xf32>
    %133 = math.tanh %132 : vector<8x128xf32>
    %134 = arith.mulf %129, %133 : vector<8x128xf32>
    %c4_i32 = arith.constant 4 : i32
    %135 = arith.index_cast %c4_i32 : i32 to index
    %c0_41 = arith.constant 0 : index
    %c0_42 = arith.constant 0 : index
    %136 = vector.load %arg10[%135, %c0_41, %c0_42] : memref<8x8x512xf32, #tpu.memory_space<vmem>>, vector<1x8x512xf32>
    %137 = vector.shape_cast %136 : vector<1x8x512xf32> to vector<8x512xf32>
    %cst_43 = arith.constant dense<0.000000e+00> : vector<8x512xf32>
    %138 = tpu.matmul %134, %12, %cst_43 {dimension_numbers = #tpu.dot_dimension_numbers<[1], [0], [0], [1], [0, 0, 1, 1], [], []>} : vector<8x128xf32>, vector<128x512xf32>, vector<8x512xf32> -> vector<8x512xf32>
    %139 = arith.addf %137, %138 : vector<8x512xf32>
    %140 = vector.extract_strided_slice %139 {offsets = [0, 0], sizes = [8, 128], strides = [1, 1]} : vector<8x512xf32> to vector<8x128xf32>
    %141 = arith.negf %140 : vector<8x128xf32>
    %142 = math.exp %141 : vector<8x128xf32>
    %cst_44 = arith.constant 1.000000e+00 : f32
    %143 = vector.broadcast %cst_44 : f32 to vector<8x128xf32>
    %144 = arith.addf %143, %142 : vector<8x128xf32>
    %145 = arith.divf %143, %144 : vector<8x128xf32>
    %146 = vector.extract_strided_slice %139 {offsets = [0, 128], sizes = [8, 128], strides = [1, 1]} : vector<8x512xf32> to vector<8x128xf32>
    %147 = arith.negf %146 : vector<8x128xf32>
    %148 = math.exp %147 : vector<8x128xf32>
    %cst_45 = arith.constant 1.000000e+00 : f32
    %149 = vector.broadcast %cst_45 : f32 to vector<8x128xf32>
    %150 = arith.addf %149, %148 : vector<8x128xf32>
    %151 = arith.divf %149, %150 : vector<8x128xf32>
    %152 = vector.extract_strided_slice %139 {offsets = [0, 256], sizes = [8, 128], strides = [1, 1]} : vector<8x512xf32> to vector<8x128xf32>
    %153 = math.tanh %152 : vector<8x128xf32>
    %154 = vector.extract_strided_slice %139 {offsets = [0, 384], sizes = [8, 128], strides = [1, 1]} : vector<8x512xf32> to vector<8x128xf32>
    %155 = arith.negf %154 : vector<8x128xf32>
    %156 = math.exp %155 : vector<8x128xf32>
    %cst_46 = arith.constant 1.000000e+00 : f32
    %157 = vector.broadcast %cst_46 : f32 to vector<8x128xf32>
    %158 = arith.addf %157, %156 : vector<8x128xf32>
    %159 = arith.divf %157, %158 : vector<8x128xf32>
    %160 = arith.mulf %151, %132 : vector<8x128xf32>
    %161 = arith.mulf %145, %153 : vector<8x128xf32>
    %162 = arith.addf %160, %161 : vector<8x128xf32>
    %163 = math.tanh %162 : vector<8x128xf32>
    %164 = arith.mulf %159, %163 : vector<8x128xf32>
    %c5_i32 = arith.constant 5 : i32
    %165 = arith.index_cast %c5_i32 : i32 to index
    %c0_47 = arith.constant 0 : index
    %c0_48 = arith.constant 0 : index
    %166 = vector.load %arg10[%165, %c0_47, %c0_48] : memref<8x8x512xf32, #tpu.memory_space<vmem>>, vector<1x8x512xf32>
    %167 = vector.shape_cast %166 : vector<1x8x512xf32> to vector<8x512xf32>
    %cst_49 = arith.constant dense<0.000000e+00> : vector<8x512xf32>
    %168 = tpu.matmul %164, %12, %cst_49 {dimension_numbers = #tpu.dot_dimension_numbers<[1], [0], [0], [1], [0, 0, 1, 1], [], []>} : vector<8x128xf32>, vector<128x512xf32>, vector<8x512xf32> -> vector<8x512xf32>
    %169 = arith.addf %167, %168 : vector<8x512xf32>
    %170 = vector.extract_strided_slice %169 {offsets = [0, 0], sizes = [8, 128], strides = [1, 1]} : vector<8x512xf32> to vector<8x128xf32>
    %171 = arith.negf %170 : vector<8x128xf32>
    %172 = math.exp %171 : vector<8x128xf32>
    %cst_50 = arith.constant 1.000000e+00 : f32
    %173 = vector.broadcast %cst_50 : f32 to vector<8x128xf32>
    %174 = arith.addf %173, %172 : vector<8x128xf32>
    %175 = arith.divf %173, %174 : vector<8x128xf32>
    %176 = vector.extract_strided_slice %169 {offsets = [0, 128], sizes = [8, 128], strides = [1, 1]} : vector<8x512xf32> to vector<8x128xf32>
    %177 = arith.negf %176 : vector<8x128xf32>
    %178 = math.exp %177 : vector<8x128xf32>
    %cst_51 = arith.constant 1.000000e+00 : f32
    %179 = vector.broadcast %cst_51 : f32 to vector<8x128xf32>
    %180 = arith.addf %179, %178 : vector<8x128xf32>
    %181 = arith.divf %179, %180 : vector<8x128xf32>
    %182 = vector.extract_strided_slice %169 {offsets = [0, 256], sizes = [8, 128], strides = [1, 1]} : vector<8x512xf32> to vector<8x128xf32>
    %183 = math.tanh %182 : vector<8x128xf32>
    %184 = vector.extract_strided_slice %169 {offsets = [0, 384], sizes = [8, 128], strides = [1, 1]} : vector<8x512xf32> to vector<8x128xf32>
    %185 = arith.negf %184 : vector<8x128xf32>
    %186 = math.exp %185 : vector<8x128xf32>
    %cst_52 = arith.constant 1.000000e+00 : f32
    %187 = vector.broadcast %cst_52 : f32 to vector<8x128xf32>
    %188 = arith.addf %187, %186 : vector<8x128xf32>
    %189 = arith.divf %187, %188 : vector<8x128xf32>
    %190 = arith.mulf %181, %162 : vector<8x128xf32>
    %191 = arith.mulf %175, %183 : vector<8x128xf32>
    %192 = arith.addf %190, %191 : vector<8x128xf32>
    %193 = math.tanh %192 : vector<8x128xf32>
    %194 = arith.mulf %189, %193 : vector<8x128xf32>
    %c6_i32 = arith.constant 6 : i32
    %195 = arith.index_cast %c6_i32 : i32 to index
    %c0_53 = arith.constant 0 : index
    %c0_54 = arith.constant 0 : index
    %196 = vector.load %arg10[%195, %c0_53, %c0_54] : memref<8x8x512xf32, #tpu.memory_space<vmem>>, vector<1x8x512xf32>
    %197 = vector.shape_cast %196 : vector<1x8x512xf32> to vector<8x512xf32>
    %cst_55 = arith.constant dense<0.000000e+00> : vector<8x512xf32>
    %198 = tpu.matmul %194, %12, %cst_55 {dimension_numbers = #tpu.dot_dimension_numbers<[1], [0], [0], [1], [0, 0, 1, 1], [], []>} : vector<8x128xf32>, vector<128x512xf32>, vector<8x512xf32> -> vector<8x512xf32>
    %199 = arith.addf %197, %198 : vector<8x512xf32>
    %200 = vector.extract_strided_slice %199 {offsets = [0, 0], sizes = [8, 128], strides = [1, 1]} : vector<8x512xf32> to vector<8x128xf32>
    %201 = arith.negf %200 : vector<8x128xf32>
    %202 = math.exp %201 : vector<8x128xf32>
    %cst_56 = arith.constant 1.000000e+00 : f32
    %203 = vector.broadcast %cst_56 : f32 to vector<8x128xf32>
    %204 = arith.addf %203, %202 : vector<8x128xf32>
    %205 = arith.divf %203, %204 : vector<8x128xf32>
    %206 = vector.extract_strided_slice %199 {offsets = [0, 128], sizes = [8, 128], strides = [1, 1]} : vector<8x512xf32> to vector<8x128xf32>
    %207 = arith.negf %206 : vector<8x128xf32>
    %208 = math.exp %207 : vector<8x128xf32>
    %cst_57 = arith.constant 1.000000e+00 : f32
    %209 = vector.broadcast %cst_57 : f32 to vector<8x128xf32>
    %210 = arith.addf %209, %208 : vector<8x128xf32>
    %211 = arith.divf %209, %210 : vector<8x128xf32>
    %212 = vector.extract_strided_slice %199 {offsets = [0, 256], sizes = [8, 128], strides = [1, 1]} : vector<8x512xf32> to vector<8x128xf32>
    %213 = math.tanh %212 : vector<8x128xf32>
    %214 = vector.extract_strided_slice %199 {offsets = [0, 384], sizes = [8, 128], strides = [1, 1]} : vector<8x512xf32> to vector<8x128xf32>
    %215 = arith.negf %214 : vector<8x128xf32>
    %216 = math.exp %215 : vector<8x128xf32>
    %cst_58 = arith.constant 1.000000e+00 : f32
    %217 = vector.broadcast %cst_58 : f32 to vector<8x128xf32>
    %218 = arith.addf %217, %216 : vector<8x128xf32>
    %219 = arith.divf %217, %218 : vector<8x128xf32>
    %220 = arith.mulf %211, %192 : vector<8x128xf32>
    %221 = arith.mulf %205, %213 : vector<8x128xf32>
    %222 = arith.addf %220, %221 : vector<8x128xf32>
    %223 = math.tanh %222 : vector<8x128xf32>
    %224 = arith.mulf %219, %223 : vector<8x128xf32>
    %c7_i32 = arith.constant 7 : i32
    %225 = arith.index_cast %c7_i32 : i32 to index
    %c0_59 = arith.constant 0 : index
    %c0_60 = arith.constant 0 : index
    %226 = vector.load %arg10[%225, %c0_59, %c0_60] : memref<8x8x512xf32, #tpu.memory_space<vmem>>, vector<1x8x512xf32>
    %227 = vector.shape_cast %226 : vector<1x8x512xf32> to vector<8x512xf32>
    %cst_61 = arith.constant dense<0.000000e+00> : vector<8x512xf32>
    %228 = tpu.matmul %224, %12, %cst_61 {dimension_numbers = #tpu.dot_dimension_numbers<[1], [0], [0], [1], [0, 0, 1, 1], [], []>} : vector<8x128xf32>, vector<128x512xf32>, vector<8x512xf32> -> vector<8x512xf32>
    %229 = arith.addf %227, %228 : vector<8x512xf32>
    %230 = vector.extract_strided_slice %229 {offsets = [0, 0], sizes = [8, 128], strides = [1, 1]} : vector<8x512xf32> to vector<8x128xf32>
    %231 = arith.negf %230 : vector<8x128xf32>
    %232 = math.exp %231 : vector<8x128xf32>
    %cst_62 = arith.constant 1.000000e+00 : f32
    %233 = vector.broadcast %cst_62 : f32 to vector<8x128xf32>
    %234 = arith.addf %233, %232 : vector<8x128xf32>
    %235 = arith.divf %233, %234 : vector<8x128xf32>
    %236 = vector.extract_strided_slice %229 {offsets = [0, 128], sizes = [8, 128], strides = [1, 1]} : vector<8x512xf32> to vector<8x128xf32>
    %237 = arith.negf %236 : vector<8x128xf32>
    %238 = math.exp %237 : vector<8x128xf32>
    %cst_63 = arith.constant 1.000000e+00 : f32
    %239 = vector.broadcast %cst_63 : f32 to vector<8x128xf32>
    %240 = arith.addf %239, %238 : vector<8x128xf32>
    %241 = arith.divf %239, %240 : vector<8x128xf32>
    %242 = vector.extract_strided_slice %229 {offsets = [0, 256], sizes = [8, 128], strides = [1, 1]} : vector<8x512xf32> to vector<8x128xf32>
    %243 = math.tanh %242 : vector<8x128xf32>
    %244 = vector.extract_strided_slice %229 {offsets = [0, 384], sizes = [8, 128], strides = [1, 1]} : vector<8x512xf32> to vector<8x128xf32>
    %245 = arith.negf %244 : vector<8x128xf32>
    %246 = math.exp %245 : vector<8x128xf32>
    %cst_64 = arith.constant 1.000000e+00 : f32
    %247 = vector.broadcast %cst_64 : f32 to vector<8x128xf32>
    %248 = arith.addf %247, %246 : vector<8x128xf32>
    %249 = arith.divf %247, %248 : vector<8x128xf32>
    %250 = arith.mulf %241, %222 : vector<8x128xf32>
    %251 = arith.mulf %235, %243 : vector<8x128xf32>
    %252 = arith.addf %250, %251 : vector<8x128xf32>
    %253 = math.tanh %252 : vector<8x128xf32>
    %254 = arith.mulf %249, %253 : vector<8x128xf32>
    %c8_i32 = arith.constant 8 : i32
    %c0_65 = arith.constant 0 : index
    %c0_66 = arith.constant 0 : index
    %255 = vector.load %arg8[%c0_65, %c0_66] : memref<8x128xf32, #tpu.memory_space<vmem>>, vector<8x128xf32>
    tpu.vector_store %arg8[%c0_65, %c0_66], %254 {strides = array<i32>} : memref<8x128xf32, #tpu.memory_space<vmem>>, vector<8x128xf32>,
    %c0_67 = arith.constant 0 : index
    %c0_68 = arith.constant 0 : index
    %256 = vector.load %arg9[%c0_67, %c0_68] : memref<8x128xf32, #tpu.memory_space<vmem>>, vector<8x128xf32>
    tpu.vector_store %arg9[%c0_67, %c0_68], %252 {strides = array<i32>} : memref<8x128xf32, #tpu.memory_space<vmem>>, vector<8x128xf32>,
    %c0_i32_69 = arith.constant 0 : i32
    %257 = arith.cmpi eq, %arg0, %c0_i32_69 : i32
    %258 = arith.extui %257 : i1 to i32
    %c0_i32_70 = arith.constant 0 : i32
    %259 = arith.cmpi ne, %258, %c0_i32_70 : i32
    scf.if %259 {
      %c0_71 = arith.constant 0 : index
      %c0_72 = arith.constant 0 : index
      %260 = vector.load %arg8[%c0_71, %c0_72] : memref<8x128xf32, #tpu.memory_space<vmem>>, vector<8x128xf32>
      %c0_73 = arith.constant 0 : index
      %c0_74 = arith.constant 0 : index
      %261 = vector.load %arg5[%c0_73, %c0_74] : memref<128x1xf32, #tpu.memory_space<vmem>>, vector<128x1xf32>
      %cst_75 = arith.constant dense<0.000000e+00> : vector<8x1xf32>
      %262 = tpu.matmul %260, %261, %cst_75 {dimension_numbers = #tpu.dot_dimension_numbers<[1], [0], [0], [1], [0, 0, 1, 1], [], []>} : vector<8x128xf32>, vector<128x1xf32>, vector<8x1xf32> -> vector<8x1xf32>
      %c0_76 = arith.constant 0 : index
      %c0_77 = arith.constant 0 : index
      %263 = vector.load %arg6[%c0_76, %c0_77] : memref<1x1xf32, #tpu.memory_space<vmem>>, vector<1x1xf32>
      %264 = vector.broadcast %263 : vector<1x1xf32> to vector<8x1xf32>
      %265 = arith.addf %262, %264 : vector<8x1xf32>
      %c0_78 = arith.constant 0 : index
      %c0_79 = arith.constant 0 : index
      %266 = vector.load %arg7[%c0_78, %c0_79] : memref<8x1xf32, #tpu.memory_space<vmem>>, vector<8x1xf32>
      tpu.vector_store %arg7[%c0_78, %c0_79], %265 {strides = array<i32>} : memref<8x1xf32, #tpu.memory_space<vmem>>, vector<8x1xf32>,
    } else {
    }
    return
  }
  func.func @transform_0(%arg0: i32) -> (i32, i32, i32) {
    %c0_i32 = arith.constant 0 : i32
    %c0_i32_0 = arith.constant 0 : i32
    %c0_i32_1 = arith.constant 0 : i32
    return %arg0, %c0_i32, %c0_i32_0 : i32, i32, i32
  }
  func.func @transform_1(%arg0: i32) -> (i32, i32) {
    %c0_i32 = arith.constant 0 : i32
    %c0_i32_0 = arith.constant 0 : i32
    %c0_i32_1 = arith.constant 0 : i32
    return %c0_i32, %c0_i32_0 : i32, i32
  }
  func.func @transform_2(%arg0: i32) -> (i32, i32) {
    %c0_i32 = arith.constant 0 : i32
    %c0_i32_0 = arith.constant 0 : i32
    %c0_i32_1 = arith.constant 0 : i32
    return %c0_i32, %c0_i32_0 : i32, i32
  }
  func.func @transform_3(%arg0: i32) -> (i32, i32) {
    %c0_i32 = arith.constant 0 : i32
    %c0_i32_0 = arith.constant 0 : i32
    %c0_i32_1 = arith.constant 0 : i32
    return %c0_i32, %c0_i32_0 : i32, i32
  }
  func.func @transform_4(%arg0: i32) -> (i32, i32) {
    %c0_i32 = arith.constant 0 : i32
    %c0_i32_0 = arith.constant 0 : i32
    %c0_i32_1 = arith.constant 0 : i32
    return %c0_i32, %c0_i32_0 : i32, i32
  }
  func.func @transform_5(%arg0: i32) -> (i32, i32) {
    %c0_i32 = arith.constant 0 : i32
    %c0_i32_0 = arith.constant 0 : i32
    %c0_i32_1 = arith.constant 0 : i32
    return %c0_i32, %c0_i32_0 : i32, i32
  }
  func.func @transform_6(%arg0: i32) -> (i32, i32) {
    %c0_i32 = arith.constant 0 : i32
    %c0_i32_0 = arith.constant 0 : i32
    %c0_i32_1 = arith.constant 0 : i32
    return %c0_i32, %c0_i32_0 : i32, i32
  }
}

</mosaic_0001>

<llo_original>
// kernel: lstm_model_forward.2
$region0: #{lstm_model_forward.2}
  #allocation0 [shape = 'u32[]', space=smem, size = 0x4, offset = 0x4, fixed_abs, tag = 'smem constant byte address 0x4 - core index']
  #allocation1 [shape = 'u32[144,128]{1,0:T(1,128)}', space=vmem, size = 0x12000, scoped, tag = 'internal scratch']
  #allocation2 [shape = 'f32[8,128]{1,0:T(8,128)}', space=vmem, size = 0x1000, scoped, tag = 'scratch operand']
  #allocation3 [shape = 'f32[8,128]{1,0:T(8,128)}', space=vmem, size = 0x1000, scoped, tag = 'scratch operand']
  #allocation4 [shape = 'f32[8,8,512]{2,1,0:T(8,128)}', space=vmem, size = 0x20000, scoped, tag = 'scratch operand']
  %s0 = inlined_call_operand.hbm [shape: f32[8,8,128], index: 0, kind: input, shape index: {}]
  %s1 = inlined_call_operand.hbm [shape: f32[128,512], index: 1, kind: input, shape index: {}]
  %s2 = inlined_call_operand.hbm [shape: f32[128,512], index: 2, kind: input, shape index: {}]
  %s3 = inlined_call_operand.hbm [shape: f32[1,512], index: 3, kind: input, shape index: {}]
  %s4 = inlined_call_operand.hbm [shape: f32[8,8,128], index: 4, kind: output, shape index: {}]
  %s5 = sld [smem:[#allocation0]]
  $region46: #{lstm_model_forward.2} parent=0
    _
  %s7 = ssub.s32 1, %s5
  %s8 = scalar_select 0, %s7, %s5
  $region1: #{lstm_model_forward.2} parent=0
    #allocation5 [shape = 'u8[32768]{0}', space=vmem, size = 0x8000, scoped, tag = 'input window, operand 0, single buffered']
    #allocation6 [shape = 's32[1]{0}', space=sflag, size = 0x4, scoped, tag = 'scoped memory for lstm_model_forward.2']
    #allocation7 [shape = 's32[1]{0}', space=sflag, size = 0x4, scoped, tag = 'scoped memory for lstm_model_forward.2']
    #allocation8 [shape = 'u8[262144]{0}', space=vmem, size = 0x40000, scoped, tag = 'input window, operand 1, single buffered']
    #allocation9 [shape = 's32[1]{0}', space=sflag, size = 0x4, scoped, tag = 'scoped memory for lstm_model_forward.2']
    #allocation10 [shape = 'u8[262144]{0}', space=vmem, size = 0x40000, scoped, tag = 'input window, operand 2, single buffered']
    #allocation11 [shape = 'u8[2048]{0}', space=vmem, size = 0x800, scoped, tag = 'input window, operand 3, single buffered']
    #allocation12 [shape = 's32[1]{0}', space=sflag, size = 0x4, scoped, tag = 'scoped memory for lstm_model_forward.2']
    #allocation13 [shape = 'u8[32768]{0}', space=vmem, size = 0x8000, scoped, tag = 'output window, operand 0, single buffered']
    %9 = vsyncpa [#allocation6], 0
    %10 = vsyncpa [#allocation9], 0
    %11 = vsyncpa [#allocation12], 0
    %12 = vsyncpa [#allocation7], 0
    // Predicated region
    $region2: #{lstm_model_forward.2} parent=1 // pred_check
      _
    $region3: #{lstm_model_forward.2} parent=1 // pred_check_branch
      %14 = sbr.rel (0) target = $region5
    $region4: #{lstm_model_forward.2} parent=1 // pred_region
      %s16 = ssub.s32 1024, 1024
      %17 = vsyncadd [#allocation6], %s16
      %s18 = sshll.u32 [#allocation5], 4
      %s19 = int_to_ptr.vmem [resolvable:$true] %s18
      %24 = dma.hbm_to_vmem [thread:$0]  %s0, 1024, %s19, [#allocation6], 128, 128, 8
    $region5: #{lstm_model_forward.2} parent=1 // pred_fallthru
      _
    // Predicated region
    $region6: #{lstm_model_forward.2} parent=1 // pred_check
      _
    $region7: #{lstm_model_forward.2} parent=1 // pred_check_branch
      %26 = sbr.rel (0) target = $region9
    $region8: #{lstm_model_forward.2} parent=1 // pred_region
      %s28 = ssub.s32 8192, 8192
      %29 = vsyncadd [#allocation9], %s28
      %s30 = sshll.u32 [#allocation8], 4
      %s31 = int_to_ptr.vmem [resolvable:$true] %s30
      %36 = dma.hbm_to_vmem [thread:$0]  %s1, 8192, %s31, [#allocation9], 512, 512, 32
    $region9: #{lstm_model_forward.2} parent=1 // pred_fallthru
      _
    // Predicated region
    $region10: #{lstm_model_forward.2} parent=1 // pred_check
      _
    $region11: #{lstm_model_forward.2} parent=1 // pred_check_branch
      %38 = sbr.rel (0) target = $region13
    $region12: #{lstm_model_forward.2} parent=1 // pred_region
      %s40 = ssub.s32 8192, 8192
      %41 = vsyncadd [#allocation9], %s40
      %s42 = sshll.u32 [#allocation10], 4
      %s43 = int_to_ptr.vmem [resolvable:$true] %s42
      %48 = dma.hbm_to_vmem [thread:$0]  %s2, 8192, %s43, [#allocation9], 512, 512, 32
    $region13: #{lstm_model_forward.2} parent=1 // pred_fallthru
      _
    // Predicated region
    $region14: #{lstm_model_forward.2} parent=1 // pred_check
      _
    $region15: #{lstm_model_forward.2} parent=1 // pred_check_branch
      %50 = sbr.rel (0) target = $region17
    $region16: #{lstm_model_forward.2} parent=1 // pred_region
      %s52 = ssub.s32 64, 64
      %53 = vsyncadd [#allocation12], %s52
      %s55 = sshll.u32 [#allocation11], 4
      %s56 = int_to_ptr.vmem [resolvable:$true] %s55
      %58 = dma.hbm_to_vmem [thread:$0]  %s3, 64, %s56, [#allocation12]
    $region17: #{lstm_model_forward.2} parent=1 // pred_fallthru
      _
    // Predicated region
    $region18: #{lstm_model_forward.2} parent=1 // pred_check
      _
    $region19: #{lstm_model_forward.2} parent=1 // pred_check_branch
      %60 = sbr.rel (0) target = $region21
    $region20: #{lstm_model_forward.2} parent=1 // pred_region
      %61 = dma.done [#allocation6], 1024
    $region21: #{lstm_model_forward.2} parent=1 // pred_fallthru
      _
    // Predicated region
    $region22: #{lstm_model_forward.2} parent=1 // pred_check
      _
    $region23: #{lstm_model_forward.2} parent=1 // pred_check_branch
      %63 = sbr.rel (0) target = $region25
    $region24: #{lstm_model_forward.2} parent=1 // pred_region
      %64 = dma.done [#allocation9], 8192
    $region25: #{lstm_model_forward.2} parent=1 // pred_fallthru
      _
    // Predicated region
    $region26: #{lstm_model_forward.2} parent=1 // pred_check
      _
    $region27: #{lstm_model_forward.2} parent=1 // pred_check_branch
      %66 = sbr.rel (0) target = $region29
    $region28: #{lstm_model_forward.2} parent=1 // pred_region
      %67 = dma.done [#allocation9], 8192
    $region29: #{lstm_model_forward.2} parent=1 // pred_fallthru
      _
    // Predicated region
    $region30: #{lstm_model_forward.2} parent=1 // pred_check
      _
    $region31: #{lstm_model_forward.2} parent=1 // pred_check_branch
      %69 = sbr.rel (0) target = $region33
    $region32: #{lstm_model_forward.2} parent=1 // pred_region
      %70 = dma.done [#allocation12], 64
    $region33: #{lstm_model_forward.2} parent=1 // pred_fallthru
      _
    %p71 = scmp.eq.s32.totalorder 0, 0
    // Predicated region
    $region34: #{lstm_model_forward.2} parent=1 // pred_check
      %p72 = pneg %p71
    $region35: #{lstm_model_forward.2} parent=1 // pred_check_branch
      %74 = sbr.rel (%p72) target = $region37
    $region36: #{lstm_model_forward.2} parent=1 // pred_region
      %75 = vst [vmem:[#allocation2] sm:$0xff] 0.0
      %76 = vst [vmem:[#allocation3] sm:$0xff] 0.0
    $region37: #{lstm_model_forward.2} parent=1 // pred_fallthru
      _
    %v77 = vld [vmem:[#allocation5] sm:$0xff]
    %v78 = vld [vmem:[#allocation5 + $0x8] sm:$0xff]
    %v79 = vld [vmem:[#allocation5 + $0x10] sm:$0xff]
    %v80 = vld [vmem:[#allocation5 + $0x18] sm:$0xff]
    %v81 = vld [vmem:[#allocation5 + $0x20] sm:$0xff]
    %v82 = vld [vmem:[#allocation5 + $0x28] sm:$0xff]
    %v83 = vld [vmem:[#allocation5 + $0x30] sm:$0xff]
    %v84 = vld [vmem:[#allocation5 + $0x38] sm:$0xff]
    %v85 = vld [vmem:[#allocation8] sm:$0xff]
    %v86 = vld [vmem:[#allocation8 + $0x8] sm:$0xff]
    %v87 = vld [vmem:[#allocation8 + $0x10] sm:$0xff]
    %v88 = vld [vmem:[#allocation8 + $0x18] sm:$0xff]
    %v89 = vld [vmem:[#allocation8 + $0x20] sm:$0xff]
    %v90 = vld [vmem:[#allocation8 + $0x28] sm:$0xff]
    %v91 = vld [vmem:[#allocation8 + $0x30] sm:$0xff]
    %v92 = vld [vmem:[#allocation8 + $0x38] sm:$0xff]
    %v93 = vld [vmem:[#allocation8 + $0x40] sm:$0xff]
    %v94 = vld [vmem:[#allocation8 + $0x48] sm:$0xff]
    %v95 = vld [vmem:[#allocation8 + $0x50] sm:$0xff]
    %v96 = vld [vmem:[#allocation8 + $0x58] sm:$0xff]
    %v97 = vld [vmem:[#allocation8 + $0x60] sm:$0xff]
    %v98 = vld [vmem:[#allocation8 + $0x68] sm:$0xff]
    %v99 = vld [vmem:[#allocation8 + $0x70] sm:$0xff]
    %v100 = vld [vmem:[#allocation8 + $0x78] sm:$0xff]
    %v101 = vld [vmem:[#allocation8 + $0x80] sm:$0xff]
    %v102 = vld [vmem:[#allocation8 + $0x88] sm:$0xff]
    %v103 = vld [vmem:[#allocation8 + $0x90] sm:$0xff]
    %v104 = vld [vmem:[#allocation8 + $0x98] sm:$0xff]
    %v105 = vld [vmem:[#allocation8 + $0xa0] sm:$0xff]
    %v106 = vld [vmem:[#allocation8 + $0xa8] sm:$0xff]
    %v107 = vld [vmem:[#allocation8 + $0xb0] sm:$0xff]
    %v108 = vld [vmem:[#allocation8 + $0xb8] sm:$0xff]
    %v109 = vld [vmem:[#allocation8 + $0xc0] sm:$0xff]
    %v110 = vld [vmem:[#allocation8 + $0xc8] sm:$0xff]
    %v111 = vld [vmem:[#allocation8 + $0xd0] sm:$0xff]
    %v112 = vld [vmem:[#allocation8 + $0xd8] sm:$0xff]
    %v113 = vld [vmem:[#allocation8 + $0xe0] sm:$0xff]
    %v114 = vld [vmem:[#allocation8 + $0xe8] sm:$0xff]
    %v115 = vld [vmem:[#allocation8 + $0xf0] sm:$0xff]
    %v116 = vld [vmem:[#allocation8 + $0xf8] sm:$0xff]
    %v117 = vld [vmem:[#allocation8 + $0x100] sm:$0xff]
    %v118 = vld [vmem:[#allocation8 + $0x108] sm:$0xff]
    %v119 = vld [vmem:[#allocation8 + $0x110] sm:$0xff]
    %v120 = vld [vmem:[#allocation8 + $0x118] sm:$0xff]
    %v121 = vld [vmem:[#allocation8 + $0x120] sm:$0xff]
    %v122 = vld [vmem:[#allocation8 + $0x128] sm:$0xff]
    %v123 = vld [vmem:[#allocation8 + $0x130] sm:$0xff]
    %v124 = vld [vmem:[#allocation8 + $0x138] sm:$0xff]
    %v125 = vld [vmem:[#allocation8 + $0x140] sm:$0xff]
    %v126 = vld [vmem:[#allocation8 + $0x148] sm:$0xff]
    %v127 = vld [vmem:[#allocation8 + $0x150] sm:$0xff]
    %v128 = vld [vmem:[#allocation8 + $0x158] sm:$0xff]
    %v129 = vld [vmem:[#allocation8 + $0x160] sm:$0xff]
    %v130 = vld [vmem:[#allocation8 + $0x168] sm:$0xff]
    %v131 = vld [vmem:[#allocation8 + $0x170] sm:$0xff]
    %v132 = vld [vmem:[#allocation8 + $0x178] sm:$0xff]
    %v133 = vld [vmem:[#allocation8 + $0x180] sm:$0xff]
    %v134 = vld [vmem:[#allocation8 + $0x188] sm:$0xff]
    %v135 = vld [vmem:[#allocation8 + $0x190] sm:$0xff]
    %v136 = vld [vmem:[#allocation8 + $0x198] sm:$0xff]
    %v137 = vld [vmem:[#allocation8 + $0x1a0] sm:$0xff]
    %v138 = vld [vmem:[#allocation8 + $0x1a8] sm:$0xff]
    %v139 = vld [vmem:[#allocation8 + $0x1b0] sm:$0xff]
    %v140 = vld [vmem:[#allocation8 + $0x1b8] sm:$0xff]
    %v141 = vld [vmem:[#allocation8 + $0x1c0] sm:$0xff]
    %v142 = vld [vmem:[#allocation8 + $0x1c8] sm:$0xff]
    %v143 = vld [vmem:[#allocation8 + $0x1d0] sm:$0xff]
    %v144 = vld [vmem:[#allocation8 + $0x1d8] sm:$0xff]
    %v145 = vld [vmem:[#allocation8 + $0x1e0] sm:$0xff]
    %v146 = vld [vmem:[#allocation8 + $0x1e8] sm:$0xff]
    %v147 = vld [vmem:[#allocation8 + $0x1f0] sm:$0xff]
    %v148 = vld [vmem:[#allocation8 + $0x1f8] sm:$0xff]
    %v149 = vld [vmem:[#allocation11] sm:$0xf]
    %v151 = vlaneseq
    %v152 = vshrl.u32 %v151, 7
    %v153 = vsub.s32 0, %v152
    %v154 = vrot.slane %v149, %v153
    %v155 = vlaneseq
    %v156 = vshrl.u32 %v155, 7
    %v157 = vsub.s32 1, %v156
    %v158 = vrot.slane %v149, %v157
    %v159 = vlaneseq
    %v160 = vshrl.u32 %v159, 7
    %v161 = vsub.s32 2, %v160
    %v162 = vrot.slane %v149, %v161
    %v163 = vlaneseq
    %v164 = vshrl.u32 %v163, 7
    %v165 = vsub.s32 3, %v164
    %v166 = vrot.slane %v149, %v165
    %171 = vmatprep.subr.mxu0 %v86
    %172 = vmatpush1.msra.mxu0 %v85
    %173 = vmatprep.subr.mxu0 %v90
    %174 = vmatpush1.msra.mxu0 %v89
    %175 = vmatprep.subr.mxu0 %v94
    %176 = vmatpush1.msra.mxu0 %v93
    %177 = vmatprep.subr.mxu0 %v98
    %178 = vmatpush1.msra.mxu0 %v97
    %179 = vmatprep.subr.mxu0 %v102
    %180 = vmatpush1.msra.mxu0 %v101
    %181 = vmatprep.subr.mxu0 %v106
    %182 = vmatpush1.msra.mxu0 %v105
    %183 = vmatprep.subr.mxu0 %v110
    %184 = vmatpush1.msra.mxu0 %v109
    %185 = vmatprep.subr.mxu0 %v114
    %186 = vmatpush1.msra.mxu0 %v113
    %187 = vmatprep.subr.mxu0 %v118
    %188 = vmatpush1.msra.mxu0 %v117
    %189 = vmatprep.subr.mxu0 %v122
    %190 = vmatpush1.msra.mxu0 %v121
    %191 = vmatprep.subr.mxu0 %v126
    %192 = vmatpush1.msra.mxu0 %v125
    %193 = vmatprep.subr.mxu0 %v130
    %194 = vmatpush1.msra.mxu0 %v129
    %195 = vmatprep.subr.mxu0 %v134
    %196 = vmatpush1.msra.mxu0 %v133
    %197 = vmatprep.subr.mxu0 %v138
    %198 = vmatpush1.msra.mxu0 %v137
    %199 = vmatprep.subr.mxu0 %v142
    %200 = vmatpush1.msra.mxu0 %v141
    %201 = vmatprep.subr.mxu0 %v146
    %202 = vmatpush1.msra.mxu0 %v145
    %203 = vmatprep.subr.mxu0 0.0
    %204 = vmatpush1.msra.mxu0 0.0
    %205 = vmatprep.subr.mxu0 0.0
    %206 = vmatpush1.msra.mxu0 0.0
    %207 = vmatprep.subr.mxu0 0.0
    %208 = vmatpush1.msra.mxu0 0.0
    %209 = vmatprep.subr.mxu0 0.0
    %210 = vmatpush1.msra.mxu0 0.0
    %211 = vmatprep.subr.mxu0 0.0
    %212 = vmatpush1.msra.mxu0 0.0
    %213 = vmatprep.subr.mxu0 0.0
    %214 = vmatpush1.msra.mxu0 0.0
    %215 = vmatprep.subr.mxu0 0.0
    %216 = vmatpush1.msra.mxu0 0.0
    %217 = vmatprep.subr.mxu0 0.0
    %218 = vmatpush1.msra.mxu0 0.0
    %219 = vmatprep.subr.mxu0 0.0
    %220 = vmatpush1.msra.mxu0 0.0
    %221 = vmatprep.subr.mxu0 0.0
    %222 = vmatpush1.msra.mxu0 0.0
    %223 = vmatprep.subr.mxu0 0.0
    %224 = vmatpush1.msra.mxu0 0.0
    %225 = vmatprep.subr.mxu0 0.0
    %226 = vmatpush1.msra.mxu0 0.0
    %227 = vmatprep.subr.mxu0 0.0
    %228 = vmatpush1.msra.mxu0 0.0
    %229 = vmatprep.subr.mxu0 0.0
    %230 = vmatpush1.msra.mxu0 0.0
    %231 = vmatprep.subr.mxu0 0.0
    %232 = vmatpush1.msra.mxu0 0.0
    %233 = vmatprep.subr.mxu0 0.0
    %234 = vmatpush1.msra.mxu0 0.0
    %235 = vmatprep.mubr.f32.mxu0 0.0
    %236 = vmatmul.mubr.f32.gmra.mrb[0].mxu0 %v77
    %v237 = vpop.f32.mrb[0].mxu0
    %v238 = vadd.f32 %v154, %v237
    %v239 = vpop.f32.mrb[0].mxu0
    %v240 = vadd.f32 %v158, %v239
    %241 = vmatprep.mubr.f32.mxu0 0.0
    %242 = vmatmul.mubr.f32.gmra.mrb[0].mxu0 %v78
    %v243 = vpop.f32.mrb[0].mxu0
    %v244 = vadd.f32 %v154, %v243
    %v245 = vpop.f32.mrb[0].mxu0
    %v246 = vadd.f32 %v158, %v245
    %247 = vmatprep.mubr.f32.mxu0 0.0
    %248 = vmatmul.mubr.f32.gmra.mrb[0].mxu0 %v79
    %v249 = vpop.f32.mrb[0].mxu0
    %v250 = vadd.f32 %v154, %v249
    %v251 = vpop.f32.mrb[0].mxu0
    %v252 = vadd.f32 %v158, %v251
    %253 = vmatprep.mubr.f32.mxu0 0.0
    %254 = vmatmul.mubr.f32.gmra.mrb[0].mxu0 %v80
    %v255 = vpop.f32.mrb[0].mxu0
    %v256 = vadd.f32 %v154, %v255
    %v257 = vpop.f32.mrb[0].mxu0
    %v258 = vadd.f32 %v158, %v257
    %259 = vmatprep.mubr.f32.mxu0 0.0
    %260 = vmatmul.mubr.f32.gmra.mrb[0].mxu0 %v81
    %v261 = vpop.f32.mrb[0].mxu0
    %v262 = vadd.f32 %v154, %v261
    %v263 = vpop.f32.mrb[0].mxu0
    %v264 = vadd.f32 %v158, %v263
    %265 = vmatprep.mubr.f32.mxu0 0.0
    %266 = vmatmul.mubr.f32.gmra.mrb[0].mxu0 %v82
    %v267 = vpop.f32.mrb[0].mxu0
    %v268 = vadd.f32 %v154, %v267
    %v269 = vpop.f32.mrb[0].mxu0
    %v270 = vadd.f32 %v158, %v269
    %271 = vmatprep.mubr.f32.mxu0 0.0
    %272 = vmatmul.mubr.f32.gmra.mrb[0].mxu0 %v83
    %v273 = vpop.f32.mrb[0].mxu0
    %v274 = vadd.f32 %v154, %v273
    %v275 = vpop.f32.mrb[0].mxu0
    %v276 = vadd.f32 %v158, %v275
    %277 = vmatprep.mubr.f32.mxu0 0.0
    %278 = vmatmul.mubr.f32.gmra.mrb[0].mxu0 %v84
    %v279 = vpop.f32.mrb[0].mxu0
    %v280 = vadd.f32 %v154, %v279
    %v281 = vpop.f32.mrb[0].mxu0
    %v282 = vadd.f32 %v158, %v281
    %283 = vdwg.mxu0
    %284 = vmatprep.subr.mxu0 %v88
    %285 = vmatpush1.msra.mxu0 %v87
    %286 = vmatprep.subr.mxu0 %v92
    %287 = vmatpush1.msra.mxu0 %v91
    %288 = vmatprep.subr.mxu0 %v96
    %289 = vmatpush1.msra.mxu0 %v95
    %290 = vmatprep.subr.mxu0 %v100
    %291 = vmatpush1.msra.mxu0 %v99
    %292 = vmatprep.subr.mxu0 %v104
    %293 = vmatpush1.msra.mxu0 %v103
    %294 = vmatprep.subr.mxu0 %v108
    %295 = vmatpush1.msra.mxu0 %v107
    %296 = vmatprep.subr.mxu0 %v112
    %297 = vmatpush1.msra.mxu0 %v111
    %298 = vmatprep.subr.mxu0 %v116
    %299 = vmatpush1.msra.mxu0 %v115
    %300 = vmatprep.subr.mxu0 %v120
    %301 = vmatpush1.msra.mxu0 %v119
    %302 = vmatprep.subr.mxu0 %v124
    %303 = vmatpush1.msra.mxu0 %v123
    %304 = vmatprep.subr.mxu0 %v128
    %305 = vmatpush1.msra.mxu0 %v127
    %306 = vmatprep.subr.mxu0 %v132
    %307 = vmatpush1.msra.mxu0 %v131
    %308 = vmatprep.subr.mxu0 %v136
    %309 = vmatpush1.msra.mxu0 %v135
    %310 = vmatprep.subr.mxu0 %v140
    %311 = vmatpush1.msra.mxu0 %v139
    %312 = vmatprep.subr.mxu0 %v144
    %313 = vmatpush1.msra.mxu0 %v143
    %314 = vmatprep.subr.mxu0 %v148
    %315 = vmatpush1.msra.mxu0 %v147
    %316 = vmatprep.subr.mxu0 0.0
    %317 = vmatpush1.msra.mxu0 0.0
    %318 = vmatprep.subr.mxu0 0.0
    %319 = vmatpush1.msra.mxu0 0.0
    %320 = vmatprep.subr.mxu0 0.0
    %321 = vmatpush1.msra.mxu0 0.0
    %322 = vmatprep.subr.mxu0 0.0
    %323 = vmatpush1.msra.mxu0 0.0
    %324 = vmatprep.subr.mxu0 0.0
    %325 = vmatpush1.msra.mxu0 0.0
    %326 = vmatprep.subr.mxu0 0.0
    %327 = vmatpush1.msra.mxu0 0.0
    %328 = vmatprep.subr.mxu0 0.0
    %329 = vmatpush1.msra.mxu0 0.0
    %330 = vmatprep.subr.mxu0 0.0
    %331 = vmatpush1.msra.mxu0 0.0
    %332 = vmatprep.subr.mxu0 0.0
    %333 = vmatpush1.msra.mxu0 0.0
    %334 = vmatprep.subr.mxu0 0.0
    %335 = vmatpush1.msra.mxu0 0.0
    %336 = vmatprep.subr.mxu0 0.0
    %337 = vmatpush1.msra.mxu0 0.0
    %338 = vmatprep.subr.mxu0 0.0
    %339 = vmatpush1.msra.mxu0 0.0
    %340 = vmatprep.subr.mxu0 0.0
    %341 = vmatpush1.msra.mxu0 0.0
    %342 = vmatprep.subr.mxu0 0.0
    %343 = vmatpush1.msra.mxu0 0.0
    %344 = vmatprep.subr.mxu0 0.0
    %345 = vmatpush1.msra.mxu0 0.0
    %346 = vmatprep.subr.mxu0 0.0
    %347 = vmatpush1.msra.mxu0 0.0
    %348 = vmatprep.mubr.f32.mxu0 0.0
    %349 = vmatmul.mubr.f32.gmra.mrb[0].mxu0 %v77
    %v350 = vpop.f32.mrb[0].mxu0
    %v351 = vadd.f32 %v162, %v350
    %v352 = vpop.f32.mrb[0].mxu0
    %v353 = vadd.f32 %v166, %v352
    %354 = vmatprep.mubr.f32.mxu0 0.0
    %355 = vmatmul.mubr.f32.gmra.mrb[0].mxu0 %v78
    %v356 = vpop.f32.mrb[0].mxu0
    %v357 = vadd.f32 %v162, %v356
    %v358 = vpop.f32.mrb[0].mxu0
    %v359 = vadd.f32 %v166, %v358
    %360 = vmatprep.mubr.f32.mxu0 0.0
    %361 = vmatmul.mubr.f32.gmra.mrb[0].mxu0 %v79
    %v362 = vpop.f32.mrb[0].mxu0
    %v363 = vadd.f32 %v162, %v362
    %v364 = vpop.f32.mrb[0].mxu0
    %v365 = vadd.f32 %v166, %v364
    %366 = vmatprep.mubr.f32.mxu0 0.0
    %367 = vmatmul.mubr.f32.gmra.mrb[0].mxu0 %v80
    %v368 = vpop.f32.mrb[0].mxu0
    %v369 = vadd.f32 %v162, %v368
    %v370 = vpop.f32.mrb[0].mxu0
    %v371 = vadd.f32 %v166, %v370
    %372 = vmatprep.mubr.f32.mxu0 0.0
    %373 = vmatmul.mubr.f32.gmra.mrb[0].mxu0 %v81
    %v374 = vpop.f32.mrb[0].mxu0
    %v375 = vadd.f32 %v162, %v374
    %v376 = vpop.f32.mrb[0].mxu0
    %v377 = vadd.f32 %v166, %v376
    %378 = vmatprep.mubr.f32.mxu0 0.0
    %379 = vmatmul.mubr.f32.gmra.mrb[0].mxu0 %v82
    %v380 = vpop.f32.mrb[0].mxu0
    %v381 = vadd.f32 %v162, %v380
    %v382 = vpop.f32.mrb[0].mxu0
    %v383 = vadd.f32 %v166, %v382
    %384 = vmatprep.mubr.f32.mxu0 0.0
    %385 = vmatmul.mubr.f32.gmra.mrb[0].mxu0 %v83
    %v386 = vpop.f32.mrb[0].mxu0
    %v387 = vadd.f32 %v162, %v386
    %v388 = vpop.f32.mrb[0].mxu0
    %v389 = vadd.f32 %v166, %v388
    %390 = vmatprep.mubr.f32.mxu0 0.0
    %391 = vmatmul.mubr.f32.gmra.mrb[0].mxu0 %v84
    %v392 = vpop.f32.mrb[0].mxu0
    %v393 = vadd.f32 %v162, %v392
    %v394 = vpop.f32.mrb[0].mxu0
    %v395 = vadd.f32 %v166, %v394
    %396 = vdwg.mxu0
    %397 = vst [vmem:[#allocation4] sm:$0xff] %v238
    %398 = vst [vmem:[#allocation4 + $0x8] sm:$0xff] %v240
    %399 = vst [vmem:[#allocation4 + $0x10] sm:$0xff] %v351
    %400 = vst [vmem:[#allocation4 + $0x18] sm:$0xff] %v353
    %401 = vst [vmem:[#allocation4 + $0x20] sm:$0xff] %v244
    %402 = vst [vmem:[#allocation4 + $0x28] sm:$0xff] %v246
    %403 = vst [vmem:[#allocation4 + $0x30] sm:$0xff] %v357
    %404 = vst [vmem:[#allocation4 + $0x38] sm:$0xff] %v359
    %405 = vst [vmem:[#allocation4 + $0x40] sm:$0xff] %v250
    %406 = vst [vmem:[#allocation4 + $0x48] sm:$0xff] %v252
    %407 = vst [vmem:[#allocation4 + $0x50] sm:$0xff] %v363
    %408 = vst [vmem:[#allocation4 + $0x58] sm:$0xff] %v365
    %409 = vst [vmem:[#allocation4 + $0x60] sm:$0xff] %v256
    %410 = vst [vmem:[#allocation4 + $0x68] sm:$0xff] %v258
    %411 = vst [vmem:[#allocation4 + $0x70] sm:$0xff] %v369
    %412 = vst [vmem:[#allocation4 + $0x78] sm:$0xff] %v371
    %413 = vst [vmem:[#allocation4 + $0x80] sm:$0xff] %v262
    %414 = vst [vmem:[#allocation4 + $0x88] sm:$0xff] %v264
    %415 = vst [vmem:[#allocation4 + $0x90] sm:$0xff] %v375
    %416 = vst [vmem:[#allocation4 + $0x98] sm:$0xff] %v377
    %417 = vst [vmem:[#allocation4 + $0xa0] sm:$0xff] %v268
    %418 = vst [vmem:[#allocation4 + $0xa8] sm:$0xff] %v270
    %419 = vst [vmem:[#allocation4 + $0xb0] sm:$0xff] %v381
    %420 = vst [vmem:[#allocation4 + $0xb8] sm:$0xff] %v383
    %421 = vst [vmem:[#allocation4 + $0xc0] sm:$0xff] %v274
    %422 = vst [vmem:[#allocation4 + $0xc8] sm:$0xff] %v276
    %423 = vst [vmem:[#allocation4 + $0xd0] sm:$0xff] %v387
    %424 = vst [vmem:[#allocation4 + $0xd8] sm:$0xff] %v389
    %425 = vst [vmem:[#allocation4 + $0xe0] sm:$0xff] %v280
    %426 = vst [vmem:[#allocation4 + $0xe8] sm:$0xff] %v282
    %427 = vst [vmem:[#allocation4 + $0xf0] sm:$0xff] %v393
    %428 = vst [vmem:[#allocation4 + $0xf8] sm:$0xff] %v395
    %v429 = vld [vmem:[#allocation10] sm:$0xff]
    %v430 = vld [vmem:[#allocation10 + $0x8] sm:$0xff]
    %v431 = vld [vmem:[#allocation10 + $0x10] sm:$0xff]
    %v432 = vld [vmem:[#allocation10 + $0x18] sm:$0xff]
    %v433 = vld [vmem:[#allocation10 + $0x20] sm:$0xff]
    %v434 = vld [vmem:[#allocation10 + $0x28] sm:$0xff]
    %v435 = vld [vmem:[#allocation10 + $0x30] sm:$0xff]
    %v436 = vld [vmem:[#allocation10 + $0x38] sm:$0xff]
    %v437 = vld [vmem:[#allocation10 + $0x40] sm:$0xff]
    %v438 = vld [vmem:[#allocation10 + $0x48] sm:$0xff]
    %v439 = vld [vmem:[#allocation10 + $0x50] sm:$0xff]
    %v440 = vld [vmem:[#allocation10 + $0x58] sm:$0xff]
    %v441 = vld [vmem:[#allocation10 + $0x60] sm:$0xff]
    %v442 = vld [vmem:[#allocation10 + $0x68] sm:$0xff]
    %v443 = vld [vmem:[#allocation10 + $0x70] sm:$0xff]
    %v444 = vld [vmem:[#allocation10 + $0x78] sm:$0xff]
    %v445 = vld [vmem:[#allocation10 + $0x80] sm:$0xff]
    %v446 = vld [vmem:[#allocation10 + $0x88] sm:$0xff]
    %v447 = vld [vmem:[#allocation10 + $0x90] sm:$0xff]
    %v448 = vld [vmem:[#allocation10 + $0x98] sm:$0xff]
    %v449 = vld [vmem:[#allocation10 + $0xa0] sm:$0xff]
    %v450 = vld [vmem:[#allocation10 + $0xa8] sm:$0xff]
    %v451 = vld [vmem:[#allocation10 + $0xb0] sm:$0xff]
    %v452 = vld [vmem:[#allocation10 + $0xb8] sm:$0xff]
    %v453 = vld [vmem:[#allocation10 + $0xc0] sm:$0xff]
    %v454 = vld [vmem:[#allocation10 + $0xc8] sm:$0xff]
    %v455 = vld [vmem:[#allocation10 + $0xd0] sm:$0xff]
    %v456 = vld [vmem:[#allocation10 + $0xd8] sm:$0xff]
    %v457 = vld [vmem:[#allocation10 + $0xe0] sm:$0xff]
    %v458 = vld [vmem:[#allocation10 + $0xe8] sm:$0xff]
    %v459 = vld [vmem:[#allocation10 + $0xf0] sm:$0xff]
    %v460 = vld [vmem:[#allocation10 + $0xf8] sm:$0xff]
    %v461 = vld [vmem:[#allocation10 + $0x100] sm:$0xff]
    %v462 = vld [vmem:[#allocation10 + $0x108] sm:$0xff]
    %v463 = vld [vmem:[#allocation10 + $0x110] sm:$0xff]
    %v464 = vld [vmem:[#allocation10 + $0x118] sm:$0xff]
    %v465 = vld [vmem:[#allocation10 + $0x120] sm:$0xff]
    %v466 = vld [vmem:[#allocation10 + $0x128] sm:$0xff]
    %v467 = vld [vmem:[#allocation10 + $0x130] sm:$0xff]
    %v468 = vld [vmem:[#allocation10 + $0x138] sm:$0xff]
    %v469 = vld [vmem:[#allocation10 + $0x140] sm:$0xff]
    %v470 = vld [vmem:[#allocation10 + $0x148] sm:$0xff]
    %v471 = vld [vmem:[#allocation10 + $0x150] sm:$0xff]
    %v472 = vld [vmem:[#allocation10 + $0x158] sm:$0xff]
    %v473 = vld [vmem:[#allocation10 + $0x160] sm:$0xff]
    %v474 = vld [vmem:[#allocation10 + $0x168] sm:$0xff]
    %v475 = vld [vmem:[#allocation10 + $0x170] sm:$0xff]
    %v476 = vld [vmem:[#allocation10 + $0x178] sm:$0xff]
    %v477 = vld [vmem:[#allocation10 + $0x180] sm:$0xff]
    %v478 = vld [vmem:[#allocation10 + $0x188] sm:$0xff]
    %v479 = vld [vmem:[#allocation10 + $0x190] sm:$0xff]
    %v480 = vld [vmem:[#allocation10 + $0x198] sm:$0xff]
    %v481 = vld [vmem:[#allocation10 + $0x1a0] sm:$0xff]
    %v482 = vld [vmem:[#allocation10 + $0x1a8] sm:$0xff]
    %v483 = vld [vmem:[#allocation10 + $0x1b0] sm:$0xff]
    %v484 = vld [vmem:[#allocation10 + $0x1b8] sm:$0xff]
    %v485 = vld [vmem:[#allocation10 + $0x1c0] sm:$0xff]
    %v486 = vld [vmem:[#allocation10 + $0x1c8] sm:$0xff]
    %v487 = vld [vmem:[#allocation10 + $0x1d0] sm:$0xff]
    %v488 = vld [vmem:[#allocation10 + $0x1d8] sm:$0xff]
    %v489 = vld [vmem:[#allocation10 + $0x1e0] sm:$0xff]
    %v490 = vld [vmem:[#allocation10 + $0x1e8] sm:$0xff]
    %v491 = vld [vmem:[#allocation10 + $0x1f0] sm:$0xff]
    %v492 = vld [vmem:[#allocation10 + $0x1f8] sm:$0xff]
    %v493 = vld [vmem:[#allocation2] sm:$0xff]
    %v494 = vld [vmem:[#allocation3] sm:$0xff]
    %v495 = vld [vmem:[#allocation4] sm:$0xff]
    %v496 = vld [vmem:[#allocation4 + $0x8] sm:$0xff]
    %v497 = vld [vmem:[#allocation4 + $0x10] sm:$0xff]
    %v498 = vld [vmem:[#allocation4 + $0x18] sm:$0xff]
    %499 = vmatprep.subr.mxu0 %v430
    %500 = vmatpush1.msra.mxu0 %v429
    %501 = vmatprep.subr.mxu0 %v434
    %502 = vmatpush1.msra.mxu0 %v433
    %503 = vmatprep.subr.mxu0 %v438
    %504 = vmatpush1.msra.mxu0 %v437
    %505 = vmatprep.subr.mxu0 %v442
    %506 = vmatpush1.msra.mxu0 %v441
    %507 = vmatprep.subr.mxu0 %v446
    %508 = vmatpush1.msra.mxu0 %v445
    %509 = vmatprep.subr.mxu0 %v450
    %510 = vmatpush1.msra.mxu0 %v449
    %511 = vmatprep.subr.mxu0 %v454
    %512 = vmatpush1.msra.mxu0 %v453
    %513 = vmatprep.subr.mxu0 %v458
    %514 = vmatpush1.msra.mxu0 %v457
    %515 = vmatprep.subr.mxu0 %v462
    %516 = vmatpush1.msra.mxu0 %v461
    %517 = vmatprep.subr.mxu0 %v466
    %518 = vmatpush1.msra.mxu0 %v465
    %519 = vmatprep.subr.mxu0 %v470
    %520 = vmatpush1.msra.mxu0 %v469
    %521 = vmatprep.subr.mxu0 %v474
    %522 = vmatpush1.msra.mxu0 %v473
    %523 = vmatprep.subr.mxu0 %v478
    %524 = vmatpush1.msra.mxu0 %v477
    %525 = vmatprep.subr.mxu0 %v482
    %526 = vmatpush1.msra.mxu0 %v481
    %527 = vmatprep.subr.mxu0 %v486
    %528 = vmatpush1.msra.mxu0 %v485
    %529 = vmatprep.subr.mxu0 %v490
    %530 = vmatpush1.msra.mxu0 %v489
    %531 = vmatprep.subr.mxu0 0.0
    %532 = vmatpush1.msra.mxu0 0.0
    %533 = vmatprep.subr.mxu0 0.0
    %534 = vmatpush1.msra.mxu0 0.0
    %535 = vmatprep.subr.mxu0 0.0
    %536 = vmatpush1.msra.mxu0 0.0
    %537 = vmatprep.subr.mxu0 0.0
    %538 = vmatpush1.msra.mxu0 0.0
    %539 = vmatprep.subr.mxu0 0.0
    %540 = vmatpush1.msra.mxu0 0.0
    %541 = vmatprep.subr.mxu0 0.0
    %542 = vmatpush1.msra.mxu0 0.0
    %543 = vmatprep.subr.mxu0 0.0
    %544 = vmatpush1.msra.mxu0 0.0
    %545 = vmatprep.subr.mxu0 0.0
    %546 = vmatpush1.msra.mxu0 0.0
    %547 = vmatprep.subr.mxu0 0.0
    %548 = vmatpush1.msra.mxu0 0.0
    %549 = vmatprep.subr.mxu0 0.0
    %550 = vmatpush1.msra.mxu0 0.0
    %551 = vmatprep.subr.mxu0 0.0
    %552 = vmatpush1.msra.mxu0 0.0
    %553 = vmatprep.subr.mxu0 0.0
    %554 = vmatpush1.msra.mxu0 0.0
    %555 = vmatprep.subr.mxu0 0.0
    %556 = vmatpush1.msra.mxu0 0.0
    %557 = vmatprep.subr.mxu0 0.0
    %558 = vmatpush1.msra.mxu0 0.0
    %559 = vmatprep.subr.mxu0 0.0
    %560 = vmatpush1.msra.mxu0 0.0
    %561 = vmatprep.subr.mxu0 0.0
    %562 = vmatpush1.msra.mxu0 0.0
    %563 = vmatprep.mubr.f32.mxu0 0.0
    %564 = vmatmul.mubr.f32.gmra.mrb[0].mxu0 %v493
    %v565 = vpop.f32.mrb[0].mxu0
    %v566 = vadd.f32 0.0, %v565
    %v567 = vpop.f32.mrb[0].mxu0
    %v568 = vadd.f32 0.0, %v567
    %569 = vdwg.mxu0
    %570 = vmatprep.subr.mxu0 %v432
    %571 = vmatpush1.msra.mxu0 %v431
    %572 = vmatprep.subr.mxu0 %v436
    %573 = vmatpush1.msra.mxu0 %v435
    %574 = vmatprep.subr.mxu0 %v440
    %575 = vmatpush1.msra.mxu0 %v439
    %576 = vmatprep.subr.mxu0 %v444
    %577 = vmatpush1.msra.mxu0 %v443
    %578 = vmatprep.subr.mxu0 %v448
    %579 = vmatpush1.msra.mxu0 %v447
    %580 = vmatprep.subr.mxu0 %v452
    %581 = vmatpush1.msra.mxu0 %v451
    %582 = vmatprep.subr.mxu0 %v456
    %583 = vmatpush1.msra.mxu0 %v455
    %584 = vmatprep.subr.mxu0 %v460
    %585 = vmatpush1.msra.mxu0 %v459
    %586 = vmatprep.subr.mxu0 %v464
    %587 = vmatpush1.msra.mxu0 %v463
    %588 = vmatprep.subr.mxu0 %v468
    %589 = vmatpush1.msra.mxu0 %v467
    %590 = vmatprep.subr.mxu0 %v472
    %591 = vmatpush1.msra.mxu0 %v471
    %592 = vmatprep.subr.mxu0 %v476
    %593 = vmatpush1.msra.mxu0 %v475
    %594 = vmatprep.subr.mxu0 %v480
    %595 = vmatpush1.msra.mxu0 %v479
    %596 = vmatprep.subr.mxu0 %v484
    %597 = vmatpush1.msra.mxu0 %v483
    %598 = vmatprep.subr.mxu0 %v488
    %599 = vmatpush1.msra.mxu0 %v487
    %600 = vmatprep.subr.mxu0 %v492
    %601 = vmatpush1.msra.mxu0 %v491
    %602 = vmatprep.subr.mxu0 0.0
    %603 = vmatpush1.msra.mxu0 0.0
    %604 = vmatprep.subr.mxu0 0.0
    %605 = vmatpush1.msra.mxu0 0.0
    %606 = vmatprep.subr.mxu0 0.0
    %607 = vmatpush1.msra.mxu0 0.0
    %608 = vmatprep.subr.mxu0 0.0
    %609 = vmatpush1.msra.mxu0 0.0
    %610 = vmatprep.subr.mxu0 0.0
    %611 = vmatpush1.msra.mxu0 0.0
    %612 = vmatprep.subr.mxu0 0.0
    %613 = vmatpush1.msra.mxu0 0.0
    %614 = vmatprep.subr.mxu0 0.0
    %615 = vmatpush1.msra.mxu0 0.0
    %616 = vmatprep.subr.mxu0 0.0
    %617 = vmatpush1.msra.mxu0 0.0
    %618 = vmatprep.subr.mxu0 0.0
    %619 = vmatpush1.msra.mxu0 0.0
    %620 = vmatprep.subr.mxu0 0.0
    %621 = vmatpush1.msra.mxu0 0.0
    %622 = vmatprep.subr.mxu0 0.0
    %623 = vmatpush1.msra.mxu0 0.0
    %624 = vmatprep.subr.mxu0 0.0
    %625 = vmatpush1.msra.mxu0 0.0
    %626 = vmatprep.subr.mxu0 0.0
    %627 = vmatpush1.msra.mxu0 0.0
    %628 = vmatprep.subr.mxu0 0.0
    %629 = vmatpush1.msra.mxu0 0.0
    %630 = vmatprep.subr.mxu0 0.0
    %631 = vmatpush1.msra.mxu0 0.0
    %632 = vmatprep.subr.mxu0 0.0
    %633 = vmatpush1.msra.mxu0 0.0
    %634 = vmatprep.mubr.f32.mxu0 0.0
    %635 = vmatmul.mubr.f32.gmra.mrb[0].mxu0 %v493
    %v636 = vpop.f32.mrb[0].mxu0
    %v637 = vadd.f32 0.0, %v636
    %v638 = vpop.f32.mrb[0].mxu0
    %v639 = vadd.f32 0.0, %v638
    %640 = vdwg.mxu0
    %v641 = vadd.f32 %v495, %v566
    %v642 = vadd.f32 %v496, %v568
    %v643 = vadd.f32 %v497, %v637
    %v644 = vadd.f32 %v498, %v639
    %v645 = vxor.u32 %v641, 2147483648
    %v646 = vmul.f32 %v645, 1.442695
    %v647 = vpow.pop %v646
    %v648 = vadd.f32 %v647, 1.0
    %v649 = vrcp.pop %v648
    %v650 = vmul.f32 1.0, %v649
    %v651 = vxor.u32 %v642, 2147483648
    %v652 = vmul.f32 %v651, 1.442695
    %v653 = vpow.pop %v652
    %v654 = vadd.f32 %v653, 1.0
    %v655 = vrcp.pop %v654
    %v656 = vmul.f32 1.0, %v655
    %v657 = vtanh.pop %v643
    %v658 = vxor.u32 %v644, 2147483648
    %v659 = vmul.f32 %v658, 1.442695
    %v660 = vpow.pop %v659
    %v661 = vadd.f32 %v660, 1.0
    %v662 = vrcp.pop %v661
    %v663 = vmul.f32 1.0, %v662
    %v664 = vmul.f32 %v656, %v494
    %v665 = vmul.f32 %v650, %v657
    %v666 = vadd.f32 %v664, %v665
    %v667 = vtanh.pop %v666
    %v668 = vmul.f32 %v663, %v667
    %669 = vst [vmem:[#allocation13] sm:$0xff] %v668
    %s670 = scalar_lea.vmem [#allocation4], 32
    %v671 = vld [vmem:[%s670] sm:$0xff]
    %v672 = vld [vmem:[%s670 + $0x8] sm:$0xff]
    %v673 = vld [vmem:[%s670 + $0x10] sm:$0xff]
    %v674 = vld [vmem:[%s670 + $0x18] sm:$0xff]
    %675 = vmatprep.subr.mxu0 %v430
    %676 = vmatpush1.msra.mxu0 %v429
    %677 = vmatprep.subr.mxu0 %v434
    %678 = vmatpush1.msra.mxu0 %v433
    %679 = vmatprep.subr.mxu0 %v438
    %680 = vmatpush1.msra.mxu0 %v437
    %681 = vmatprep.subr.mxu0 %v442
    %682 = vmatpush1.msra.mxu0 %v441
    %683 = vmatprep.subr.mxu0 %v446
    %684 = vmatpush1.msra.mxu0 %v445
    %685 = vmatprep.subr.mxu0 %v450
    %686 = vmatpush1.msra.mxu0 %v449
    %687 = vmatprep.subr.mxu0 %v454
    %688 = vmatpush1.msra.mxu0 %v453
    %689 = vmatprep.subr.mxu0 %v458
    %690 = vmatpush1.msra.mxu0 %v457
    %691 = vmatprep.subr.mxu0 %v462
    %692 = vmatpush1.msra.mxu0 %v461
    %693 = vmatprep.subr.mxu0 %v466
    %694 = vmatpush1.msra.mxu0 %v465
    %695 = vmatprep.subr.mxu0 %v470
    %696 = vmatpush1.msra.mxu0 %v469
    %697 = vmatprep.subr.mxu0 %v474
    %698 = vmatpush1.msra.mxu0 %v473
    %699 = vmatprep.subr.mxu0 %v478
    %700 = vmatpush1.msra.mxu0 %v477
    %701 = vmatprep.subr.mxu0 %v482
    %702 = vmatpush1.msra.mxu0 %v481
    %703 = vmatprep.subr.mxu0 %v486
    %704 = vmatpush1.msra.mxu0 %v485
    %705 = vmatprep.subr.mxu0 %v490
    %706 = vmatpush1.msra.mxu0 %v489
    %707 = vmatprep.subr.mxu0 0.0
    %708 = vmatpush1.msra.mxu0 0.0
    %709 = vmatprep.subr.mxu0 0.0
    %710 = vmatpush1.msra.mxu0 0.0
    %711 = vmatprep.subr.mxu0 0.0
    %712 = vmatpush1.msra.mxu0 0.0
    %713 = vmatprep.subr.mxu0 0.0
    %714 = vmatpush1.msra.mxu0 0.0
    %715 = vmatprep.subr.mxu0 0.0
    %716 = vmatpush1.msra.mxu0 0.0
    %717 = vmatprep.subr.mxu0 0.0
    %718 = vmatpush1.msra.mxu0 0.0
    %719 = vmatprep.subr.mxu0 0.0
    %720 = vmatpush1.msra.mxu0 0.0
    %721 = vmatprep.subr.mxu0 0.0
    %722 = vmatpush1.msra.mxu0 0.0
    %723 = vmatprep.subr.mxu0 0.0
    %724 = vmatpush1.msra.mxu0 0.0
    %725 = vmatprep.subr.mxu0 0.0
    %726 = vmatpush1.msra.mxu0 0.0
    %727 = vmatprep.subr.mxu0 0.0
    %728 = vmatpush1.msra.mxu0 0.0
    %729 = vmatprep.subr.mxu0 0.0
    %730 = vmatpush1.msra.mxu0 0.0
    %731 = vmatprep.subr.mxu0 0.0
    %732 = vmatpush1.msra.mxu0 0.0
    %733 = vmatprep.subr.mxu0 0.0
    %734 = vmatpush1.msra.mxu0 0.0
    %735 = vmatprep.subr.mxu0 0.0
    %736 = vmatpush1.msra.mxu0 0.0
    %737 = vmatprep.subr.mxu0 0.0
    %738 = vmatpush1.msra.mxu0 0.0
    %739 = vmatprep.mubr.f32.mxu0 0.0
    %740 = vmatmul.mubr.f32.gmra.mrb[0].mxu0 %v668
    %v741 = vpop.f32.mrb[0].mxu0
    %v742 = vadd.f32 0.0, %v741
    %v743 = vpop.f32.mrb[0].mxu0
    %v744 = vadd.f32 0.0, %v743
    %745 = vdwg.mxu0
    %746 = vmatprep.subr.mxu0 %v432
    %747 = vmatpush1.msra.mxu0 %v431
    %748 = vmatprep.subr.mxu0 %v436
    %749 = vmatpush1.msra.mxu0 %v435
    %750 = vmatprep.subr.mxu0 %v440
    %751 = vmatpush1.msra.mxu0 %v439
    %752 = vmatprep.subr.mxu0 %v444
    %753 = vmatpush1.msra.mxu0 %v443
    %754 = vmatprep.subr.mxu0 %v448
    %755 = vmatpush1.msra.mxu0 %v447
    %756 = vmatprep.subr.mxu0 %v452
    %757 = vmatpush1.msra.mxu0 %v451
    %758 = vmatprep.subr.mxu0 %v456
    %759 = vmatpush1.msra.mxu0 %v455
    %760 = vmatprep.subr.mxu0 %v460
    %761 = vmatpush1.msra.mxu0 %v459
    %762 = vmatprep.subr.mxu0 %v464
    %763 = vmatpush1.msra.mxu0 %v463
    %764 = vmatprep.subr.mxu0 %v468
    %765 = vmatpush1.msra.mxu0 %v467
    %766 = vmatprep.subr.mxu0 %v472
    %767 = vmatpush1.msra.mxu0 %v471
    %768 = vmatprep.subr.mxu0 %v476
    %769 = vmatpush1.msra.mxu0 %v475
    %770 = vmatprep.subr.mxu0 %v480
    %771 = vmatpush1.msra.mxu0 %v479
    %772 = vmatprep.subr.mxu0 %v484
    %773 = vmatpush1.msra.mxu0 %v483
    %774 = vmatprep.subr.mxu0 %v488
    %775 = vmatpush1.msra.mxu0 %v487
    %776 = vmatprep.subr.mxu0 %v492
    %777 = vmatpush1.msra.mxu0 %v491
    %778 = vmatprep.subr.mxu0 0.0
    %779 = vmatpush1.msra.mxu0 0.0
    %780 = vmatprep.subr.mxu0 0.0
    %781 = vmatpush1.msra.mxu0 0.0
    %782 = vmatprep.subr.mxu0 0.0
    %783 = vmatpush1.msra.mxu0 0.0
    %784 = vmatprep.subr.mxu0 0.0
    %785 = vmatpush1.msra.mxu0 0.0
    %786 = vmatprep.subr.mxu0 0.0
    %787 = vmatpush1.msra.mxu0 0.0
    %788 = vmatprep.subr.mxu0 0.0
    %789 = vmatpush1.msra.mxu0 0.0
    %790 = vmatprep.subr.mxu0 0.0
    %791 = vmatpush1.msra.mxu0 0.0
    %792 = vmatprep.subr.mxu0 0.0
    %793 = vmatpush1.msra.mxu0 0.0
    %794 = vmatprep.subr.mxu0 0.0
    %795 = vmatpush1.msra.mxu0 0.0
    %796 = vmatprep.subr.mxu0 0.0
    %797 = vmatpush1.msra.mxu0 0.0
    %798 = vmatprep.subr.mxu0 0.0
    %799 = vmatpush1.msra.mxu0 0.0
    %800 = vmatprep.subr.mxu0 0.0
    %801 = vmatpush1.msra.mxu0 0.0
    %802 = vmatprep.subr.mxu0 0.0
    %803 = vmatpush1.msra.mxu0 0.0
    %804 = vmatprep.subr.mxu0 0.0
    %805 = vmatpush1.msra.mxu0 0.0
    %806 = vmatprep.subr.mxu0 0.0
    %807 = vmatpush1.msra.mxu0 0.0
    %808 = vmatprep.subr.mxu0 0.0
    %809 = vmatpush1.msra.mxu0 0.0
    %810 = vmatprep.mubr.f32.mxu0 0.0
    %811 = vmatmul.mubr.f32.gmra.mrb[0].mxu0 %v668
    %v812 = vpop.f32.mrb[0].mxu0
    %v813 = vadd.f32 0.0, %v812
    %v814 = vpop.f32.mrb[0].mxu0
    %v815 = vadd.f32 0.0, %v814
    %816 = vdwg.mxu0
    %v817 = vadd.f32 %v671, %v742
    %v818 = vadd.f32 %v672, %v744
    %v819 = vadd.f32 %v673, %v813
    %v820 = vadd.f32 %v674, %v815
    %v821 = vxor.u32 %v817, 2147483648
    %v822 = vmul.f32 %v821, 1.442695
    %v823 = vpow.pop %v822
    %v824 = vadd.f32 %v823, 1.0
    %v825 = vrcp.pop %v824
    %v826 = vmul.f32 1.0, %v825
    %v827 = vxor.u32 %v818, 2147483648
    %v828 = vmul.f32 %v827, 1.442695
    %v829 = vpow.pop %v828
    %v830 = vadd.f32 %v829, 1.0
    %v831 = vrcp.pop %v830
    %v832 = vmul.f32 1.0, %v831
    %v833 = vtanh.pop %v819
    %v834 = vxor.u32 %v820, 2147483648
    %v835 = vmul.f32 %v834, 1.442695
    %v836 = vpow.pop %v835
    %v837 = vadd.f32 %v836, 1.0
    %v838 = vrcp.pop %v837
    %v839 = vmul.f32 1.0, %v838
    %v840 = vmul.f32 %v832, %v666
    %v841 = vmul.f32 %v826, %v833
    %v842 = vadd.f32 %v840, %v841
    %v843 = vtanh.pop %v842
    %v844 = vmul.f32 %v839, %v843
    %s845 = scalar_lea.vmem [#allocation13], 8
    %846 = vst [vmem:[%s845] sm:$0xff] %v844
    %s847 = scalar_lea.vmem [#allocation4], 64
    %v848 = vld [vmem:[%s847] sm:$0xff]
    %v849 = vld [vmem:[%s847 + $0x8] sm:$0xff]
    %v850 = vld [vmem:[%s847 + $0x10] sm:$0xff]
    %v851 = vld [vmem:[%s847 + $0x18] sm:$0xff]
    %852 = vmatprep.subr.mxu0 %v430
    %853 = vmatpush1.msra.mxu0 %v429
    %854 = vmatprep.subr.mxu0 %v434
    %855 = vmatpush1.msra.mxu0 %v433
    %856 = vmatprep.subr.mxu0 %v438
    %857 = vmatpush1.msra.mxu0 %v437
    %858 = vmatprep.subr.mxu0 %v442
    %859 = vmatpush1.msra.mxu0 %v441
    %860 = vmatprep.subr.mxu0 %v446
    %861 = vmatpush1.msra.mxu0 %v445
    %862 = vmatprep.subr.mxu0 %v450
    %863 = vmatpush1.msra.mxu0 %v449
    %864 = vmatprep.subr.mxu0 %v454
    %865 = vmatpush1.msra.mxu0 %v453
    %866 = vmatprep.subr.mxu0 %v458
    %867 = vmatpush1.msra.mxu0 %v457
    %868 = vmatprep.subr.mxu0 %v462
    %869 = vmatpush1.msra.mxu0 %v461
    %870 = vmatprep.subr.mxu0 %v466
    %871 = vmatpush1.msra.mxu0 %v465
    %872 = vmatprep.subr.mxu0 %v470
    %873 = vmatpush1.msra.mxu0 %v469
    %874 = vmatprep.subr.mxu0 %v474
    %875 = vmatpush1.msra.mxu0 %v473
    %876 = vmatprep.subr.mxu0 %v478
    %877 = vmatpush1.msra.mxu0 %v477
    %878 = vmatprep.subr.mxu0 %v482
    %879 = vmatpush1.msra.mxu0 %v481
    %880 = vmatprep.subr.mxu0 %v486
    %881 = vmatpush1.msra.mxu0 %v485
    %882 = vmatprep.subr.mxu0 %v490
    %883 = vmatpush1.msra.mxu0 %v489
    %884 = vmatprep.subr.mxu0 0.0
    %885 = vmatpush1.msra.mxu0 0.0
    %886 = vmatprep.subr.mxu0 0.0
    %887 = vmatpush1.msra.mxu0 0.0
    %888 = vmatprep.subr.mxu0 0.0
    %889 = vmatpush1.msra.mxu0 0.0
    %890 = vmatprep.subr.mxu0 0.0
    %891 = vmatpush1.msra.mxu0 0.0
    %892 = vmatprep.subr.mxu0 0.0
    %893 = vmatpush1.msra.mxu0 0.0
    %894 = vmatprep.subr.mxu0 0.0
    %895 = vmatpush1.msra.mxu0 0.0
    %896 = vmatprep.subr.mxu0 0.0
    %897 = vmatpush1.msra.mxu0 0.0
    %898 = vmatprep.subr.mxu0 0.0
    %899 = vmatpush1.msra.mxu0 0.0
    %900 = vmatprep.subr.mxu0 0.0
    %901 = vmatpush1.msra.mxu0 0.0
    %902 = vmatprep.subr.mxu0 0.0
    %903 = vmatpush1.msra.mxu0 0.0
    %904 = vmatprep.subr.mxu0 0.0
    %905 = vmatpush1.msra.mxu0 0.0
    %906 = vmatprep.subr.mxu0 0.0
    %907 = vmatpush1.msra.mxu0 0.0
    %908 = vmatprep.subr.mxu0 0.0
    %909 = vmatpush1.msra.mxu0 0.0
    %910 = vmatprep.subr.mxu0 0.0
    %911 = vmatpush1.msra.mxu0 0.0
    %912 = vmatprep.subr.mxu0 0.0
    %913 = vmatpush1.msra.mxu0 0.0
    %914 = vmatprep.subr.mxu0 0.0
    %915 = vmatpush1.msra.mxu0 0.0
    %916 = vmatprep.mubr.f32.mxu0 0.0
    %917 = vmatmul.mubr.f32.gmra.mrb[0].mxu0 %v844
    %v918 = vpop.f32.mrb[0].mxu0
    %v919 = vadd.f32 0.0, %v918
    %v920 = vpop.f32.mrb[0].mxu0
    %v921 = vadd.f32 0.0, %v920
    %922 = vdwg.mxu0
    %923 = vmatprep.subr.mxu0 %v432
    %924 = vmatpush1.msra.mxu0 %v431
    %925 = vmatprep.subr.mxu0 %v436
    %926 = vmatpush1.msra.mxu0 %v435
    %927 = vmatprep.subr.mxu0 %v440
    %928 = vmatpush1.msra.mxu0 %v439
    %929 = vmatprep.subr.mxu0 %v444
    %930 = vmatpush1.msra.mxu0 %v443
    %931 = vmatprep.subr.mxu0 %v448
    %932 = vmatpush1.msra.mxu0 %v447
    %933 = vmatprep.subr.mxu0 %v452
    %934 = vmatpush1.msra.mxu0 %v451
    %935 = vmatprep.subr.mxu0 %v456
    %936 = vmatpush1.msra.mxu0 %v455
    %937 = vmatprep.subr.mxu0 %v460
    %938 = vmatpush1.msra.mxu0 %v459
    %939 = vmatprep.subr.mxu0 %v464
    %940 = vmatpush1.msra.mxu0 %v463
    %941 = vmatprep.subr.mxu0 %v468
    %942 = vmatpush1.msra.mxu0 %v467
    %943 = vmatprep.subr.mxu0 %v472
    %944 = vmatpush1.msra.mxu0 %v471
    %945 = vmatprep.subr.mxu0 %v476
    %946 = vmatpush1.msra.mxu0 %v475
    %947 = vmatprep.subr.mxu0 %v480
    %948 = vmatpush1.msra.mxu0 %v479
    %949 = vmatprep.subr.mxu0 %v484
    %950 = vmatpush1.msra.mxu0 %v483
    %951 = vmatprep.subr.mxu0 %v488
    %952 = vmatpush1.msra.mxu0 %v487
    %953 = vmatprep.subr.mxu0 %v492
    %954 = vmatpush1.msra.mxu0 %v491
    %955 = vmatprep.subr.mxu0 0.0
    %956 = vmatpush1.msra.mxu0 0.0
    %957 = vmatprep.subr.mxu0 0.0
    %958 = vmatpush1.msra.mxu0 0.0
    %959 = vmatprep.subr.mxu0 0.0
    %960 = vmatpush1.msra.mxu0 0.0
    %961 = vmatprep.subr.mxu0 0.0
    %962 = vmatpush1.msra.mxu0 0.0
    %963 = vmatprep.subr.mxu0 0.0
    %964 = vmatpush1.msra.mxu0 0.0
    %965 = vmatprep.subr.mxu0 0.0
    %966 = vmatpush1.msra.mxu0 0.0
    %967 = vmatprep.subr.mxu0 0.0
    %968 = vmatpush1.msra.mxu0 0.0
    %969 = vmatprep.subr.mxu0 0.0
    %970 = vmatpush1.msra.mxu0 0.0
    %971 = vmatprep.subr.mxu0 0.0
    %972 = vmatpush1.msra.mxu0 0.0
    %973 = vmatprep.subr.mxu0 0.0
    %974 = vmatpush1.msra.mxu0 0.0
    %975 = vmatprep.subr.mxu0 0.0
    %976 = vmatpush1.msra.mxu0 0.0
    %977 = vmatprep.subr.mxu0 0.0
    %978 = vmatpush1.msra.mxu0 0.0
    %979 = vmatprep.subr.mxu0 0.0
    %980 = vmatpush1.msra.mxu0 0.0
    %981 = vmatprep.subr.mxu0 0.0
    %982 = vmatpush1.msra.mxu0 0.0
    %983 = vmatprep.subr.mxu0 0.0
    %984 = vmatpush1.msra.mxu0 0.0
    %985 = vmatprep.subr.mxu0 0.0
    %986 = vmatpush1.msra.mxu0 0.0
    %987 = vmatprep.mubr.f32.mxu0 0.0
    %988 = vmatmul.mubr.f32.gmra.mrb[0].mxu0 %v844
    %v989 = vpop.f32.mrb[0].mxu0
    %v990 = vadd.f32 0.0, %v989
    %v991 = vpop.f32.mrb[0].mxu0
    %v992 = vadd.f32 0.0, %v991
    %993 = vdwg.mxu0
    %v994 = vadd.f32 %v848, %v919
    %v995 = vadd.f32 %v849, %v921
    %v996 = vadd.f32 %v850, %v990
    %v997 = vadd.f32 %v851, %v992
    %v998 = vxor.u32 %v994, 2147483648
    %v999 = vmul.f32 %v998, 1.442695
    %v1000 = vpow.pop %v999
    %v1001 = vadd.f32 %v1000, 1.0
    %v1002 = vrcp.pop %v1001
    %v1003 = vmul.f32 1.0, %v1002
    %v1004 = vxor.u32 %v995, 2147483648
    %v1005 = vmul.f32 %v1004, 1.442695
    %v1006 = vpow.pop %v1005
    %v1007 = vadd.f32 %v1006, 1.0
    %v1008 = vrcp.pop %v1007
    %v1009 = vmul.f32 1.0, %v1008
    %v1010 = vtanh.pop %v996
    %v1011 = vxor.u32 %v997, 2147483648
    %v1012 = vmul.f32 %v1011, 1.442695
    %v1013 = vpow.pop %v1012
    %v1014 = vadd.f32 %v1013, 1.0
    %v1015 = vrcp.pop %v1014
    %v1016 = vmul.f32 1.0, %v1015
    %v1017 = vmul.f32 %v1009, %v842
    %v1018 = vmul.f32 %v1003, %v1010
    %v1019 = vadd.f32 %v1017, %v1018
    %v1020 = vtanh.pop %v1019
    %v1021 = vmul.f32 %v1016, %v1020
    %s1022 = scalar_lea.vmem [#allocation13], 16
    %1023 = vst [vmem:[%s1022] sm:$0xff] %v1021
    %s1024 = scalar_lea.vmem [#allocation4], 96
    %v1025 = vld [vmem:[%s1024] sm:$0xff]
    %v1026 = vld [vmem:[%s1024 + $0x8] sm:$0xff]
    %v1027 = vld [vmem:[%s1024 + $0x10] sm:$0xff]
    %v1028 = vld [vmem:[%s1024 + $0x18] sm:$0xff]
    %1029 = vmatprep.subr.mxu0 %v430
    %1030 = vmatpush1.msra.mxu0 %v429
    %1031 = vmatprep.subr.mxu0 %v434
    %1032 = vmatpush1.msra.mxu0 %v433
    %1033 = vmatprep.subr.mxu0 %v438
    %1034 = vmatpush1.msra.mxu0 %v437
    %1035 = vmatprep.subr.mxu0 %v442
    %1036 = vmatpush1.msra.mxu0 %v441
    %1037 = vmatprep.subr.mxu0 %v446
    %1038 = vmatpush1.msra.mxu0 %v445
    %1039 = vmatprep.subr.mxu0 %v450
    %1040 = vmatpush1.msra.mxu0 %v449
    %1041 = vmatprep.subr.mxu0 %v454
    %1042 = vmatpush1.msra.mxu0 %v453
    %1043 = vmatprep.subr.mxu0 %v458
    %1044 = vmatpush1.msra.mxu0 %v457
    %1045 = vmatprep.subr.mxu0 %v462
    %1046 = vmatpush1.msra.mxu0 %v461
    %1047 = vmatprep.subr.mxu0 %v466
    %1048 = vmatpush1.msra.mxu0 %v465
    %1049 = vmatprep.subr.mxu0 %v470
    %1050 = vmatpush1.msra.mxu0 %v469
    %1051 = vmatprep.subr.mxu0 %v474
    %1052 = vmatpush1.msra.mxu0 %v473
    %1053 = vmatprep.subr.mxu0 %v478
    %1054 = vmatpush1.msra.mxu0 %v477
    %1055 = vmatprep.subr.mxu0 %v482
    %1056 = vmatpush1.msra.mxu0 %v481
    %1057 = vmatprep.subr.mxu0 %v486
    %1058 = vmatpush1.msra.mxu0 %v485
    %1059 = vmatprep.subr.mxu0 %v490
    %1060 = vmatpush1.msra.mxu0 %v489
    %1061 = vmatprep.subr.mxu0 0.0
    %1062 = vmatpush1.msra.mxu0 0.0
    %1063 = vmatprep.subr.mxu0 0.0
    %1064 = vmatpush1.msra.mxu0 0.0
    %1065 = vmatprep.subr.mxu0 0.0
    %1066 = vmatpush1.msra.mxu0 0.0
    %1067 = vmatprep.subr.mxu0 0.0
    %1068 = vmatpush1.msra.mxu0 0.0
    %1069 = vmatprep.subr.mxu0 0.0
    %1070 = vmatpush1.msra.mxu0 0.0
    %1071 = vmatprep.subr.mxu0 0.0
    %1072 = vmatpush1.msra.mxu0 0.0
    %1073 = vmatprep.subr.mxu0 0.0
    %1074 = vmatpush1.msra.mxu0 0.0
    %1075 = vmatprep.subr.mxu0 0.0
    %1076 = vmatpush1.msra.mxu0 0.0
    %1077 = vmatprep.subr.mxu0 0.0
    %1078 = vmatpush1.msra.mxu0 0.0
    %1079 = vmatprep.subr.mxu0 0.0
    %1080 = vmatpush1.msra.mxu0 0.0
    %1081 = vmatprep.subr.mxu0 0.0
    %1082 = vmatpush1.msra.mxu0 0.0
    %1083 = vmatprep.subr.mxu0 0.0
    %1084 = vmatpush1.msra.mxu0 0.0
    %1085 = vmatprep.subr.mxu0 0.0
    %1086 = vmatpush1.msra.mxu0 0.0
    %1087 = vmatprep.subr.mxu0 0.0
    %1088 = vmatpush1.msra.mxu0 0.0
    %1089 = vmatprep.subr.mxu0 0.0
    %1090 = vmatpush1.msra.mxu0 0.0
    %1091 = vmatprep.subr.mxu0 0.0
    %1092 = vmatpush1.msra.mxu0 0.0
    %1093 = vmatprep.mubr.f32.mxu0 0.0
    %1094 = vmatmul.mubr.f32.gmra.mrb[0].mxu0 %v1021
    %v1095 = vpop.f32.mrb[0].mxu0
    %v1096 = vadd.f32 0.0, %v1095
    %v1097 = vpop.f32.mrb[0].mxu0
    %v1098 = vadd.f32 0.0, %v1097
    %1099 = vdwg.mxu0
    %1100 = vmatprep.subr.mxu0 %v432
    %1101 = vmatpush1.msra.mxu0 %v431
    %1102 = vmatprep.subr.mxu0 %v436
    %1103 = vmatpush1.msra.mxu0 %v435
    %1104 = vmatprep.subr.mxu0 %v440
    %1105 = vmatpush1.msra.mxu0 %v439
    %1106 = vmatprep.subr.mxu0 %v444
    %1107 = vmatpush1.msra.mxu0 %v443
    %1108 = vmatprep.subr.mxu0 %v448
    %1109 = vmatpush1.msra.mxu0 %v447
    %1110 = vmatprep.subr.mxu0 %v452
    %1111 = vmatpush1.msra.mxu0 %v451
    %1112 = vmatprep.subr.mxu0 %v456
    %1113 = vmatpush1.msra.mxu0 %v455
    %1114 = vmatprep.subr.mxu0 %v460
    %1115 = vmatpush1.msra.mxu0 %v459
    %1116 = vmatprep.subr.mxu0 %v464
    %1117 = vmatpush1.msra.mxu0 %v463
    %1118 = vmatprep.subr.mxu0 %v468
    %1119 = vmatpush1.msra.mxu0 %v467
    %1120 = vmatprep.subr.mxu0 %v472
    %1121 = vmatpush1.msra.mxu0 %v471
    %1122 = vmatprep.subr.mxu0 %v476
    %1123 = vmatpush1.msra.mxu0 %v475
    %1124 = vmatprep.subr.mxu0 %v480
    %1125 = vmatpush1.msra.mxu0 %v479
    %1126 = vmatprep.subr.mxu0 %v484
    %1127 = vmatpush1.msra.mxu0 %v483
    %1128 = vmatprep.subr.mxu0 %v488
    %1129 = vmatpush1.msra.mxu0 %v487
    %1130 = vmatprep.subr.mxu0 %v492
    %1131 = vmatpush1.msra.mxu0 %v491
    %1132 = vmatprep.subr.mxu0 0.0
    %1133 = vmatpush1.msra.mxu0 0.0
    %1134 = vmatprep.subr.mxu0 0.0
    %1135 = vmatpush1.msra.mxu0 0.0
    %1136 = vmatprep.subr.mxu0 0.0
    %1137 = vmatpush1.msra.mxu0 0.0
    %1138 = vmatprep.subr.mxu0 0.0
    %1139 = vmatpush1.msra.mxu0 0.0
    %1140 = vmatprep.subr.mxu0 0.0
    %1141 = vmatpush1.msra.mxu0 0.0
    %1142 = vmatprep.subr.mxu0 0.0
    %1143 = vmatpush1.msra.mxu0 0.0
    %1144 = vmatprep.subr.mxu0 0.0
    %1145 = vmatpush1.msra.mxu0 0.0
    %1146 = vmatprep.subr.mxu0 0.0
    %1147 = vmatpush1.msra.mxu0 0.0
    %1148 = vmatprep.subr.mxu0 0.0
    %1149 = vmatpush1.msra.mxu0 0.0
    %1150 = vmatprep.subr.mxu0 0.0
    %1151 = vmatpush1.msra.mxu0 0.0
    %1152 = vmatprep.subr.mxu0 0.0
    %1153 = vmatpush1.msra.mxu0 0.0
    %1154 = vmatprep.subr.mxu0 0.0
    %1155 = vmatpush1.msra.mxu0 0.0
    %1156 = vmatprep.subr.mxu0 0.0
    %1157 = vmatpush1.msra.mxu0 0.0
    %1158 = vmatprep.subr.mxu0 0.0
    %1159 = vmatpush1.msra.mxu0 0.0
    %1160 = vmatprep.subr.mxu0 0.0
    %1161 = vmatpush1.msra.mxu0 0.0
    %1162 = vmatprep.subr.mxu0 0.0
    %1163 = vmatpush1.msra.mxu0 0.0
    %1164 = vmatprep.mubr.f32.mxu0 0.0
    %1165 = vmatmul.mubr.f32.gmra.mrb[0].mxu0 %v1021
    %v1166 = vpop.f32.mrb[0].mxu0
    %v1167 = vadd.f32 0.0, %v1166
    %v1168 = vpop.f32.mrb[0].mxu0
    %v1169 = vadd.f32 0.0, %v1168
    %1170 = vdwg.mxu0
    %v1171 = vadd.f32 %v1025, %v1096
    %v1172 = vadd.f32 %v1026, %v1098
    %v1173 = vadd.f32 %v1027, %v1167
    %v1174 = vadd.f32 %v1028, %v1169
    %v1175 = vxor.u32 %v1171, 2147483648
    %v1176 = vmul.f32 %v1175, 1.442695
    %v1177 = vpow.pop %v1176
    %v1178 = vadd.f32 %v1177, 1.0
    %v1179 = vrcp.pop %v1178
    %v1180 = vmul.f32 1.0, %v1179
    %v1181 = vxor.u32 %v1172, 2147483648
    %v1182 = vmul.f32 %v1181, 1.442695
    %v1183 = vpow.pop %v1182
    %v1184 = vadd.f32 %v1183, 1.0
    %v1185 = vrcp.pop %v1184
    %v1186 = vmul.f32 1.0, %v1185
    %v1187 = vtanh.pop %v1173
    %v1188 = vxor.u32 %v1174, 2147483648
    %v1189 = vmul.f32 %v1188, 1.442695
    %v1190 = vpow.pop %v1189
    %v1191 = vadd.f32 %v1190, 1.0
    %v1192 = vrcp.pop %v1191
    %v1193 = vmul.f32 1.0, %v1192
    %v1194 = vmul.f32 %v1186, %v1019
    %v1195 = vmul.f32 %v1180, %v1187
    %v1196 = vadd.f32 %v1194, %v1195
    %v1197 = vtanh.pop %v1196
    %v1198 = vmul.f32 %v1193, %v1197
    %s1199 = scalar_lea.vmem [#allocation13], 24
    %1200 = vst [vmem:[%s1199] sm:$0xff] %v1198
    %s1201 = scalar_lea.vmem [#allocation4], 128
    %v1202 = vld [vmem:[%s1201] sm:$0xff]
    %v1203 = vld [vmem:[%s1201 + $0x8] sm:$0xff]
    %v1204 = vld [vmem:[%s1201 + $0x10] sm:$0xff]
    %v1205 = vld [vmem:[%s1201 + $0x18] sm:$0xff]
    %1206 = vmatprep.subr.mxu0 %v430
    %1207 = vmatpush1.msra.mxu0 %v429
    %1208 = vmatprep.subr.mxu0 %v434
    %1209 = vmatpush1.msra.mxu0 %v433
    %1210 = vmatprep.subr.mxu0 %v438
    %1211 = vmatpush1.msra.mxu0 %v437
    %1212 = vmatprep.subr.mxu0 %v442
    %1213 = vmatpush1.msra.mxu0 %v441
    %1214 = vmatprep.subr.mxu0 %v446
    %1215 = vmatpush1.msra.mxu0 %v445
    %1216 = vmatprep.subr.mxu0 %v450
    %1217 = vmatpush1.msra.mxu0 %v449
    %1218 = vmatprep.subr.mxu0 %v454
    %1219 = vmatpush1.msra.mxu0 %v453
    %1220 = vmatprep.subr.mxu0 %v458
    %1221 = vmatpush1.msra.mxu0 %v457
    %1222 = vmatprep.subr.mxu0 %v462
    %1223 = vmatpush1.msra.mxu0 %v461
    %1224 = vmatprep.subr.mxu0 %v466
    %1225 = vmatpush1.msra.mxu0 %v465
    %1226 = vmatprep.subr.mxu0 %v470
    %1227 = vmatpush1.msra.mxu0 %v469
    %1228 = vmatprep.subr.mxu0 %v474
    %1229 = vmatpush1.msra.mxu0 %v473
    %1230 = vmatprep.subr.mxu0 %v478
    %1231 = vmatpush1.msra.mxu0 %v477
    %1232 = vmatprep.subr.mxu0 %v482
    %1233 = vmatpush1.msra.mxu0 %v481
    %1234 = vmatprep.subr.mxu0 %v486
    %1235 = vmatpush1.msra.mxu0 %v485
    %1236 = vmatprep.subr.mxu0 %v490
    %1237 = vmatpush1.msra.mxu0 %v489
    %1238 = vmatprep.subr.mxu0 0.0
    %1239 = vmatpush1.msra.mxu0 0.0
    %1240 = vmatprep.subr.mxu0 0.0
    %1241 = vmatpush1.msra.mxu0 0.0
    %1242 = vmatprep.subr.mxu0 0.0
    %1243 = vmatpush1.msra.mxu0 0.0
    %1244 = vmatprep.subr.mxu0 0.0
    %1245 = vmatpush1.msra.mxu0 0.0
    %1246 = vmatprep.subr.mxu0 0.0
    %1247 = vmatpush1.msra.mxu0 0.0
    %1248 = vmatprep.subr.mxu0 0.0
    %1249 = vmatpush1.msra.mxu0 0.0
    %1250 = vmatprep.subr.mxu0 0.0
    %1251 = vmatpush1.msra.mxu0 0.0
    %1252 = vmatprep.subr.mxu0 0.0
    %1253 = vmatpush1.msra.mxu0 0.0
    %1254 = vmatprep.subr.mxu0 0.0
    %1255 = vmatpush1.msra.mxu0 0.0
    %1256 = vmatprep.subr.mxu0 0.0
    %1257 = vmatpush1.msra.mxu0 0.0
    %1258 = vmatprep.subr.mxu0 0.0
    %1259 = vmatpush1.msra.mxu0 0.0
    %1260 = vmatprep.subr.mxu0 0.0
    %1261 = vmatpush1.msra.mxu0 0.0
    %1262 = vmatprep.subr.mxu0 0.0
    %1263 = vmatpush1.msra.mxu0 0.0
    %1264 = vmatprep.subr.mxu0 0.0
    %1265 = vmatpush1.msra.mxu0 0.0
    %1266 = vmatprep.subr.mxu0 0.0
    %1267 = vmatpush1.msra.mxu0 0.0
    %1268 = vmatprep.subr.mxu0 0.0
    %1269 = vmatpush1.msra.mxu0 0.0
    %1270 = vmatprep.mubr.f32.mxu0 0.0
    %1271 = vmatmul.mubr.f32.gmra.mrb[0].mxu0 %v1198
    %v1272 = vpop.f32.mrb[0].mxu0
    %v1273 = vadd.f32 0.0, %v1272
    %v1274 = vpop.f32.mrb[0].mxu0
    %v1275 = vadd.f32 0.0, %v1274
    %1276 = vdwg.mxu0
    %1277 = vmatprep.subr.mxu0 %v432
    %1278 = vmatpush1.msra.mxu0 %v431
    %1279 = vmatprep.subr.mxu0 %v436
    %1280 = vmatpush1.msra.mxu0 %v435
    %1281 = vmatprep.subr.mxu0 %v440
    %1282 = vmatpush1.msra.mxu0 %v439
    %1283 = vmatprep.subr.mxu0 %v444
    %1284 = vmatpush1.msra.mxu0 %v443
    %1285 = vmatprep.subr.mxu0 %v448
    %1286 = vmatpush1.msra.mxu0 %v447
    %1287 = vmatprep.subr.mxu0 %v452
    %1288 = vmatpush1.msra.mxu0 %v451
    %1289 = vmatprep.subr.mxu0 %v456
    %1290 = vmatpush1.msra.mxu0 %v455
    %1291 = vmatprep.subr.mxu0 %v460
    %1292 = vmatpush1.msra.mxu0 %v459
    %1293 = vmatprep.subr.mxu0 %v464
    %1294 = vmatpush1.msra.mxu0 %v463
    %1295 = vmatprep.subr.mxu0 %v468
    %1296 = vmatpush1.msra.mxu0 %v467
    %1297 = vmatprep.subr.mxu0 %v472
    %1298 = vmatpush1.msra.mxu0 %v471
    %1299 = vmatprep.subr.mxu0 %v476
    %1300 = vmatpush1.msra.mxu0 %v475
    %1301 = vmatprep.subr.mxu0 %v480
    %1302 = vmatpush1.msra.mxu0 %v479
    %1303 = vmatprep.subr.mxu0 %v484
    %1304 = vmatpush1.msra.mxu0 %v483
    %1305 = vmatprep.subr.mxu0 %v488
    %1306 = vmatpush1.msra.mxu0 %v487
    %1307 = vmatprep.subr.mxu0 %v492
    %1308 = vmatpush1.msra.mxu0 %v491
    %1309 = vmatprep.subr.mxu0 0.0
    %1310 = vmatpush1.msra.mxu0 0.0
    %1311 = vmatprep.subr.mxu0 0.0
    %1312 = vmatpush1.msra.mxu0 0.0
    %1313 = vmatprep.subr.mxu0 0.0
    %1314 = vmatpush1.msra.mxu0 0.0
    %1315 = vmatprep.subr.mxu0 0.0
    %1316 = vmatpush1.msra.mxu0 0.0
    %1317 = vmatprep.subr.mxu0 0.0
    %1318 = vmatpush1.msra.mxu0 0.0
    %1319 = vmatprep.subr.mxu0 0.0
    %1320 = vmatpush1.msra.mxu0 0.0
    %1321 = vmatprep.subr.mxu0 0.0
    %1322 = vmatpush1.msra.mxu0 0.0
    %1323 = vmatprep.subr.mxu0 0.0
    %1324 = vmatpush1.msra.mxu0 0.0
    %1325 = vmatprep.subr.mxu0 0.0
    %1326 = vmatpush1.msra.mxu0 0.0
    %1327 = vmatprep.subr.mxu0 0.0
    %1328 = vmatpush1.msra.mxu0 0.0
    %1329 = vmatprep.subr.mxu0 0.0
    %1330 = vmatpush1.msra.mxu0 0.0
    %1331 = vmatprep.subr.mxu0 0.0
    %1332 = vmatpush1.msra.mxu0 0.0
    %1333 = vmatprep.subr.mxu0 0.0
    %1334 = vmatpush1.msra.mxu0 0.0
    %1335 = vmatprep.subr.mxu0 0.0
    %1336 = vmatpush1.msra.mxu0 0.0
    %1337 = vmatprep.subr.mxu0 0.0
    %1338 = vmatpush1.msra.mxu0 0.0
    %1339 = vmatprep.subr.mxu0 0.0
    %1340 = vmatpush1.msra.mxu0 0.0
    %1341 = vmatprep.mubr.f32.mxu0 0.0
    %1342 = vmatmul.mubr.f32.gmra.mrb[0].mxu0 %v1198
    %v1343 = vpop.f32.mrb[0].mxu0
    %v1344 = vadd.f32 0.0, %v1343
    %v1345 = vpop.f32.mrb[0].mxu0
    %v1346 = vadd.f32 0.0, %v1345
    %1347 = vdwg.mxu0
    %v1348 = vadd.f32 %v1202, %v1273
    %v1349 = vadd.f32 %v1203, %v1275
    %v1350 = vadd.f32 %v1204, %v1344
    %v1351 = vadd.f32 %v1205, %v1346
    %v1352 = vxor.u32 %v1348, 2147483648
    %v1353 = vmul.f32 %v1352, 1.442695
    %v1354 = vpow.pop %v1353
    %v1355 = vadd.f32 %v1354, 1.0
    %v1356 = vrcp.pop %v1355
    %v1357 = vmul.f32 1.0, %v1356
    %v1358 = vxor.u32 %v1349, 2147483648
    %v1359 = vmul.f32 %v1358, 1.442695
    %v1360 = vpow.pop %v1359
    %v1361 = vadd.f32 %v1360, 1.0
    %v1362 = vrcp.pop %v1361
    %v1363 = vmul.f32 1.0, %v1362
    %v1364 = vtanh.pop %v1350
    %v1365 = vxor.u32 %v1351, 2147483648
    %v1366 = vmul.f32 %v1365, 1.442695
    %v1367 = vpow.pop %v1366
    %v1368 = vadd.f32 %v1367, 1.0
    %v1369 = vrcp.pop %v1368
    %v1370 = vmul.f32 1.0, %v1369
    %v1371 = vmul.f32 %v1363, %v1196
    %v1372 = vmul.f32 %v1357, %v1364
    %v1373 = vadd.f32 %v1371, %v1372
    %v1374 = vtanh.pop %v1373
    %v1375 = vmul.f32 %v1370, %v1374
    %s1376 = scalar_lea.vmem [#allocation13], 32
    %1377 = vst [vmem:[%s1376] sm:$0xff] %v1375
    %s1378 = scalar_lea.vmem [#allocation4], 160
    %v1379 = vld [vmem:[%s1378] sm:$0xff]
    %v1380 = vld [vmem:[%s1378 + $0x8] sm:$0xff]
    %v1381 = vld [vmem:[%s1378 + $0x10] sm:$0xff]
    %v1382 = vld [vmem:[%s1378 + $0x18] sm:$0xff]
    %1383 = vmatprep.subr.mxu0 %v430
    %1384 = vmatpush1.msra.mxu0 %v429
    %1385 = vmatprep.subr.mxu0 %v434
    %1386 = vmatpush1.msra.mxu0 %v433
    %1387 = vmatprep.subr.mxu0 %v438
    %1388 = vmatpush1.msra.mxu0 %v437
    %1389 = vmatprep.subr.mxu0 %v442
    %1390 = vmatpush1.msra.mxu0 %v441
    %1391 = vmatprep.subr.mxu0 %v446
    %1392 = vmatpush1.msra.mxu0 %v445
    %1393 = vmatprep.subr.mxu0 %v450
    %1394 = vmatpush1.msra.mxu0 %v449
    %1395 = vmatprep.subr.mxu0 %v454
    %1396 = vmatpush1.msra.mxu0 %v453
    %1397 = vmatprep.subr.mxu0 %v458
    %1398 = vmatpush1.msra.mxu0 %v457
    %1399 = vmatprep.subr.mxu0 %v462
    %1400 = vmatpush1.msra.mxu0 %v461
    %1401 = vmatprep.subr.mxu0 %v466
    %1402 = vmatpush1.msra.mxu0 %v465
    %1403 = vmatprep.subr.mxu0 %v470
    %1404 = vmatpush1.msra.mxu0 %v469
    %1405 = vmatprep.subr.mxu0 %v474
    %1406 = vmatpush1.msra.mxu0 %v473
    %1407 = vmatprep.subr.mxu0 %v478
    %1408 = vmatpush1.msra.mxu0 %v477
    %1409 = vmatprep.subr.mxu0 %v482
    %1410 = vmatpush1.msra.mxu0 %v481
    %1411 = vmatprep.subr.mxu0 %v486
    %1412 = vmatpush1.msra.mxu0 %v485
    %1413 = vmatprep.subr.mxu0 %v490
    %1414 = vmatpush1.msra.mxu0 %v489
    %1415 = vmatprep.subr.mxu0 0.0
    %1416 = vmatpush1.msra.mxu0 0.0
    %1417 = vmatprep.subr.mxu0 0.0
    %1418 = vmatpush1.msra.mxu0 0.0
    %1419 = vmatprep.subr.mxu0 0.0
    %1420 = vmatpush1.msra.mxu0 0.0
    %1421 = vmatprep.subr.mxu0 0.0
    %1422 = vmatpush1.msra.mxu0 0.0
    %1423 = vmatprep.subr.mxu0 0.0
    %1424 = vmatpush1.msra.mxu0 0.0
    %1425 = vmatprep.subr.mxu0 0.0
    %1426 = vmatpush1.msra.mxu0 0.0
    %1427 = vmatprep.subr.mxu0 0.0
    %1428 = vmatpush1.msra.mxu0 0.0
    %1429 = vmatprep.subr.mxu0 0.0
    %1430 = vmatpush1.msra.mxu0 0.0
    %1431 = vmatprep.subr.mxu0 0.0
    %1432 = vmatpush1.msra.mxu0 0.0
    %1433 = vmatprep.subr.mxu0 0.0
    %1434 = vmatpush1.msra.mxu0 0.0
    %1435 = vmatprep.subr.mxu0 0.0
    %1436 = vmatpush1.msra.mxu0 0.0
    %1437 = vmatprep.subr.mxu0 0.0
    %1438 = vmatpush1.msra.mxu0 0.0
    %1439 = vmatprep.subr.mxu0 0.0
    %1440 = vmatpush1.msra.mxu0 0.0
    %1441 = vmatprep.subr.mxu0 0.0
    %1442 = vmatpush1.msra.mxu0 0.0
    %1443 = vmatprep.subr.mxu0 0.0
    %1444 = vmatpush1.msra.mxu0 0.0
    %1445 = vmatprep.subr.mxu0 0.0
    %1446 = vmatpush1.msra.mxu0 0.0
    %1447 = vmatprep.mubr.f32.mxu0 0.0
    %1448 = vmatmul.mubr.f32.gmra.mrb[0].mxu0 %v1375
    %v1449 = vpop.f32.mrb[0].mxu0
    %v1450 = vadd.f32 0.0, %v1449
    %v1451 = vpop.f32.mrb[0].mxu0
    %v1452 = vadd.f32 0.0, %v1451
    %1453 = vdwg.mxu0
    %1454 = vmatprep.subr.mxu0 %v432
    %1455 = vmatpush1.msra.mxu0 %v431
    %1456 = vmatprep.subr.mxu0 %v436
    %1457 = vmatpush1.msra.mxu0 %v435
    %1458 = vmatprep.subr.mxu0 %v440
    %1459 = vmatpush1.msra.mxu0 %v439
    %1460 = vmatprep.subr.mxu0 %v444
    %1461 = vmatpush1.msra.mxu0 %v443
    %1462 = vmatprep.subr.mxu0 %v448
    %1463 = vmatpush1.msra.mxu0 %v447
    %1464 = vmatprep.subr.mxu0 %v452
    %1465 = vmatpush1.msra.mxu0 %v451
    %1466 = vmatprep.subr.mxu0 %v456
    %1467 = vmatpush1.msra.mxu0 %v455
    %1468 = vmatprep.subr.mxu0 %v460
    %1469 = vmatpush1.msra.mxu0 %v459
    %1470 = vmatprep.subr.mxu0 %v464
    %1471 = vmatpush1.msra.mxu0 %v463
    %1472 = vmatprep.subr.mxu0 %v468
    %1473 = vmatpush1.msra.mxu0 %v467
    %1474 = vmatprep.subr.mxu0 %v472
    %1475 = vmatpush1.msra.mxu0 %v471
    %1476 = vmatprep.subr.mxu0 %v476
    %1477 = vmatpush1.msra.mxu0 %v475
    %1478 = vmatprep.subr.mxu0 %v480
    %1479 = vmatpush1.msra.mxu0 %v479
    %1480 = vmatprep.subr.mxu0 %v484
    %1481 = vmatpush1.msra.mxu0 %v483
    %1482 = vmatprep.subr.mxu0 %v488
    %1483 = vmatpush1.msra.mxu0 %v487
    %1484 = vmatprep.subr.mxu0 %v492
    %1485 = vmatpush1.msra.mxu0 %v491
    %1486 = vmatprep.subr.mxu0 0.0
    %1487 = vmatpush1.msra.mxu0 0.0
    %1488 = vmatprep.subr.mxu0 0.0
    %1489 = vmatpush1.msra.mxu0 0.0
    %1490 = vmatprep.subr.mxu0 0.0
    %1491 = vmatpush1.msra.mxu0 0.0
    %1492 = vmatprep.subr.mxu0 0.0
    %1493 = vmatpush1.msra.mxu0 0.0
    %1494 = vmatprep.subr.mxu0 0.0
    %1495 = vmatpush1.msra.mxu0 0.0
    %1496 = vmatprep.subr.mxu0 0.0
    %1497 = vmatpush1.msra.mxu0 0.0
    %1498 = vmatprep.subr.mxu0 0.0
    %1499 = vmatpush1.msra.mxu0 0.0
    %1500 = vmatprep.subr.mxu0 0.0
    %1501 = vmatpush1.msra.mxu0 0.0
    %1502 = vmatprep.subr.mxu0 0.0
    %1503 = vmatpush1.msra.mxu0 0.0
    %1504 = vmatprep.subr.mxu0 0.0
    %1505 = vmatpush1.msra.mxu0 0.0
    %1506 = vmatprep.subr.mxu0 0.0
    %1507 = vmatpush1.msra.mxu0 0.0
    %1508 = vmatprep.subr.mxu0 0.0
    %1509 = vmatpush1.msra.mxu0 0.0
    %1510 = vmatprep.subr.mxu0 0.0
    %1511 = vmatpush1.msra.mxu0 0.0
    %1512 = vmatprep.subr.mxu0 0.0
    %1513 = vmatpush1.msra.mxu0 0.0
    %1514 = vmatprep.subr.mxu0 0.0
    %1515 = vmatpush1.msra.mxu0 0.0
    %1516 = vmatprep.subr.mxu0 0.0
    %1517 = vmatpush1.msra.mxu0 0.0
    %1518 = vmatprep.mubr.f32.mxu0 0.0
    %1519 = vmatmul.mubr.f32.gmra.mrb[0].mxu0 %v1375
    %v1520 = vpop.f32.mrb[0].mxu0
    %v1521 = vadd.f32 0.0, %v1520
    %v1522 = vpop.f32.mrb[0].mxu0
    %v1523 = vadd.f32 0.0, %v1522
    %1524 = vdwg.mxu0
    %v1525 = vadd.f32 %v1379, %v1450
    %v1526 = vadd.f32 %v1380, %v1452
    %v1527 = vadd.f32 %v1381, %v1521
    %v1528 = vadd.f32 %v1382, %v1523
    %v1529 = vxor.u32 %v1525, 2147483648
    %v1530 = vmul.f32 %v1529, 1.442695
    %v1531 = vpow.pop %v1530
    %v1532 = vadd.f32 %v1531, 1.0
    %v1533 = vrcp.pop %v1532
    %v1534 = vmul.f32 1.0, %v1533
    %v1535 = vxor.u32 %v1526, 2147483648
    %v1536 = vmul.f32 %v1535, 1.442695
    %v1537 = vpow.pop %v1536
    %v1538 = vadd.f32 %v1537, 1.0
    %v1539 = vrcp.pop %v1538
    %v1540 = vmul.f32 1.0, %v1539
    %v1541 = vtanh.pop %v1527
    %v1542 = vxor.u32 %v1528, 2147483648
    %v1543 = vmul.f32 %v1542, 1.442695
    %v1544 = vpow.pop %v1543
    %v1545 = vadd.f32 %v1544, 1.0
    %v1546 = vrcp.pop %v1545
    %v1547 = vmul.f32 1.0, %v1546
    %v1548 = vmul.f32 %v1540, %v1373
    %v1549 = vmul.f32 %v1534, %v1541
    %v1550 = vadd.f32 %v1548, %v1549
    %v1551 = vtanh.pop %v1550
    %v1552 = vmul.f32 %v1547, %v1551
    %s1553 = scalar_lea.vmem [#allocation13], 40
    %1554 = vst [vmem:[%s1553] sm:$0xff] %v1552
    %s1555 = scalar_lea.vmem [#allocation4], 192
    %v1556 = vld [vmem:[%s1555] sm:$0xff]
    %v1557 = vld [vmem:[%s1555 + $0x8] sm:$0xff]
    %v1558 = vld [vmem:[%s1555 + $0x10] sm:$0xff]
    %v1559 = vld [vmem:[%s1555 + $0x18] sm:$0xff]
    %1560 = vmatprep.subr.mxu0 %v430
    %1561 = vmatpush1.msra.mxu0 %v429
    %1562 = vmatprep.subr.mxu0 %v434
    %1563 = vmatpush1.msra.mxu0 %v433
    %1564 = vmatprep.subr.mxu0 %v438
    %1565 = vmatpush1.msra.mxu0 %v437
    %1566 = vmatprep.subr.mxu0 %v442
    %1567 = vmatpush1.msra.mxu0 %v441
    %1568 = vmatprep.subr.mxu0 %v446
    %1569 = vmatpush1.msra.mxu0 %v445
    %1570 = vmatprep.subr.mxu0 %v450
    %1571 = vmatpush1.msra.mxu0 %v449
    %1572 = vmatprep.subr.mxu0 %v454
    %1573 = vmatpush1.msra.mxu0 %v453
    %1574 = vmatprep.subr.mxu0 %v458
    %1575 = vmatpush1.msra.mxu0 %v457
    %1576 = vmatprep.subr.mxu0 %v462
    %1577 = vmatpush1.msra.mxu0 %v461
    %1578 = vmatprep.subr.mxu0 %v466
    %1579 = vmatpush1.msra.mxu0 %v465
    %1580 = vmatprep.subr.mxu0 %v470
    %1581 = vmatpush1.msra.mxu0 %v469
    %1582 = vmatprep.subr.mxu0 %v474
    %1583 = vmatpush1.msra.mxu0 %v473
    %1584 = vmatprep.subr.mxu0 %v478
    %1585 = vmatpush1.msra.mxu0 %v477
    %1586 = vmatprep.subr.mxu0 %v482
    %1587 = vmatpush1.msra.mxu0 %v481
    %1588 = vmatprep.subr.mxu0 %v486
    %1589 = vmatpush1.msra.mxu0 %v485
    %1590 = vmatprep.subr.mxu0 %v490
    %1591 = vmatpush1.msra.mxu0 %v489
    %1592 = vmatprep.subr.mxu0 0.0
    %1593 = vmatpush1.msra.mxu0 0.0
    %1594 = vmatprep.subr.mxu0 0.0
    %1595 = vmatpush1.msra.mxu0 0.0
    %1596 = vmatprep.subr.mxu0 0.0
    %1597 = vmatpush1.msra.mxu0 0.0
    %1598 = vmatprep.subr.mxu0 0.0
    %1599 = vmatpush1.msra.mxu0 0.0
    %1600 = vmatprep.subr.mxu0 0.0
    %1601 = vmatpush1.msra.mxu0 0.0
    %1602 = vmatprep.subr.mxu0 0.0
    %1603 = vmatpush1.msra.mxu0 0.0
    %1604 = vmatprep.subr.mxu0 0.0
    %1605 = vmatpush1.msra.mxu0 0.0
    %1606 = vmatprep.subr.mxu0 0.0
    %1607 = vmatpush1.msra.mxu0 0.0
    %1608 = vmatprep.subr.mxu0 0.0
    %1609 = vmatpush1.msra.mxu0 0.0
    %1610 = vmatprep.subr.mxu0 0.0
    %1611 = vmatpush1.msra.mxu0 0.0
    %1612 = vmatprep.subr.mxu0 0.0
    %1613 = vmatpush1.msra.mxu0 0.0
    %1614 = vmatprep.subr.mxu0 0.0
    %1615 = vmatpush1.msra.mxu0 0.0
    %1616 = vmatprep.subr.mxu0 0.0
    %1617 = vmatpush1.msra.mxu0 0.0
    %1618 = vmatprep.subr.mxu0 0.0
    %1619 = vmatpush1.msra.mxu0 0.0
    %1620 = vmatprep.subr.mxu0 0.0
    %1621 = vmatpush1.msra.mxu0 0.0
    %1622 = vmatprep.subr.mxu0 0.0
    %1623 = vmatpush1.msra.mxu0 0.0
    %1624 = vmatprep.mubr.f32.mxu0 0.0
    %1625 = vmatmul.mubr.f32.gmra.mrb[0].mxu0 %v1552
    %v1626 = vpop.f32.mrb[0].mxu0
    %v1627 = vadd.f32 0.0, %v1626
    %v1628 = vpop.f32.mrb[0].mxu0
    %v1629 = vadd.f32 0.0, %v1628
    %1630 = vdwg.mxu0
    %1631 = vmatprep.subr.mxu0 %v432
    %1632 = vmatpush1.msra.mxu0 %v431
    %1633 = vmatprep.subr.mxu0 %v436
    %1634 = vmatpush1.msra.mxu0 %v435
    %1635 = vmatprep.subr.mxu0 %v440
    %1636 = vmatpush1.msra.mxu0 %v439
    %1637 = vmatprep.subr.mxu0 %v444
    %1638 = vmatpush1.msra.mxu0 %v443
    %1639 = vmatprep.subr.mxu0 %v448
    %1640 = vmatpush1.msra.mxu0 %v447
    %1641 = vmatprep.subr.mxu0 %v452
    %1642 = vmatpush1.msra.mxu0 %v451
    %1643 = vmatprep.subr.mxu0 %v456
    %1644 = vmatpush1.msra.mxu0 %v455
    %1645 = vmatprep.subr.mxu0 %v460
    %1646 = vmatpush1.msra.mxu0 %v459
    %1647 = vmatprep.subr.mxu0 %v464
    %1648 = vmatpush1.msra.mxu0 %v463
    %1649 = vmatprep.subr.mxu0 %v468
    %1650 = vmatpush1.msra.mxu0 %v467
    %1651 = vmatprep.subr.mxu0 %v472
    %1652 = vmatpush1.msra.mxu0 %v471
    %1653 = vmatprep.subr.mxu0 %v476
    %1654 = vmatpush1.msra.mxu0 %v475
    %1655 = vmatprep.subr.mxu0 %v480
    %1656 = vmatpush1.msra.mxu0 %v479
    %1657 = vmatprep.subr.mxu0 %v484
    %1658 = vmatpush1.msra.mxu0 %v483
    %1659 = vmatprep.subr.mxu0 %v488
    %1660 = vmatpush1.msra.mxu0 %v487
    %1661 = vmatprep.subr.mxu0 %v492
    %1662 = vmatpush1.msra.mxu0 %v491
    %1663 = vmatprep.subr.mxu0 0.0
    %1664 = vmatpush1.msra.mxu0 0.0
    %1665 = vmatprep.subr.mxu0 0.0
    %1666 = vmatpush1.msra.mxu0 0.0
    %1667 = vmatprep.subr.mxu0 0.0
    %1668 = vmatpush1.msra.mxu0 0.0
    %1669 = vmatprep.subr.mxu0 0.0
    %1670 = vmatpush1.msra.mxu0 0.0
    %1671 = vmatprep.subr.mxu0 0.0
    %1672 = vmatpush1.msra.mxu0 0.0
    %1673 = vmatprep.subr.mxu0 0.0
    %1674 = vmatpush1.msra.mxu0 0.0
    %1675 = vmatprep.subr.mxu0 0.0
    %1676 = vmatpush1.msra.mxu0 0.0
    %1677 = vmatprep.subr.mxu0 0.0
    %1678 = vmatpush1.msra.mxu0 0.0
    %1679 = vmatprep.subr.mxu0 0.0
    %1680 = vmatpush1.msra.mxu0 0.0
    %1681 = vmatprep.subr.mxu0 0.0
    %1682 = vmatpush1.msra.mxu0 0.0
    %1683 = vmatprep.subr.mxu0 0.0
    %1684 = vmatpush1.msra.mxu0 0.0
    %1685 = vmatprep.subr.mxu0 0.0
    %1686 = vmatpush1.msra.mxu0 0.0
    %1687 = vmatprep.subr.mxu0 0.0
    %1688 = vmatpush1.msra.mxu0 0.0
    %1689 = vmatprep.subr.mxu0 0.0
    %1690 = vmatpush1.msra.mxu0 0.0
    %1691 = vmatprep.subr.mxu0 0.0
    %1692 = vmatpush1.msra.mxu0 0.0
    %1693 = vmatprep.subr.mxu0 0.0
    %1694 = vmatpush1.msra.mxu0 0.0
    %1695 = vmatprep.mubr.f32.mxu0 0.0
    %1696 = vmatmul.mubr.f32.gmra.mrb[0].mxu0 %v1552
    %v1697 = vpop.f32.mrb[0].mxu0
    %v1698 = vadd.f32 0.0, %v1697
    %v1699 = vpop.f32.mrb[0].mxu0
    %v1700 = vadd.f32 0.0, %v1699
    %1701 = vdwg.mxu0
    %v1702 = vadd.f32 %v1556, %v1627
    %v1703 = vadd.f32 %v1557, %v1629
    %v1704 = vadd.f32 %v1558, %v1698
    %v1705 = vadd.f32 %v1559, %v1700
    %v1706 = vxor.u32 %v1702, 2147483648
    %v1707 = vmul.f32 %v1706, 1.442695
    %v1708 = vpow.pop %v1707
    %v1709 = vadd.f32 %v1708, 1.0
    %v1710 = vrcp.pop %v1709
    %v1711 = vmul.f32 1.0, %v1710
    %v1712 = vxor.u32 %v1703, 2147483648
    %v1713 = vmul.f32 %v1712, 1.442695
    %v1714 = vpow.pop %v1713
    %v1715 = vadd.f32 %v1714, 1.0
    %v1716 = vrcp.pop %v1715
    %v1717 = vmul.f32 1.0, %v1716
    %v1718 = vtanh.pop %v1704
    %v1719 = vxor.u32 %v1705, 2147483648
    %v1720 = vmul.f32 %v1719, 1.442695
    %v1721 = vpow.pop %v1720
    %v1722 = vadd.f32 %v1721, 1.0
    %v1723 = vrcp.pop %v1722
    %v1724 = vmul.f32 1.0, %v1723
    %v1725 = vmul.f32 %v1717, %v1550
    %v1726 = vmul.f32 %v1711, %v1718
    %v1727 = vadd.f32 %v1725, %v1726
    %v1728 = vtanh.pop %v1727
    %v1729 = vmul.f32 %v1724, %v1728
    %s1730 = scalar_lea.vmem [#allocation13], 48
    %1731 = vst [vmem:[%s1730] sm:$0xff] %v1729
    %s1732 = scalar_lea.vmem [#allocation4], 224
    %v1733 = vld [vmem:[%s1732] sm:$0xff]
    %v1734 = vld [vmem:[%s1732 + $0x8] sm:$0xff]
    %v1735 = vld [vmem:[%s1732 + $0x10] sm:$0xff]
    %v1736 = vld [vmem:[%s1732 + $0x18] sm:$0xff]
    %1737 = vmatprep.subr.mxu0 %v430
    %1738 = vmatpush1.msra.mxu0 %v429
    %1739 = vmatprep.subr.mxu0 %v434
    %1740 = vmatpush1.msra.mxu0 %v433
    %1741 = vmatprep.subr.mxu0 %v438
    %1742 = vmatpush1.msra.mxu0 %v437
    %1743 = vmatprep.subr.mxu0 %v442
    %1744 = vmatpush1.msra.mxu0 %v441
    %1745 = vmatprep.subr.mxu0 %v446
    %1746 = vmatpush1.msra.mxu0 %v445
    %1747 = vmatprep.subr.mxu0 %v450
    %1748 = vmatpush1.msra.mxu0 %v449
    %1749 = vmatprep.subr.mxu0 %v454
    %1750 = vmatpush1.msra.mxu0 %v453
    %1751 = vmatprep.subr.mxu0 %v458
    %1752 = vmatpush1.msra.mxu0 %v457
    %1753 = vmatprep.subr.mxu0 %v462
    %1754 = vmatpush1.msra.mxu0 %v461
    %1755 = vmatprep.subr.mxu0 %v466
    %1756 = vmatpush1.msra.mxu0 %v465
    %1757 = vmatprep.subr.mxu0 %v470
    %1758 = vmatpush1.msra.mxu0 %v469
    %1759 = vmatprep.subr.mxu0 %v474
    %1760 = vmatpush1.msra.mxu0 %v473
    %1761 = vmatprep.subr.mxu0 %v478
    %1762 = vmatpush1.msra.mxu0 %v477
    %1763 = vmatprep.subr.mxu0 %v482
    %1764 = vmatpush1.msra.mxu0 %v481
    %1765 = vmatprep.subr.mxu0 %v486
    %1766 = vmatpush1.msra.mxu0 %v485
    %1767 = vmatprep.subr.mxu0 %v490
    %1768 = vmatpush1.msra.mxu0 %v489
    %1769 = vmatprep.subr.mxu0 0.0
    %1770 = vmatpush1.msra.mxu0 0.0
    %1771 = vmatprep.subr.mxu0 0.0
    %1772 = vmatpush1.msra.mxu0 0.0
    %1773 = vmatprep.subr.mxu0 0.0
    %1774 = vmatpush1.msra.mxu0 0.0
    %1775 = vmatprep.subr.mxu0 0.0
    %1776 = vmatpush1.msra.mxu0 0.0
    %1777 = vmatprep.subr.mxu0 0.0
    %1778 = vmatpush1.msra.mxu0 0.0
    %1779 = vmatprep.subr.mxu0 0.0
    %1780 = vmatpush1.msra.mxu0 0.0
    %1781 = vmatprep.subr.mxu0 0.0
    %1782 = vmatpush1.msra.mxu0 0.0
    %1783 = vmatprep.subr.mxu0 0.0
    %1784 = vmatpush1.msra.mxu0 0.0
    %1785 = vmatprep.subr.mxu0 0.0
    %1786 = vmatpush1.msra.mxu0 0.0
    %1787 = vmatprep.subr.mxu0 0.0
    %1788 = vmatpush1.msra.mxu0 0.0
    %1789 = vmatprep.subr.mxu0 0.0
    %1790 = vmatpush1.msra.mxu0 0.0
    %1791 = vmatprep.subr.mxu0 0.0
    %1792 = vmatpush1.msra.mxu0 0.0
    %1793 = vmatprep.subr.mxu0 0.0
    %1794 = vmatpush1.msra.mxu0 0.0
    %1795 = vmatprep.subr.mxu0 0.0
    %1796 = vmatpush1.msra.mxu0 0.0
    %1797 = vmatprep.subr.mxu0 0.0
    %1798 = vmatpush1.msra.mxu0 0.0
    %1799 = vmatprep.subr.mxu0 0.0
    %1800 = vmatpush1.msra.mxu0 0.0
    %1801 = vmatprep.mubr.f32.mxu0 0.0
    %1802 = vmatmul.mubr.f32.gmra.mrb[0].mxu0 %v1729
    %v1803 = vpop.f32.mrb[0].mxu0
    %v1804 = vadd.f32 0.0, %v1803
    %v1805 = vpop.f32.mrb[0].mxu0
    %v1806 = vadd.f32 0.0, %v1805
    %1807 = vdwg.mxu0
    %1808 = vmatprep.subr.mxu0 %v432
    %1809 = vmatpush1.msra.mxu0 %v431
    %1810 = vmatprep.subr.mxu0 %v436
    %1811 = vmatpush1.msra.mxu0 %v435
    %1812 = vmatprep.subr.mxu0 %v440
    %1813 = vmatpush1.msra.mxu0 %v439
    %1814 = vmatprep.subr.mxu0 %v444
    %1815 = vmatpush1.msra.mxu0 %v443
    %1816 = vmatprep.subr.mxu0 %v448
    %1817 = vmatpush1.msra.mxu0 %v447
    %1818 = vmatprep.subr.mxu0 %v452
    %1819 = vmatpush1.msra.mxu0 %v451
    %1820 = vmatprep.subr.mxu0 %v456
    %1821 = vmatpush1.msra.mxu0 %v455
    %1822 = vmatprep.subr.mxu0 %v460
    %1823 = vmatpush1.msra.mxu0 %v459
    %1824 = vmatprep.subr.mxu0 %v464
    %1825 = vmatpush1.msra.mxu0 %v463
    %1826 = vmatprep.subr.mxu0 %v468
    %1827 = vmatpush1.msra.mxu0 %v467
    %1828 = vmatprep.subr.mxu0 %v472
    %1829 = vmatpush1.msra.mxu0 %v471
    %1830 = vmatprep.subr.mxu0 %v476
    %1831 = vmatpush1.msra.mxu0 %v475
    %1832 = vmatprep.subr.mxu0 %v480
    %1833 = vmatpush1.msra.mxu0 %v479
    %1834 = vmatprep.subr.mxu0 %v484
    %1835 = vmatpush1.msra.mxu0 %v483
    %1836 = vmatprep.subr.mxu0 %v488
    %1837 = vmatpush1.msra.mxu0 %v487
    %1838 = vmatprep.subr.mxu0 %v492
    %1839 = vmatpush1.msra.mxu0 %v491
    %1840 = vmatprep.subr.mxu0 0.0
    %1841 = vmatpush1.msra.mxu0 0.0
    %1842 = vmatprep.subr.mxu0 0.0
    %1843 = vmatpush1.msra.mxu0 0.0
    %1844 = vmatprep.subr.mxu0 0.0
    %1845 = vmatpush1.msra.mxu0 0.0
    %1846 = vmatprep.subr.mxu0 0.0
    %1847 = vmatpush1.msra.mxu0 0.0
    %1848 = vmatprep.subr.mxu0 0.0
    %1849 = vmatpush1.msra.mxu0 0.0
    %1850 = vmatprep.subr.mxu0 0.0
    %1851 = vmatpush1.msra.mxu0 0.0
    %1852 = vmatprep.subr.mxu0 0.0
    %1853 = vmatpush1.msra.mxu0 0.0
    %1854 = vmatprep.subr.mxu0 0.0
    %1855 = vmatpush1.msra.mxu0 0.0
    %1856 = vmatprep.subr.mxu0 0.0
    %1857 = vmatpush1.msra.mxu0 0.0
    %1858 = vmatprep.subr.mxu0 0.0
    %1859 = vmatpush1.msra.mxu0 0.0
    %1860 = vmatprep.subr.mxu0 0.0
    %1861 = vmatpush1.msra.mxu0 0.0
    %1862 = vmatprep.subr.mxu0 0.0
    %1863 = vmatpush1.msra.mxu0 0.0
    %1864 = vmatprep.subr.mxu0 0.0
    %1865 = vmatpush1.msra.mxu0 0.0
    %1866 = vmatprep.subr.mxu0 0.0
    %1867 = vmatpush1.msra.mxu0 0.0
    %1868 = vmatprep.subr.mxu0 0.0
    %1869 = vmatpush1.msra.mxu0 0.0
    %1870 = vmatprep.subr.mxu0 0.0
    %1871 = vmatpush1.msra.mxu0 0.0
    %1872 = vmatprep.mubr.f32.mxu0 0.0
    %1873 = vmatmul.mubr.f32.gmra.mrb[0].mxu0 %v1729
    %v1874 = vpop.f32.mrb[0].mxu0
    %v1875 = vadd.f32 0.0, %v1874
    %v1876 = vpop.f32.mrb[0].mxu0
    %v1877 = vadd.f32 0.0, %v1876
    %1878 = vdwg.mxu0
    %v1879 = vadd.f32 %v1733, %v1804
    %v1880 = vadd.f32 %v1734, %v1806
    %v1881 = vadd.f32 %v1735, %v1875
    %v1882 = vadd.f32 %v1736, %v1877
    %v1883 = vxor.u32 %v1879, 2147483648
    %v1884 = vmul.f32 %v1883, 1.442695
    %v1885 = vpow.pop %v1884
    %v1886 = vadd.f32 %v1885, 1.0
    %v1887 = vrcp.pop %v1886
    %v1888 = vmul.f32 1.0, %v1887
    %v1889 = vxor.u32 %v1880, 2147483648
    %v1890 = vmul.f32 %v1889, 1.442695
    %v1891 = vpow.pop %v1890
    %v1892 = vadd.f32 %v1891, 1.0
    %v1893 = vrcp.pop %v1892
    %v1894 = vmul.f32 1.0, %v1893
    %v1895 = vtanh.pop %v1881
    %v1896 = vxor.u32 %v1882, 2147483648
    %v1897 = vmul.f32 %v1896, 1.442695
    %v1898 = vpow.pop %v1897
    %v1899 = vadd.f32 %v1898, 1.0
    %v1900 = vrcp.pop %v1899
    %v1901 = vmul.f32 1.0, %v1900
    %v1902 = vmul.f32 %v1894, %v1727
    %v1903 = vmul.f32 %v1888, %v1895
    %v1904 = vadd.f32 %v1902, %v1903
    %v1905 = vtanh.pop %v1904
    %v1906 = vmul.f32 %v1901, %v1905
    %s1907 = scalar_lea.vmem [#allocation13], 56
    %1908 = vst [vmem:[%s1907] sm:$0xff] %v1906
    %1909 = vst [vmem:[#allocation2] sm:$0xff] %v1906
    %1910 = vst [vmem:[#allocation3] sm:$0xff] %v1904
    // Predicated region
    $region38: #{lstm_model_forward.2} parent=1 // pred_check
      _
    $region39: #{lstm_model_forward.2} parent=1 // pred_check_branch
      %1912 = sbr.rel (0) target = $region41
    $region40: #{lstm_model_forward.2} parent=1 // pred_region
      %s1914 = ssub.s32 1024, 1024
      %1915 = vsyncadd [#allocation7], %s1914
      %s1916 = sshll.u32 [#allocation13], 4
      %s1917 = int_to_ptr.vmem [resolvable:$true] %s1916
      %1922 = dma.vmem_to_hbm [thread:$0]  %s1917, 1024, %s4, [#allocation7], 128, 128, 8
    $region41: #{lstm_model_forward.2} parent=1 // pred_fallthru
      _
    // Predicated region
    $region42: #{lstm_model_forward.2} parent=1 // pred_check
      _
    $region43: #{lstm_model_forward.2} parent=1 // pred_check_branch
      %1924 = sbr.rel (0) target = $region45
    $region44: #{lstm_model_forward.2} parent=1 // pred_region
      %1925 = dma.done [#allocation7], 1024
    $region45: #{lstm_model_forward.2} parent=1 // pred_fallthru
      _
    %1926 = vsyncpa [#allocation6], 1
    %1927 = vsyncpa [#allocation9], 1
    %1928 = vsyncpa [#allocation12], 1
    %1929 = vsyncpa [#allocation7], 1

// kernel: lstm_model_forward.3
$region0: #{lstm_model_forward.3}
  #allocation0 [shape = 'u32[]', space=smem, size = 0x4, offset = 0x4, fixed_abs, tag = 'smem constant byte address 0x4 - core index']
  #allocation1 [shape = 'u32[144,128]{1,0:T(1,128)}', space=vmem, size = 0x12000, scoped, tag = 'internal scratch']
  #allocation2 [shape = 'f32[8,128]{1,0:T(8,128)}', space=vmem, size = 0x1000, scoped, tag = 'scratch operand']
  #allocation3 [shape = 'f32[8,128]{1,0:T(8,128)}', space=vmem, size = 0x1000, scoped, tag = 'scratch operand']
  #allocation4 [shape = 'f32[8,8,512]{2,1,0:T(8,128)}', space=vmem, size = 0x20000, scoped, tag = 'scratch operand']
  #allocation5 [shape = 'f32[1,1]{1,0:T(1,128)S(1)}', space=vmem, size = 0x200, scoped, tag = 'scoped memory for lstm_model_forward.3']
  %s0 = inlined_call_operand.hbm [shape: f32[8,8,128], index: 0, kind: input, shape index: {}]
  %s1 = inlined_call_operand.hbm [shape: f32[128,512], index: 1, kind: input, shape index: {}]
  %s2 = inlined_call_operand.hbm [shape: f32[128,512], index: 2, kind: input, shape index: {}]
  %s3 = inlined_call_operand.hbm [shape: f32[1,512], index: 3, kind: input, shape index: {}]
  %s4 = inlined_call_operand.hbm [shape: f32[128,1], index: 4, kind: input, shape index: {}]
  %s5 = inlined_call_operand.<no memory space> [shape: f32[1,1], index: 5, kind: input, shape index: {}]
  %s6 = inlined_call_operand.hbm [shape: f32[8,1], index: 6, kind: output, shape index: {}]
  %s7 = sld [smem:[#allocation0]]
  $region62: #{lstm_model_forward.3} parent=0
    _
  %s9 = ssub.s32 1, %s7
  %s10 = scalar_select 0, %s9, %s7
  %v11 = vstv %s5
  %12 = vst [vmem:[#allocation5] sm:$0x1] %v11
  $region1: #{lstm_model_forward.3} parent=0
    #allocation6 [shape = 'u8[32768]{0}', space=vmem, size = 0x8000, scoped, tag = 'input window, operand 0, single buffered']
    #allocation7 [shape = 's32[1]{0}', space=sflag, size = 0x4, scoped, tag = 'scoped memory for lstm_model_forward.3']
    #allocation8 [shape = 's32[1]{0}', space=sflag, size = 0x4, scoped, tag = 'scoped memory for lstm_model_forward.3']
    #allocation9 [shape = 'u8[262144]{0}', space=vmem, size = 0x40000, scoped, tag = 'input window, operand 1, single buffered']
    #allocation10 [shape = 's32[1]{0}', space=sflag, size = 0x4, scoped, tag = 'scoped memory for lstm_model_forward.3']
    #allocation11 [shape = 'u8[262144]{0}', space=vmem, size = 0x40000, scoped, tag = 'input window, operand 2, single buffered']
    #allocation12 [shape = 'u8[2048]{0}', space=vmem, size = 0x800, scoped, tag = 'input window, operand 3, single buffered']
    #allocation13 [shape = 's32[1]{0}', space=sflag, size = 0x4, scoped, tag = 'scoped memory for lstm_model_forward.3']
    #allocation14 [shape = 'u8[65536]{0}', space=vmem, size = 0x10000, scoped, tag = 'input window, operand 4, single buffered']
    #allocation15 [shape = 'u8[4096]{0}', space=vmem, size = 0x1000, scoped, tag = 'output window, operand 0, single buffered']
    %13 = vsyncpa [#allocation7], 0
    %14 = vsyncpa [#allocation10], 0
    %15 = vsyncpa [#allocation13], 0
    %16 = vsyncpa [#allocation8], 0
    // Predicated region
    $region2: #{lstm_model_forward.3} parent=1 // pred_check
      _
    $region3: #{lstm_model_forward.3} parent=1 // pred_check_branch
      %18 = sbr.rel (0) target = $region5
    $region4: #{lstm_model_forward.3} parent=1 // pred_region
      %s20 = ssub.s32 1024, 1024
      %21 = vsyncadd [#allocation7], %s20
      %s22 = sshll.u32 [#allocation6], 4
      %s23 = int_to_ptr.vmem [resolvable:$true] %s22
      %28 = dma.hbm_to_vmem [thread:$0]  %s0, 1024, %s23, [#allocation7], 128, 128, 8
    $region5: #{lstm_model_forward.3} parent=1 // pred_fallthru
      _
    // Predicated region
    $region6: #{lstm_model_forward.3} parent=1 // pred_check
      _
    $region7: #{lstm_model_forward.3} parent=1 // pred_check_branch
      %30 = sbr.rel (0) target = $region9
    $region8: #{lstm_model_forward.3} parent=1 // pred_region
      %s32 = ssub.s32 8192, 8192
      %33 = vsyncadd [#allocation10], %s32
      %s34 = sshll.u32 [#allocation9], 4
      %s35 = int_to_ptr.vmem [resolvable:$true] %s34
      %40 = dma.hbm_to_vmem [thread:$0]  %s1, 8192, %s35, [#allocation10], 512, 512, 32
    $region9: #{lstm_model_forward.3} parent=1 // pred_fallthru
      _
    // Predicated region
    $region10: #{lstm_model_forward.3} parent=1 // pred_check
      _
    $region11: #{lstm_model_forward.3} parent=1 // pred_check_branch
      %42 = sbr.rel (0) target = $region13
    $region12: #{lstm_model_forward.3} parent=1 // pred_region
      %s44 = ssub.s32 8192, 8192
      %45 = vsyncadd [#allocation10], %s44
      %s46 = sshll.u32 [#allocation11], 4
      %s47 = int_to_ptr.vmem [resolvable:$true] %s46
      %52 = dma.hbm_to_vmem [thread:$0]  %s2, 8192, %s47, [#allocation10], 512, 512, 32
    $region13: #{lstm_model_forward.3} parent=1 // pred_fallthru
      _
    // Predicated region
    $region14: #{lstm_model_forward.3} parent=1 // pred_check
      _
    $region15: #{lstm_model_forward.3} parent=1 // pred_check_branch
      %54 = sbr.rel (0) target = $region17
    $region16: #{lstm_model_forward.3} parent=1 // pred_region
      %s56 = ssub.s32 64, 64
      %57 = vsyncadd [#allocation13], %s56
      %s59 = sshll.u32 [#allocation12], 4
      %s60 = int_to_ptr.vmem [resolvable:$true] %s59
      %62 = dma.hbm_to_vmem [thread:$0]  %s3, 64, %s60, [#allocation13]
    $region17: #{lstm_model_forward.3} parent=1 // pred_fallthru
      _
    // Predicated region
    $region18: #{lstm_model_forward.3} parent=1 // pred_check
      _
    $region19: #{lstm_model_forward.3} parent=1 // pred_check_branch
      %64 = sbr.rel (0) target = $region21
    $region20: #{lstm_model_forward.3} parent=1 // pred_region
      %s66 = ssub.s32 2048, 2048
      %67 = vsyncadd [#allocation13], %s66
      %s68 = sshll.u32 [#allocation14], 4
      %s69 = int_to_ptr.vmem [resolvable:$true] %s68
      %74 = dma.hbm_to_vmem [thread:$0]  %s4, 2048, %s69, [#allocation13], 128, 128, 8
    $region21: #{lstm_model_forward.3} parent=1 // pred_fallthru
      _
    // Predicated region
    $region22: #{lstm_model_forward.3} parent=1 // pred_check
      _
    $region23: #{lstm_model_forward.3} parent=1 // pred_check_branch
      %76 = sbr.rel (0) target = $region25
    $region24: #{lstm_model_forward.3} parent=1 // pred_region
      _
    $region25: #{lstm_model_forward.3} parent=1 // pred_fallthru
      _
    // Predicated region
    $region26: #{lstm_model_forward.3} parent=1 // pred_check
      _
    $region27: #{lstm_model_forward.3} parent=1 // pred_check_branch
      %78 = sbr.rel (0) target = $region29
    $region28: #{lstm_model_forward.3} parent=1 // pred_region
      %79 = dma.done [#allocation7], 1024
    $region29: #{lstm_model_forward.3} parent=1 // pred_fallthru
      _
    // Predicated region
    $region30: #{lstm_model_forward.3} parent=1 // pred_check
      _
    $region31: #{lstm_model_forward.3} parent=1 // pred_check_branch
      %81 = sbr.rel (0) target = $region33
    $region32: #{lstm_model_forward.3} parent=1 // pred_region
      %82 = dma.done [#allocation10], 8192
    $region33: #{lstm_model_forward.3} parent=1 // pred_fallthru
      _
    // Predicated region
    $region34: #{lstm_model_forward.3} parent=1 // pred_check
      _
    $region35: #{lstm_model_forward.3} parent=1 // pred_check_branch
      %84 = sbr.rel (0) target = $region37
    $region36: #{lstm_model_forward.3} parent=1 // pred_region
      %85 = dma.done [#allocation10], 8192
    $region37: #{lstm_model_forward.3} parent=1 // pred_fallthru
      _
    // Predicated region
    $region38: #{lstm_model_forward.3} parent=1 // pred_check
      _
    $region39: #{lstm_model_forward.3} parent=1 // pred_check_branch
      %87 = sbr.rel (0) target = $region41
    $region40: #{lstm_model_forward.3} parent=1 // pred_region
      %88 = dma.done [#allocation13], 64
    $region41: #{lstm_model_forward.3} parent=1 // pred_fallthru
      _
    // Predicated region
    $region42: #{lstm_model_forward.3} parent=1 // pred_check
      _
    $region43: #{lstm_model_forward.3} parent=1 // pred_check_branch
      %90 = sbr.rel (0) target = $region45
    $region44: #{lstm_model_forward.3} parent=1 // pred_region
      %91 = dma.done [#allocation13], 2048
    $region45: #{lstm_model_forward.3} parent=1 // pred_fallthru
      _
    %p92 = scmp.eq.s32.totalorder 0, 0
    // Predicated region
    $region46: #{lstm_model_forward.3} parent=1 // pred_check
      %p93 = pneg %p92
    $region47: #{lstm_model_forward.3} parent=1 // pred_check_branch
      %95 = sbr.rel (%p93) target = $region49
    $region48: #{lstm_model_forward.3} parent=1 // pred_region
      %96 = vst [vmem:[#allocation2] sm:$0xff] 0.0
      %97 = vst [vmem:[#allocation3] sm:$0xff] 0.0
    $region49: #{lstm_model_forward.3} parent=1 // pred_fallthru
      _
    %v98 = vld [vmem:[#allocation6] sm:$0xff]
    %v99 = vld [vmem:[#allocation6 + $0x8] sm:$0xff]
    %v100 = vld [vmem:[#allocation6 + $0x10] sm:$0xff]
    %v101 = vld [vmem:[#allocation6 + $0x18] sm:$0xff]
    %v102 = vld [vmem:[#allocation6 + $0x20] sm:$0xff]
    %v103 = vld [vmem:[#allocation6 + $0x28] sm:$0xff]
    %v104 = vld [vmem:[#allocation6 + $0x30] sm:$0xff]
    %v105 = vld [vmem:[#allocation6 + $0x38] sm:$0xff]
    %v106 = vld [vmem:[#allocation9] sm:$0xff]
    %v107 = vld [vmem:[#allocation9 + $0x8] sm:$0xff]
    %v108 = vld [vmem:[#allocation9 + $0x10] sm:$0xff]
    %v109 = vld [vmem:[#allocation9 + $0x18] sm:$0xff]
    %v110 = vld [vmem:[#allocation9 + $0x20] sm:$0xff]
    %v111 = vld [vmem:[#allocation9 + $0x28] sm:$0xff]
    %v112 = vld [vmem:[#allocation9 + $0x30] sm:$0xff]
    %v113 = vld [vmem:[#allocation9 + $0x38] sm:$0xff]
    %v114 = vld [vmem:[#allocation9 + $0x40] sm:$0xff]
    %v115 = vld [vmem:[#allocation9 + $0x48] sm:$0xff]
    %v116 = vld [vmem:[#allocation9 + $0x50] sm:$0xff]
    %v117 = vld [vmem:[#allocation9 + $0x58] sm:$0xff]
    %v118 = vld [vmem:[#allocation9 + $0x60] sm:$0xff]
    %v119 = vld [vmem:[#allocation9 + $0x68] sm:$0xff]
    %v120 = vld [vmem:[#allocation9 + $0x70] sm:$0xff]
    %v121 = vld [vmem:[#allocation9 + $0x78] sm:$0xff]
    %v122 = vld [vmem:[#allocation9 + $0x80] sm:$0xff]
    %v123 = vld [vmem:[#allocation9 + $0x88] sm:$0xff]
    %v124 = vld [vmem:[#allocation9 + $0x90] sm:$0xff]
    %v125 = vld [vmem:[#allocation9 + $0x98] sm:$0xff]
    %v126 = vld [vmem:[#allocation9 + $0xa0] sm:$0xff]
    %v127 = vld [vmem:[#allocation9 + $0xa8] sm:$0xff]
    %v128 = vld [vmem:[#allocation9 + $0xb0] sm:$0xff]
    %v129 = vld [vmem:[#allocation9 + $0xb8] sm:$0xff]
    %v130 = vld [vmem:[#allocation9 + $0xc0] sm:$0xff]
    %v131 = vld [vmem:[#allocation9 + $0xc8] sm:$0xff]
    %v132 = vld [vmem:[#allocation9 + $0xd0] sm:$0xff]
    %v133 = vld [vmem:[#allocation9 + $0xd8] sm:$0xff]
    %v134 = vld [vmem:[#allocation9 + $0xe0] sm:$0xff]
    %v135 = vld [vmem:[#allocation9 + $0xe8] sm:$0xff]
    %v136 = vld [vmem:[#allocation9 + $0xf0] sm:$0xff]
    %v137 = vld [vmem:[#allocation9 + $0xf8] sm:$0xff]
    %v138 = vld [vmem:[#allocation9 + $0x100] sm:$0xff]
    %v139 = vld [vmem:[#allocation9 + $0x108] sm:$0xff]
    %v140 = vld [vmem:[#allocation9 + $0x110] sm:$0xff]
    %v141 = vld [vmem:[#allocation9 + $0x118] sm:$0xff]
    %v142 = vld [vmem:[#allocation9 + $0x120] sm:$0xff]
    %v143 = vld [vmem:[#allocation9 + $0x128] sm:$0xff]
    %v144 = vld [vmem:[#allocation9 + $0x130] sm:$0xff]
    %v145 = vld [vmem:[#allocation9 + $0x138] sm:$0xff]
    %v146 = vld [vmem:[#allocation9 + $0x140] sm:$0xff]
    %v147 = vld [vmem:[#allocation9 + $0x148] sm:$0xff]
    %v148 = vld [vmem:[#allocation9 + $0x150] sm:$0xff]
    %v149 = vld [vmem:[#allocation9 + $0x158] sm:$0xff]
    %v150 = vld [vmem:[#allocation9 + $0x160] sm:$0xff]
    %v151 = vld [vmem:[#allocation9 + $0x168] sm:$0xff]
    %v152 = vld [vmem:[#allocation9 + $0x170] sm:$0xff]
    %v153 = vld [vmem:[#allocation9 + $0x178] sm:$0xff]
    %v154 = vld [vmem:[#allocation9 + $0x180] sm:$0xff]
    %v155 = vld [vmem:[#allocation9 + $0x188] sm:$0xff]
    %v156 = vld [vmem:[#allocation9 + $0x190] sm:$0xff]
    %v157 = vld [vmem:[#allocation9 + $0x198] sm:$0xff]
    %v158 = vld [vmem:[#allocation9 + $0x1a0] sm:$0xff]
    %v159 = vld [vmem:[#allocation9 + $0x1a8] sm:$0xff]
    %v160 = vld [vmem:[#allocation9 + $0x1b0] sm:$0xff]
    %v161 = vld [vmem:[#allocation9 + $0x1b8] sm:$0xff]
    %v162 = vld [vmem:[#allocation9 + $0x1c0] sm:$0xff]
    %v163 = vld [vmem:[#allocation9 + $0x1c8] sm:$0xff]
    %v164 = vld [vmem:[#allocation9 + $0x1d0] sm:$0xff]
    %v165 = vld [vmem:[#allocation9 + $0x1d8] sm:$0xff]
    %v166 = vld [vmem:[#allocation9 + $0x1e0] sm:$0xff]
    %v167 = vld [vmem:[#allocation9 + $0x1e8] sm:$0xff]
    %v168 = vld [vmem:[#allocation9 + $0x1f0] sm:$0xff]
    %v169 = vld [vmem:[#allocation9 + $0x1f8] sm:$0xff]
    %v170 = vld [vmem:[#allocation12] sm:$0xf]
    %v172 = vlaneseq
    %v173 = vshrl.u32 %v172, 7
    %v174 = vsub.s32 0, %v173
    %v175 = vrot.slane %v170, %v174
    %v176 = vlaneseq
    %v177 = vshrl.u32 %v176, 7
    %v178 = vsub.s32 1, %v177
    %v179 = vrot.slane %v170, %v178
    %v180 = vlaneseq
    %v181 = vshrl.u32 %v180, 7
    %v182 = vsub.s32 2, %v181
    %v183 = vrot.slane %v170, %v182
    %v184 = vlaneseq
    %v185 = vshrl.u32 %v184, 7
    %v186 = vsub.s32 3, %v185
    %v187 = vrot.slane %v170, %v186
    %192 = vmatprep.subr.mxu0 %v107
    %193 = vmatpush1.msra.mxu0 %v106
    %194 = vmatprep.subr.mxu0 %v111
    %195 = vmatpush1.msra.mxu0 %v110
    %196 = vmatprep.subr.mxu0 %v115
    %197 = vmatpush1.msra.mxu0 %v114
    %198 = vmatprep.subr.mxu0 %v119
    %199 = vmatpush1.msra.mxu0 %v118
    %200 = vmatprep.subr.mxu0 %v123
    %201 = vmatpush1.msra.mxu0 %v122
    %202 = vmatprep.subr.mxu0 %v127
    %203 = vmatpush1.msra.mxu0 %v126
    %204 = vmatprep.subr.mxu0 %v131
    %205 = vmatpush1.msra.mxu0 %v130
    %206 = vmatprep.subr.mxu0 %v135
    %207 = vmatpush1.msra.mxu0 %v134
    %208 = vmatprep.subr.mxu0 %v139
    %209 = vmatpush1.msra.mxu0 %v138
    %210 = vmatprep.subr.mxu0 %v143
    %211 = vmatpush1.msra.mxu0 %v142
    %212 = vmatprep.subr.mxu0 %v147
    %213 = vmatpush1.msra.mxu0 %v146
    %214 = vmatprep.subr.mxu0 %v151
    %215 = vmatpush1.msra.mxu0 %v150
    %216 = vmatprep.subr.mxu0 %v155
    %217 = vmatpush1.msra.mxu0 %v154
    %218 = vmatprep.subr.mxu0 %v159
    %219 = vmatpush1.msra.mxu0 %v158
    %220 = vmatprep.subr.mxu0 %v163
    %221 = vmatpush1.msra.mxu0 %v162
    %222 = vmatprep.subr.mxu0 %v167
    %223 = vmatpush1.msra.mxu0 %v166
    %224 = vmatprep.subr.mxu0 0.0
    %225 = vmatpush1.msra.mxu0 0.0
    %226 = vmatprep.subr.mxu0 0.0
    %227 = vmatpush1.msra.mxu0 0.0
    %228 = vmatprep.subr.mxu0 0.0
    %229 = vmatpush1.msra.mxu0 0.0
    %230 = vmatprep.subr.mxu0 0.0
    %231 = vmatpush1.msra.mxu0 0.0
    %232 = vmatprep.subr.mxu0 0.0
    %233 = vmatpush1.msra.mxu0 0.0
    %234 = vmatprep.subr.mxu0 0.0
    %235 = vmatpush1.msra.mxu0 0.0
    %236 = vmatprep.subr.mxu0 0.0
    %237 = vmatpush1.msra.mxu0 0.0
    %238 = vmatprep.subr.mxu0 0.0
    %239 = vmatpush1.msra.mxu0 0.0
    %240 = vmatprep.subr.mxu0 0.0
    %241 = vmatpush1.msra.mxu0 0.0
    %242 = vmatprep.subr.mxu0 0.0
    %243 = vmatpush1.msra.mxu0 0.0
    %244 = vmatprep.subr.mxu0 0.0
    %245 = vmatpush1.msra.mxu0 0.0
    %246 = vmatprep.subr.mxu0 0.0
    %247 = vmatpush1.msra.mxu0 0.0
    %248 = vmatprep.subr.mxu0 0.0
    %249 = vmatpush1.msra.mxu0 0.0
    %250 = vmatprep.subr.mxu0 0.0
    %251 = vmatpush1.msra.mxu0 0.0
    %252 = vmatprep.subr.mxu0 0.0
    %253 = vmatpush1.msra.mxu0 0.0
    %254 = vmatprep.subr.mxu0 0.0
    %255 = vmatpush1.msra.mxu0 0.0
    %256 = vmatprep.mubr.f32.mxu0 0.0
    %257 = vmatmul.mubr.f32.gmra.mrb[0].mxu0 %v98
    %v258 = vpop.f32.mrb[0].mxu0
    %v259 = vadd.f32 %v175, %v258
    %v260 = vpop.f32.mrb[0].mxu0
    %v261 = vadd.f32 %v179, %v260
    %262 = vmatprep.mubr.f32.mxu0 0.0
    %263 = vmatmul.mubr.f32.gmra.mrb[0].mxu0 %v99
    %v264 = vpop.f32.mrb[0].mxu0
    %v265 = vadd.f32 %v175, %v264
    %v266 = vpop.f32.mrb[0].mxu0
    %v267 = vadd.f32 %v179, %v266
    %268 = vmatprep.mubr.f32.mxu0 0.0
    %269 = vmatmul.mubr.f32.gmra.mrb[0].mxu0 %v100
    %v270 = vpop.f32.mrb[0].mxu0
    %v271 = vadd.f32 %v175, %v270
    %v272 = vpop.f32.mrb[0].mxu0
    %v273 = vadd.f32 %v179, %v272
    %274 = vmatprep.mubr.f32.mxu0 0.0
    %275 = vmatmul.mubr.f32.gmra.mrb[0].mxu0 %v101
    %v276 = vpop.f32.mrb[0].mxu0
    %v277 = vadd.f32 %v175, %v276
    %v278 = vpop.f32.mrb[0].mxu0
    %v279 = vadd.f32 %v179, %v278
    %280 = vmatprep.mubr.f32.mxu0 0.0
    %281 = vmatmul.mubr.f32.gmra.mrb[0].mxu0 %v102
    %v282 = vpop.f32.mrb[0].mxu0
    %v283 = vadd.f32 %v175, %v282
    %v284 = vpop.f32.mrb[0].mxu0
    %v285 = vadd.f32 %v179, %v284
    %286 = vmatprep.mubr.f32.mxu0 0.0
    %287 = vmatmul.mubr.f32.gmra.mrb[0].mxu0 %v103
    %v288 = vpop.f32.mrb[0].mxu0
    %v289 = vadd.f32 %v175, %v288
    %v290 = vpop.f32.mrb[0].mxu0
    %v291 = vadd.f32 %v179, %v290
    %292 = vmatprep.mubr.f32.mxu0 0.0
    %293 = vmatmul.mubr.f32.gmra.mrb[0].mxu0 %v104
    %v294 = vpop.f32.mrb[0].mxu0
    %v295 = vadd.f32 %v175, %v294
    %v296 = vpop.f32.mrb[0].mxu0
    %v297 = vadd.f32 %v179, %v296
    %298 = vmatprep.mubr.f32.mxu0 0.0
    %299 = vmatmul.mubr.f32.gmra.mrb[0].mxu0 %v105
    %v300 = vpop.f32.mrb[0].mxu0
    %v301 = vadd.f32 %v175, %v300
    %v302 = vpop.f32.mrb[0].mxu0
    %v303 = vadd.f32 %v179, %v302
    %304 = vdwg.mxu0
    %305 = vmatprep.subr.mxu0 %v109
    %306 = vmatpush1.msra.mxu0 %v108
    %307 = vmatprep.subr.mxu0 %v113
    %308 = vmatpush1.msra.mxu0 %v112
    %309 = vmatprep.subr.mxu0 %v117
    %310 = vmatpush1.msra.mxu0 %v116
    %311 = vmatprep.subr.mxu0 %v121
    %312 = vmatpush1.msra.mxu0 %v120
    %313 = vmatprep.subr.mxu0 %v125
    %314 = vmatpush1.msra.mxu0 %v124
    %315 = vmatprep.subr.mxu0 %v129
    %316 = vmatpush1.msra.mxu0 %v128
    %317 = vmatprep.subr.mxu0 %v133
    %318 = vmatpush1.msra.mxu0 %v132
    %319 = vmatprep.subr.mxu0 %v137
    %320 = vmatpush1.msra.mxu0 %v136
    %321 = vmatprep.subr.mxu0 %v141
    %322 = vmatpush1.msra.mxu0 %v140
    %323 = vmatprep.subr.mxu0 %v145
    %324 = vmatpush1.msra.mxu0 %v144
    %325 = vmatprep.subr.mxu0 %v149
    %326 = vmatpush1.msra.mxu0 %v148
    %327 = vmatprep.subr.mxu0 %v153
    %328 = vmatpush1.msra.mxu0 %v152
    %329 = vmatprep.subr.mxu0 %v157
    %330 = vmatpush1.msra.mxu0 %v156
    %331 = vmatprep.subr.mxu0 %v161
    %332 = vmatpush1.msra.mxu0 %v160
    %333 = vmatprep.subr.mxu0 %v165
    %334 = vmatpush1.msra.mxu0 %v164
    %335 = vmatprep.subr.mxu0 %v169
    %336 = vmatpush1.msra.mxu0 %v168
    %337 = vmatprep.subr.mxu0 0.0
    %338 = vmatpush1.msra.mxu0 0.0
    %339 = vmatprep.subr.mxu0 0.0
    %340 = vmatpush1.msra.mxu0 0.0
    %341 = vmatprep.subr.mxu0 0.0
    %342 = vmatpush1.msra.mxu0 0.0
    %343 = vmatprep.subr.mxu0 0.0
    %344 = vmatpush1.msra.mxu0 0.0
    %345 = vmatprep.subr.mxu0 0.0
    %346 = vmatpush1.msra.mxu0 0.0
    %347 = vmatprep.subr.mxu0 0.0
    %348 = vmatpush1.msra.mxu0 0.0
    %349 = vmatprep.subr.mxu0 0.0
    %350 = vmatpush1.msra.mxu0 0.0
    %351 = vmatprep.subr.mxu0 0.0
    %352 = vmatpush1.msra.mxu0 0.0
    %353 = vmatprep.subr.mxu0 0.0
    %354 = vmatpush1.msra.mxu0 0.0
    %355 = vmatprep.subr.mxu0 0.0
    %356 = vmatpush1.msra.mxu0 0.0
    %357 = vmatprep.subr.mxu0 0.0
    %358 = vmatpush1.msra.mxu0 0.0
    %359 = vmatprep.subr.mxu0 0.0
    %360 = vmatpush1.msra.mxu0 0.0
    %361 = vmatprep.subr.mxu0 0.0
    %362 = vmatpush1.msra.mxu0 0.0
    %363 = vmatprep.subr.mxu0 0.0
    %364 = vmatpush1.msra.mxu0 0.0
    %365 = vmatprep.subr.mxu0 0.0
    %366 = vmatpush1.msra.mxu0 0.0
    %367 = vmatprep.subr.mxu0 0.0
    %368 = vmatpush1.msra.mxu0 0.0
    %369 = vmatprep.mubr.f32.mxu0 0.0
    %370 = vmatmul.mubr.f32.gmra.mrb[0].mxu0 %v98
    %v371 = vpop.f32.mrb[0].mxu0
    %v372 = vadd.f32 %v183, %v371
    %v373 = vpop.f32.mrb[0].mxu0
    %v374 = vadd.f32 %v187, %v373
    %375 = vmatprep.mubr.f32.mxu0 0.0
    %376 = vmatmul.mubr.f32.gmra.mrb[0].mxu0 %v99
    %v377 = vpop.f32.mrb[0].mxu0
    %v378 = vadd.f32 %v183, %v377
    %v379 = vpop.f32.mrb[0].mxu0
    %v380 = vadd.f32 %v187, %v379
    %381 = vmatprep.mubr.f32.mxu0 0.0
    %382 = vmatmul.mubr.f32.gmra.mrb[0].mxu0 %v100
    %v383 = vpop.f32.mrb[0].mxu0
    %v384 = vadd.f32 %v183, %v383
    %v385 = vpop.f32.mrb[0].mxu0
    %v386 = vadd.f32 %v187, %v385
    %387 = vmatprep.mubr.f32.mxu0 0.0
    %388 = vmatmul.mubr.f32.gmra.mrb[0].mxu0 %v101
    %v389 = vpop.f32.mrb[0].mxu0
    %v390 = vadd.f32 %v183, %v389
    %v391 = vpop.f32.mrb[0].mxu0
    %v392 = vadd.f32 %v187, %v391
    %393 = vmatprep.mubr.f32.mxu0 0.0
    %394 = vmatmul.mubr.f32.gmra.mrb[0].mxu0 %v102
    %v395 = vpop.f32.mrb[0].mxu0
    %v396 = vadd.f32 %v183, %v395
    %v397 = vpop.f32.mrb[0].mxu0
    %v398 = vadd.f32 %v187, %v397
    %399 = vmatprep.mubr.f32.mxu0 0.0
    %400 = vmatmul.mubr.f32.gmra.mrb[0].mxu0 %v103
    %v401 = vpop.f32.mrb[0].mxu0
    %v402 = vadd.f32 %v183, %v401
    %v403 = vpop.f32.mrb[0].mxu0
    %v404 = vadd.f32 %v187, %v403
    %405 = vmatprep.mubr.f32.mxu0 0.0
    %406 = vmatmul.mubr.f32.gmra.mrb[0].mxu0 %v104
    %v407 = vpop.f32.mrb[0].mxu0
    %v408 = vadd.f32 %v183, %v407
    %v409 = vpop.f32.mrb[0].mxu0
    %v410 = vadd.f32 %v187, %v409
    %411 = vmatprep.mubr.f32.mxu0 0.0
    %412 = vmatmul.mubr.f32.gmra.mrb[0].mxu0 %v105
    %v413 = vpop.f32.mrb[0].mxu0
    %v414 = vadd.f32 %v183, %v413
    %v415 = vpop.f32.mrb[0].mxu0
    %v416 = vadd.f32 %v187, %v415
    %417 = vdwg.mxu0
    %418 = vst [vmem:[#allocation4] sm:$0xff] %v259
    %419 = vst [vmem:[#allocation4 + $0x8] sm:$0xff] %v261
    %420 = vst [vmem:[#allocation4 + $0x10] sm:$0xff] %v372
    %421 = vst [vmem:[#allocation4 + $0x18] sm:$0xff] %v374
    %422 = vst [vmem:[#allocation4 + $0x20] sm:$0xff] %v265
    %423 = vst [vmem:[#allocation4 + $0x28] sm:$0xff] %v267
    %424 = vst [vmem:[#allocation4 + $0x30] sm:$0xff] %v378
    %425 = vst [vmem:[#allocation4 + $0x38] sm:$0xff] %v380
    %426 = vst [vmem:[#allocation4 + $0x40] sm:$0xff] %v271
    %427 = vst [vmem:[#allocation4 + $0x48] sm:$0xff] %v273
    %428 = vst [vmem:[#allocation4 + $0x50] sm:$0xff] %v384
    %429 = vst [vmem:[#allocation4 + $0x58] sm:$0xff] %v386
    %430 = vst [vmem:[#allocation4 + $0x60] sm:$0xff] %v277
    %431 = vst [vmem:[#allocation4 + $0x68] sm:$0xff] %v279
    %432 = vst [vmem:[#allocation4 + $0x70] sm:$0xff] %v390
    %433 = vst [vmem:[#allocation4 + $0x78] sm:$0xff] %v392
    %434 = vst [vmem:[#allocation4 + $0x80] sm:$0xff] %v283
    %435 = vst [vmem:[#allocation4 + $0x88] sm:$0xff] %v285
    %436 = vst [vmem:[#allocation4 + $0x90] sm:$0xff] %v396
    %437 = vst [vmem:[#allocation4 + $0x98] sm:$0xff] %v398
    %438 = vst [vmem:[#allocation4 + $0xa0] sm:$0xff] %v289
    %439 = vst [vmem:[#allocation4 + $0xa8] sm:$0xff] %v291
    %440 = vst [vmem:[#allocation4 + $0xb0] sm:$0xff] %v402
    %441 = vst [vmem:[#allocation4 + $0xb8] sm:$0xff] %v404
    %442 = vst [vmem:[#allocation4 + $0xc0] sm:$0xff] %v295
    %443 = vst [vmem:[#allocation4 + $0xc8] sm:$0xff] %v297
    %444 = vst [vmem:[#allocation4 + $0xd0] sm:$0xff] %v408
    %445 = vst [vmem:[#allocation4 + $0xd8] sm:$0xff] %v410
    %446 = vst [vmem:[#allocation4 + $0xe0] sm:$0xff] %v301
    %447 = vst [vmem:[#allocation4 + $0xe8] sm:$0xff] %v303
    %448 = vst [vmem:[#allocation4 + $0xf0] sm:$0xff] %v414
    %449 = vst [vmem:[#allocation4 + $0xf8] sm:$0xff] %v416
    %v450 = vld [vmem:[#allocation11] sm:$0xff]
    %v451 = vld [vmem:[#allocation11 + $0x8] sm:$0xff]
    %v452 = vld [vmem:[#allocation11 + $0x10] sm:$0xff]
    %v453 = vld [vmem:[#allocation11 + $0x18] sm:$0xff]
    %v454 = vld [vmem:[#allocation11 + $0x20] sm:$0xff]
    %v455 = vld [vmem:[#allocation11 + $0x28] sm:$0xff]
    %v456 = vld [vmem:[#allocation11 + $0x30] sm:$0xff]
    %v457 = vld [vmem:[#allocation11 + $0x38] sm:$0xff]
    %v458 = vld [vmem:[#allocation11 + $0x40] sm:$0xff]
    %v459 = vld [vmem:[#allocation11 + $0x48] sm:$0xff]
    %v460 = vld [vmem:[#allocation11 + $0x50] sm:$0xff]
    %v461 = vld [vmem:[#allocation11 + $0x58] sm:$0xff]
    %v462 = vld [vmem:[#allocation11 + $0x60] sm:$0xff]
    %v463 = vld [vmem:[#allocation11 + $0x68] sm:$0xff]
    %v464 = vld [vmem:[#allocation11 + $0x70] sm:$0xff]
    %v465 = vld [vmem:[#allocation11 + $0x78] sm:$0xff]
    %v466 = vld [vmem:[#allocation11 + $0x80] sm:$0xff]
    %v467 = vld [vmem:[#allocation11 + $0x88] sm:$0xff]
    %v468 = vld [vmem:[#allocation11 + $0x90] sm:$0xff]
    %v469 = vld [vmem:[#allocation11 + $0x98] sm:$0xff]
    %v470 = vld [vmem:[#allocation11 + $0xa0] sm:$0xff]
    %v471 = vld [vmem:[#allocation11 + $0xa8] sm:$0xff]
    %v472 = vld [vmem:[#allocation11 + $0xb0] sm:$0xff]
    %v473 = vld [vmem:[#allocation11 + $0xb8] sm:$0xff]
    %v474 = vld [vmem:[#allocation11 + $0xc0] sm:$0xff]
    %v475 = vld [vmem:[#allocation11 + $0xc8] sm:$0xff]
    %v476 = vld [vmem:[#allocation11 + $0xd0] sm:$0xff]
    %v477 = vld [vmem:[#allocation11 + $0xd8] sm:$0xff]
    %v478 = vld [vmem:[#allocation11 + $0xe0] sm:$0xff]
    %v479 = vld [vmem:[#allocation11 + $0xe8] sm:$0xff]
    %v480 = vld [vmem:[#allocation11 + $0xf0] sm:$0xff]
    %v481 = vld [vmem:[#allocation11 + $0xf8] sm:$0xff]
    %v482 = vld [vmem:[#allocation11 + $0x100] sm:$0xff]
    %v483 = vld [vmem:[#allocation11 + $0x108] sm:$0xff]
    %v484 = vld [vmem:[#allocation11 + $0x110] sm:$0xff]
    %v485 = vld [vmem:[#allocation11 + $0x118] sm:$0xff]
    %v486 = vld [vmem:[#allocation11 + $0x120] sm:$0xff]
    %v487 = vld [vmem:[#allocation11 + $0x128] sm:$0xff]
    %v488 = vld [vmem:[#allocation11 + $0x130] sm:$0xff]
    %v489 = vld [vmem:[#allocation11 + $0x138] sm:$0xff]
    %v490 = vld [vmem:[#allocation11 + $0x140] sm:$0xff]
    %v491 = vld [vmem:[#allocation11 + $0x148] sm:$0xff]
    %v492 = vld [vmem:[#allocation11 + $0x150] sm:$0xff]
    %v493 = vld [vmem:[#allocation11 + $0x158] sm:$0xff]
    %v494 = vld [vmem:[#allocation11 + $0x160] sm:$0xff]
    %v495 = vld [vmem:[#allocation11 + $0x168] sm:$0xff]
    %v496 = vld [vmem:[#allocation11 + $0x170] sm:$0xff]
    %v497 = vld [vmem:[#allocation11 + $0x178] sm:$0xff]
    %v498 = vld [vmem:[#allocation11 + $0x180] sm:$0xff]
    %v499 = vld [vmem:[#allocation11 + $0x188] sm:$0xff]
    %v500 = vld [vmem:[#allocation11 + $0x190] sm:$0xff]
    %v501 = vld [vmem:[#allocation11 + $0x198] sm:$0xff]
    %v502 = vld [vmem:[#allocation11 + $0x1a0] sm:$0xff]
    %v503 = vld [vmem:[#allocation11 + $0x1a8] sm:$0xff]
    %v504 = vld [vmem:[#allocation11 + $0x1b0] sm:$0xff]
    %v505 = vld [vmem:[#allocation11 + $0x1b8] sm:$0xff]
    %v506 = vld [vmem:[#allocation11 + $0x1c0] sm:$0xff]
    %v507 = vld [vmem:[#allocation11 + $0x1c8] sm:$0xff]
    %v508 = vld [vmem:[#allocation11 + $0x1d0] sm:$0xff]
    %v509 = vld [vmem:[#allocation11 + $0x1d8] sm:$0xff]
    %v510 = vld [vmem:[#allocation11 + $0x1e0] sm:$0xff]
    %v511 = vld [vmem:[#allocation11 + $0x1e8] sm:$0xff]
    %v512 = vld [vmem:[#allocation11 + $0x1f0] sm:$0xff]
    %v513 = vld [vmem:[#allocation11 + $0x1f8] sm:$0xff]
    %v514 = vld [vmem:[#allocation2] sm:$0xff]
    %v515 = vld [vmem:[#allocation3] sm:$0xff]
    %v516 = vld [vmem:[#allocation4] sm:$0xff]
    %v517 = vld [vmem:[#allocation4 + $0x8] sm:$0xff]
    %v518 = vld [vmem:[#allocation4 + $0x10] sm:$0xff]
    %v519 = vld [vmem:[#allocation4 + $0x18] sm:$0xff]
    %520 = vmatprep.subr.mxu0 %v451
    %521 = vmatpush1.msra.mxu0 %v450
    %522 = vmatprep.subr.mxu0 %v455
    %523 = vmatpush1.msra.mxu0 %v454
    %524 = vmatprep.subr.mxu0 %v459
    %525 = vmatpush1.msra.mxu0 %v458
    %526 = vmatprep.subr.mxu0 %v463
    %527 = vmatpush1.msra.mxu0 %v462
    %528 = vmatprep.subr.mxu0 %v467
    %529 = vmatpush1.msra.mxu0 %v466
    %530 = vmatprep.subr.mxu0 %v471
    %531 = vmatpush1.msra.mxu0 %v470
    %532 = vmatprep.subr.mxu0 %v475
    %533 = vmatpush1.msra.mxu0 %v474
    %534 = vmatprep.subr.mxu0 %v479
    %535 = vmatpush1.msra.mxu0 %v478
    %536 = vmatprep.subr.mxu0 %v483
    %537 = vmatpush1.msra.mxu0 %v482
    %538 = vmatprep.subr.mxu0 %v487
    %539 = vmatpush1.msra.mxu0 %v486
    %540 = vmatprep.subr.mxu0 %v491
    %541 = vmatpush1.msra.mxu0 %v490
    %542 = vmatprep.subr.mxu0 %v495
    %543 = vmatpush1.msra.mxu0 %v494
    %544 = vmatprep.subr.mxu0 %v499
    %545 = vmatpush1.msra.mxu0 %v498
    %546 = vmatprep.subr.mxu0 %v503
    %547 = vmatpush1.msra.mxu0 %v502
    %548 = vmatprep.subr.mxu0 %v507
    %549 = vmatpush1.msra.mxu0 %v506
    %550 = vmatprep.subr.mxu0 %v511
    %551 = vmatpush1.msra.mxu0 %v510
    %552 = vmatprep.subr.mxu0 0.0
    %553 = vmatpush1.msra.mxu0 0.0
    %554 = vmatprep.subr.mxu0 0.0
    %555 = vmatpush1.msra.mxu0 0.0
    %556 = vmatprep.subr.mxu0 0.0
    %557 = vmatpush1.msra.mxu0 0.0
    %558 = vmatprep.subr.mxu0 0.0
    %559 = vmatpush1.msra.mxu0 0.0
    %560 = vmatprep.subr.mxu0 0.0
    %561 = vmatpush1.msra.mxu0 0.0
    %562 = vmatprep.subr.mxu0 0.0
    %563 = vmatpush1.msra.mxu0 0.0
    %564 = vmatprep.subr.mxu0 0.0
    %565 = vmatpush1.msra.mxu0 0.0
    %566 = vmatprep.subr.mxu0 0.0
    %567 = vmatpush1.msra.mxu0 0.0
    %568 = vmatprep.subr.mxu0 0.0
    %569 = vmatpush1.msra.mxu0 0.0
    %570 = vmatprep.subr.mxu0 0.0
    %571 = vmatpush1.msra.mxu0 0.0
    %572 = vmatprep.subr.mxu0 0.0
    %573 = vmatpush1.msra.mxu0 0.0
    %574 = vmatprep.subr.mxu0 0.0
    %575 = vmatpush1.msra.mxu0 0.0
    %576 = vmatprep.subr.mxu0 0.0
    %577 = vmatpush1.msra.mxu0 0.0
    %578 = vmatprep.subr.mxu0 0.0
    %579 = vmatpush1.msra.mxu0 0.0
    %580 = vmatprep.subr.mxu0 0.0
    %581 = vmatpush1.msra.mxu0 0.0
    %582 = vmatprep.subr.mxu0 0.0
    %583 = vmatpush1.msra.mxu0 0.0
    %584 = vmatprep.mubr.f32.mxu0 0.0
    %585 = vmatmul.mubr.f32.gmra.mrb[0].mxu0 %v514
    %v586 = vpop.f32.mrb[0].mxu0
    %v587 = vadd.f32 0.0, %v586
    %v588 = vpop.f32.mrb[0].mxu0
    %v589 = vadd.f32 0.0, %v588
    %590 = vdwg.mxu0
    %591 = vmatprep.subr.mxu0 %v453
    %592 = vmatpush1.msra.mxu0 %v452
    %593 = vmatprep.subr.mxu0 %v457
    %594 = vmatpush1.msra.mxu0 %v456
    %595 = vmatprep.subr.mxu0 %v461
    %596 = vmatpush1.msra.mxu0 %v460
    %597 = vmatprep.subr.mxu0 %v465
    %598 = vmatpush1.msra.mxu0 %v464
    %599 = vmatprep.subr.mxu0 %v469
    %600 = vmatpush1.msra.mxu0 %v468
    %601 = vmatprep.subr.mxu0 %v473
    %602 = vmatpush1.msra.mxu0 %v472
    %603 = vmatprep.subr.mxu0 %v477
    %604 = vmatpush1.msra.mxu0 %v476
    %605 = vmatprep.subr.mxu0 %v481
    %606 = vmatpush1.msra.mxu0 %v480
    %607 = vmatprep.subr.mxu0 %v485
    %608 = vmatpush1.msra.mxu0 %v484
    %609 = vmatprep.subr.mxu0 %v489
    %610 = vmatpush1.msra.mxu0 %v488
    %611 = vmatprep.subr.mxu0 %v493
    %612 = vmatpush1.msra.mxu0 %v492
    %613 = vmatprep.subr.mxu0 %v497
    %614 = vmatpush1.msra.mxu0 %v496
    %615 = vmatprep.subr.mxu0 %v501
    %616 = vmatpush1.msra.mxu0 %v500
    %617 = vmatprep.subr.mxu0 %v505
    %618 = vmatpush1.msra.mxu0 %v504
    %619 = vmatprep.subr.mxu0 %v509
    %620 = vmatpush1.msra.mxu0 %v508
    %621 = vmatprep.subr.mxu0 %v513
    %622 = vmatpush1.msra.mxu0 %v512
    %623 = vmatprep.subr.mxu0 0.0
    %624 = vmatpush1.msra.mxu0 0.0
    %625 = vmatprep.subr.mxu0 0.0
    %626 = vmatpush1.msra.mxu0 0.0
    %627 = vmatprep.subr.mxu0 0.0
    %628 = vmatpush1.msra.mxu0 0.0
    %629 = vmatprep.subr.mxu0 0.0
    %630 = vmatpush1.msra.mxu0 0.0
    %631 = vmatprep.subr.mxu0 0.0
    %632 = vmatpush1.msra.mxu0 0.0
    %633 = vmatprep.subr.mxu0 0.0
    %634 = vmatpush1.msra.mxu0 0.0
    %635 = vmatprep.subr.mxu0 0.0
    %636 = vmatpush1.msra.mxu0 0.0
    %637 = vmatprep.subr.mxu0 0.0
    %638 = vmatpush1.msra.mxu0 0.0
    %639 = vmatprep.subr.mxu0 0.0
    %640 = vmatpush1.msra.mxu0 0.0
    %641 = vmatprep.subr.mxu0 0.0
    %642 = vmatpush1.msra.mxu0 0.0
    %643 = vmatprep.subr.mxu0 0.0
    %644 = vmatpush1.msra.mxu0 0.0
    %645 = vmatprep.subr.mxu0 0.0
    %646 = vmatpush1.msra.mxu0 0.0
    %647 = vmatprep.subr.mxu0 0.0
    %648 = vmatpush1.msra.mxu0 0.0
    %649 = vmatprep.subr.mxu0 0.0
    %650 = vmatpush1.msra.mxu0 0.0
    %651 = vmatprep.subr.mxu0 0.0
    %652 = vmatpush1.msra.mxu0 0.0
    %653 = vmatprep.subr.mxu0 0.0
    %654 = vmatpush1.msra.mxu0 0.0
    %655 = vmatprep.mubr.f32.mxu0 0.0
    %656 = vmatmul.mubr.f32.gmra.mrb[0].mxu0 %v514
    %v657 = vpop.f32.mrb[0].mxu0
    %v658 = vadd.f32 0.0, %v657
    %v659 = vpop.f32.mrb[0].mxu0
    %v660 = vadd.f32 0.0, %v659
    %661 = vdwg.mxu0
    %v662 = vadd.f32 %v516, %v587
    %v663 = vadd.f32 %v517, %v589
    %v664 = vadd.f32 %v518, %v658
    %v665 = vadd.f32 %v519, %v660
    %v666 = vxor.u32 %v662, 2147483648
    %v667 = vmul.f32 %v666, 1.442695
    %v668 = vpow.pop %v667
    %v669 = vadd.f32 %v668, 1.0
    %v670 = vrcp.pop %v669
    %v671 = vmul.f32 1.0, %v670
    %v672 = vxor.u32 %v663, 2147483648
    %v673 = vmul.f32 %v672, 1.442695
    %v674 = vpow.pop %v673
    %v675 = vadd.f32 %v674, 1.0
    %v676 = vrcp.pop %v675
    %v677 = vmul.f32 1.0, %v676
    %v678 = vtanh.pop %v664
    %v679 = vxor.u32 %v665, 2147483648
    %v680 = vmul.f32 %v679, 1.442695
    %v681 = vpow.pop %v680
    %v682 = vadd.f32 %v681, 1.0
    %v683 = vrcp.pop %v682
    %v684 = vmul.f32 1.0, %v683
    %v685 = vmul.f32 %v677, %v515
    %v686 = vmul.f32 %v671, %v678
    %v687 = vadd.f32 %v685, %v686
    %v688 = vtanh.pop %v687
    %v689 = vmul.f32 %v684, %v688
    %s690 = scalar_lea.vmem [#allocation4], 32
    %v691 = vld [vmem:[%s690] sm:$0xff]
    %v692 = vld [vmem:[%s690 + $0x8] sm:$0xff]
    %v693 = vld [vmem:[%s690 + $0x10] sm:$0xff]
    %v694 = vld [vmem:[%s690 + $0x18] sm:$0xff]
    %695 = vmatprep.subr.mxu0 %v451
    %696 = vmatpush1.msra.mxu0 %v450
    %697 = vmatprep.subr.mxu0 %v455
    %698 = vmatpush1.msra.mxu0 %v454
    %699 = vmatprep.subr.mxu0 %v459
    %700 = vmatpush1.msra.mxu0 %v458
    %701 = vmatprep.subr.mxu0 %v463
    %702 = vmatpush1.msra.mxu0 %v462
    %703 = vmatprep.subr.mxu0 %v467
    %704 = vmatpush1.msra.mxu0 %v466
    %705 = vmatprep.subr.mxu0 %v471
    %706 = vmatpush1.msra.mxu0 %v470
    %707 = vmatprep.subr.mxu0 %v475
    %708 = vmatpush1.msra.mxu0 %v474
    %709 = vmatprep.subr.mxu0 %v479
    %710 = vmatpush1.msra.mxu0 %v478
    %711 = vmatprep.subr.mxu0 %v483
    %712 = vmatpush1.msra.mxu0 %v482
    %713 = vmatprep.subr.mxu0 %v487
    %714 = vmatpush1.msra.mxu0 %v486
    %715 = vmatprep.subr.mxu0 %v491
    %716 = vmatpush1.msra.mxu0 %v490
    %717 = vmatprep.subr.mxu0 %v495
    %718 = vmatpush1.msra.mxu0 %v494
    %719 = vmatprep.subr.mxu0 %v499
    %720 = vmatpush1.msra.mxu0 %v498
    %721 = vmatprep.subr.mxu0 %v503
    %722 = vmatpush1.msra.mxu0 %v502
    %723 = vmatprep.subr.mxu0 %v507
    %724 = vmatpush1.msra.mxu0 %v506
    %725 = vmatprep.subr.mxu0 %v511
    %726 = vmatpush1.msra.mxu0 %v510
    %727 = vmatprep.subr.mxu0 0.0
    %728 = vmatpush1.msra.mxu0 0.0
    %729 = vmatprep.subr.mxu0 0.0
    %730 = vmatpush1.msra.mxu0 0.0
    %731 = vmatprep.subr.mxu0 0.0
    %732 = vmatpush1.msra.mxu0 0.0
    %733 = vmatprep.subr.mxu0 0.0
    %734 = vmatpush1.msra.mxu0 0.0
    %735 = vmatprep.subr.mxu0 0.0
    %736 = vmatpush1.msra.mxu0 0.0
    %737 = vmatprep.subr.mxu0 0.0
    %738 = vmatpush1.msra.mxu0 0.0
    %739 = vmatprep.subr.mxu0 0.0
    %740 = vmatpush1.msra.mxu0 0.0
    %741 = vmatprep.subr.mxu0 0.0
    %742 = vmatpush1.msra.mxu0 0.0
    %743 = vmatprep.subr.mxu0 0.0
    %744 = vmatpush1.msra.mxu0 0.0
    %745 = vmatprep.subr.mxu0 0.0
    %746 = vmatpush1.msra.mxu0 0.0
    %747 = vmatprep.subr.mxu0 0.0
    %748 = vmatpush1.msra.mxu0 0.0
    %749 = vmatprep.subr.mxu0 0.0
    %750 = vmatpush1.msra.mxu0 0.0
    %751 = vmatprep.subr.mxu0 0.0
    %752 = vmatpush1.msra.mxu0 0.0
    %753 = vmatprep.subr.mxu0 0.0
    %754 = vmatpush1.msra.mxu0 0.0
    %755 = vmatprep.subr.mxu0 0.0
    %756 = vmatpush1.msra.mxu0 0.0
    %757 = vmatprep.subr.mxu0 0.0
    %758 = vmatpush1.msra.mxu0 0.0
    %759 = vmatprep.mubr.f32.mxu0 0.0
    %760 = vmatmul.mubr.f32.gmra.mrb[0].mxu0 %v689
    %v761 = vpop.f32.mrb[0].mxu0
    %v762 = vadd.f32 0.0, %v761
    %v763 = vpop.f32.mrb[0].mxu0
    %v764 = vadd.f32 0.0, %v763
    %765 = vdwg.mxu0
    %766 = vmatprep.subr.mxu0 %v453
    %767 = vmatpush1.msra.mxu0 %v452
    %768 = vmatprep.subr.mxu0 %v457
    %769 = vmatpush1.msra.mxu0 %v456
    %770 = vmatprep.subr.mxu0 %v461
    %771 = vmatpush1.msra.mxu0 %v460
    %772 = vmatprep.subr.mxu0 %v465
    %773 = vmatpush1.msra.mxu0 %v464
    %774 = vmatprep.subr.mxu0 %v469
    %775 = vmatpush1.msra.mxu0 %v468
    %776 = vmatprep.subr.mxu0 %v473
    %777 = vmatpush1.msra.mxu0 %v472
    %778 = vmatprep.subr.mxu0 %v477
    %779 = vmatpush1.msra.mxu0 %v476
    %780 = vmatprep.subr.mxu0 %v481
    %781 = vmatpush1.msra.mxu0 %v480
    %782 = vmatprep.subr.mxu0 %v485
    %783 = vmatpush1.msra.mxu0 %v484
    %784 = vmatprep.subr.mxu0 %v489
    %785 = vmatpush1.msra.mxu0 %v488
    %786 = vmatprep.subr.mxu0 %v493
    %787 = vmatpush1.msra.mxu0 %v492
    %788 = vmatprep.subr.mxu0 %v497
    %789 = vmatpush1.msra.mxu0 %v496
    %790 = vmatprep.subr.mxu0 %v501
    %791 = vmatpush1.msra.mxu0 %v500
    %792 = vmatprep.subr.mxu0 %v505
    %793 = vmatpush1.msra.mxu0 %v504
    %794 = vmatprep.subr.mxu0 %v509
    %795 = vmatpush1.msra.mxu0 %v508
    %796 = vmatprep.subr.mxu0 %v513
    %797 = vmatpush1.msra.mxu0 %v512
    %798 = vmatprep.subr.mxu0 0.0
    %799 = vmatpush1.msra.mxu0 0.0
    %800 = vmatprep.subr.mxu0 0.0
    %801 = vmatpush1.msra.mxu0 0.0
    %802 = vmatprep.subr.mxu0 0.0
    %803 = vmatpush1.msra.mxu0 0.0
    %804 = vmatprep.subr.mxu0 0.0
    %805 = vmatpush1.msra.mxu0 0.0
    %806 = vmatprep.subr.mxu0 0.0
    %807 = vmatpush1.msra.mxu0 0.0
    %808 = vmatprep.subr.mxu0 0.0
    %809 = vmatpush1.msra.mxu0 0.0
    %810 = vmatprep.subr.mxu0 0.0
    %811 = vmatpush1.msra.mxu0 0.0
    %812 = vmatprep.subr.mxu0 0.0
    %813 = vmatpush1.msra.mxu0 0.0
    %814 = vmatprep.subr.mxu0 0.0
    %815 = vmatpush1.msra.mxu0 0.0
    %816 = vmatprep.subr.mxu0 0.0
    %817 = vmatpush1.msra.mxu0 0.0
    %818 = vmatprep.subr.mxu0 0.0
    %819 = vmatpush1.msra.mxu0 0.0
    %820 = vmatprep.subr.mxu0 0.0
    %821 = vmatpush1.msra.mxu0 0.0
    %822 = vmatprep.subr.mxu0 0.0
    %823 = vmatpush1.msra.mxu0 0.0
    %824 = vmatprep.subr.mxu0 0.0
    %825 = vmatpush1.msra.mxu0 0.0
    %826 = vmatprep.subr.mxu0 0.0
    %827 = vmatpush1.msra.mxu0 0.0
    %828 = vmatprep.subr.mxu0 0.0
    %829 = vmatpush1.msra.mxu0 0.0
    %830 = vmatprep.mubr.f32.mxu0 0.0
    %831 = vmatmul.mubr.f32.gmra.mrb[0].mxu0 %v689
    %v832 = vpop.f32.mrb[0].mxu0
    %v833 = vadd.f32 0.0, %v832
    %v834 = vpop.f32.mrb[0].mxu0
    %v835 = vadd.f32 0.0, %v834
    %836 = vdwg.mxu0
    %v837 = vadd.f32 %v691, %v762
    %v838 = vadd.f32 %v692, %v764
    %v839 = vadd.f32 %v693, %v833
    %v840 = vadd.f32 %v694, %v835
    %v841 = vxor.u32 %v837, 2147483648
    %v842 = vmul.f32 %v841, 1.442695
    %v843 = vpow.pop %v842
    %v844 = vadd.f32 %v843, 1.0
    %v845 = vrcp.pop %v844
    %v846 = vmul.f32 1.0, %v845
    %v847 = vxor.u32 %v838, 2147483648
    %v848 = vmul.f32 %v847, 1.442695
    %v849 = vpow.pop %v848
    %v850 = vadd.f32 %v849, 1.0
    %v851 = vrcp.pop %v850
    %v852 = vmul.f32 1.0, %v851
    %v853 = vtanh.pop %v839
    %v854 = vxor.u32 %v840, 2147483648
    %v855 = vmul.f32 %v854, 1.442695
    %v856 = vpow.pop %v855
    %v857 = vadd.f32 %v856, 1.0
    %v858 = vrcp.pop %v857
    %v859 = vmul.f32 1.0, %v858
    %v860 = vmul.f32 %v852, %v687
    %v861 = vmul.f32 %v846, %v853
    %v862 = vadd.f32 %v860, %v861
    %v863 = vtanh.pop %v862
    %v864 = vmul.f32 %v859, %v863
    %s865 = scalar_lea.vmem [#allocation4], 64
    %v866 = vld [vmem:[%s865] sm:$0xff]
    %v867 = vld [vmem:[%s865 + $0x8] sm:$0xff]
    %v868 = vld [vmem:[%s865 + $0x10] sm:$0xff]
    %v869 = vld [vmem:[%s865 + $0x18] sm:$0xff]
    %870 = vmatprep.subr.mxu0 %v451
    %871 = vmatpush1.msra.mxu0 %v450
    %872 = vmatprep.subr.mxu0 %v455
    %873 = vmatpush1.msra.mxu0 %v454
    %874 = vmatprep.subr.mxu0 %v459
    %875 = vmatpush1.msra.mxu0 %v458
    %876 = vmatprep.subr.mxu0 %v463
    %877 = vmatpush1.msra.mxu0 %v462
    %878 = vmatprep.subr.mxu0 %v467
    %879 = vmatpush1.msra.mxu0 %v466
    %880 = vmatprep.subr.mxu0 %v471
    %881 = vmatpush1.msra.mxu0 %v470
    %882 = vmatprep.subr.mxu0 %v475
    %883 = vmatpush1.msra.mxu0 %v474
    %884 = vmatprep.subr.mxu0 %v479
    %885 = vmatpush1.msra.mxu0 %v478
    %886 = vmatprep.subr.mxu0 %v483
    %887 = vmatpush1.msra.mxu0 %v482
    %888 = vmatprep.subr.mxu0 %v487
    %889 = vmatpush1.msra.mxu0 %v486
    %890 = vmatprep.subr.mxu0 %v491
    %891 = vmatpush1.msra.mxu0 %v490
    %892 = vmatprep.subr.mxu0 %v495
    %893 = vmatpush1.msra.mxu0 %v494
    %894 = vmatprep.subr.mxu0 %v499
    %895 = vmatpush1.msra.mxu0 %v498
    %896 = vmatprep.subr.mxu0 %v503
    %897 = vmatpush1.msra.mxu0 %v502
    %898 = vmatprep.subr.mxu0 %v507
    %899 = vmatpush1.msra.mxu0 %v506
    %900 = vmatprep.subr.mxu0 %v511
    %901 = vmatpush1.msra.mxu0 %v510
    %902 = vmatprep.subr.mxu0 0.0
    %903 = vmatpush1.msra.mxu0 0.0
    %904 = vmatprep.subr.mxu0 0.0
    %905 = vmatpush1.msra.mxu0 0.0
    %906 = vmatprep.subr.mxu0 0.0
    %907 = vmatpush1.msra.mxu0 0.0
    %908 = vmatprep.subr.mxu0 0.0
    %909 = vmatpush1.msra.mxu0 0.0
    %910 = vmatprep.subr.mxu0 0.0
    %911 = vmatpush1.msra.mxu0 0.0
    %912 = vmatprep.subr.mxu0 0.0
    %913 = vmatpush1.msra.mxu0 0.0
    %914 = vmatprep.subr.mxu0 0.0
    %915 = vmatpush1.msra.mxu0 0.0
    %916 = vmatprep.subr.mxu0 0.0
    %917 = vmatpush1.msra.mxu0 0.0
    %918 = vmatprep.subr.mxu0 0.0
    %919 = vmatpush1.msra.mxu0 0.0
    %920 = vmatprep.subr.mxu0 0.0
    %921 = vmatpush1.msra.mxu0 0.0
    %922 = vmatprep.subr.mxu0 0.0
    %923 = vmatpush1.msra.mxu0 0.0
    %924 = vmatprep.subr.mxu0 0.0
    %925 = vmatpush1.msra.mxu0 0.0
    %926 = vmatprep.subr.mxu0 0.0
    %927 = vmatpush1.msra.mxu0 0.0
    %928 = vmatprep.subr.mxu0 0.0
    %929 = vmatpush1.msra.mxu0 0.0
    %930 = vmatprep.subr.mxu0 0.0
    %931 = vmatpush1.msra.mxu0 0.0
    %932 = vmatprep.subr.mxu0 0.0
    %933 = vmatpush1.msra.mxu0 0.0
    %934 = vmatprep.mubr.f32.mxu0 0.0
    %935 = vmatmul.mubr.f32.gmra.mrb[0].mxu0 %v864
    %v936 = vpop.f32.mrb[0].mxu0
    %v937 = vadd.f32 0.0, %v936
    %v938 = vpop.f32.mrb[0].mxu0
    %v939 = vadd.f32 0.0, %v938
    %940 = vdwg.mxu0
    %941 = vmatprep.subr.mxu0 %v453
    %942 = vmatpush1.msra.mxu0 %v452
    %943 = vmatprep.subr.mxu0 %v457
    %944 = vmatpush1.msra.mxu0 %v456
    %945 = vmatprep.subr.mxu0 %v461
    %946 = vmatpush1.msra.mxu0 %v460
    %947 = vmatprep.subr.mxu0 %v465
    %948 = vmatpush1.msra.mxu0 %v464
    %949 = vmatprep.subr.mxu0 %v469
    %950 = vmatpush1.msra.mxu0 %v468
    %951 = vmatprep.subr.mxu0 %v473
    %952 = vmatpush1.msra.mxu0 %v472
    %953 = vmatprep.subr.mxu0 %v477
    %954 = vmatpush1.msra.mxu0 %v476
    %955 = vmatprep.subr.mxu0 %v481
    %956 = vmatpush1.msra.mxu0 %v480
    %957 = vmatprep.subr.mxu0 %v485
    %958 = vmatpush1.msra.mxu0 %v484
    %959 = vmatprep.subr.mxu0 %v489
    %960 = vmatpush1.msra.mxu0 %v488
    %961 = vmatprep.subr.mxu0 %v493
    %962 = vmatpush1.msra.mxu0 %v492
    %963 = vmatprep.subr.mxu0 %v497
    %964 = vmatpush1.msra.mxu0 %v496
    %965 = vmatprep.subr.mxu0 %v501
    %966 = vmatpush1.msra.mxu0 %v500
    %967 = vmatprep.subr.mxu0 %v505
    %968 = vmatpush1.msra.mxu0 %v504
    %969 = vmatprep.subr.mxu0 %v509
    %970 = vmatpush1.msra.mxu0 %v508
    %971 = vmatprep.subr.mxu0 %v513
    %972 = vmatpush1.msra.mxu0 %v512
    %973 = vmatprep.subr.mxu0 0.0
    %974 = vmatpush1.msra.mxu0 0.0
    %975 = vmatprep.subr.mxu0 0.0
    %976 = vmatpush1.msra.mxu0 0.0
    %977 = vmatprep.subr.mxu0 0.0
    %978 = vmatpush1.msra.mxu0 0.0
    %979 = vmatprep.subr.mxu0 0.0
    %980 = vmatpush1.msra.mxu0 0.0
    %981 = vmatprep.subr.mxu0 0.0
    %982 = vmatpush1.msra.mxu0 0.0
    %983 = vmatprep.subr.mxu0 0.0
    %984 = vmatpush1.msra.mxu0 0.0
    %985 = vmatprep.subr.mxu0 0.0
    %986 = vmatpush1.msra.mxu0 0.0
    %987 = vmatprep.subr.mxu0 0.0
    %988 = vmatpush1.msra.mxu0 0.0
    %989 = vmatprep.subr.mxu0 0.0
    %990 = vmatpush1.msra.mxu0 0.0
    %991 = vmatprep.subr.mxu0 0.0
    %992 = vmatpush1.msra.mxu0 0.0
    %993 = vmatprep.subr.mxu0 0.0
    %994 = vmatpush1.msra.mxu0 0.0
    %995 = vmatprep.subr.mxu0 0.0
    %996 = vmatpush1.msra.mxu0 0.0
    %997 = vmatprep.subr.mxu0 0.0
    %998 = vmatpush1.msra.mxu0 0.0
    %999 = vmatprep.subr.mxu0 0.0
    %1000 = vmatpush1.msra.mxu0 0.0
    %1001 = vmatprep.subr.mxu0 0.0
    %1002 = vmatpush1.msra.mxu0 0.0
    %1003 = vmatprep.subr.mxu0 0.0
    %1004 = vmatpush1.msra.mxu0 0.0
    %1005 = vmatprep.mubr.f32.mxu0 0.0
    %1006 = vmatmul.mubr.f32.gmra.mrb[0].mxu0 %v864
    %v1007 = vpop.f32.mrb[0].mxu0
    %v1008 = vadd.f32 0.0, %v1007
    %v1009 = vpop.f32.mrb[0].mxu0
    %v1010 = vadd.f32 0.0, %v1009
    %1011 = vdwg.mxu0
    %v1012 = vadd.f32 %v866, %v937
    %v1013 = vadd.f32 %v867, %v939
    %v1014 = vadd.f32 %v868, %v1008
    %v1015 = vadd.f32 %v869, %v1010
    %v1016 = vxor.u32 %v1012, 2147483648
    %v1017 = vmul.f32 %v1016, 1.442695
    %v1018 = vpow.pop %v1017
    %v1019 = vadd.f32 %v1018, 1.0
    %v1020 = vrcp.pop %v1019
    %v1021 = vmul.f32 1.0, %v1020
    %v1022 = vxor.u32 %v1013, 2147483648
    %v1023 = vmul.f32 %v1022, 1.442695
    %v1024 = vpow.pop %v1023
    %v1025 = vadd.f32 %v1024, 1.0
    %v1026 = vrcp.pop %v1025
    %v1027 = vmul.f32 1.0, %v1026
    %v1028 = vtanh.pop %v1014
    %v1029 = vxor.u32 %v1015, 2147483648
    %v1030 = vmul.f32 %v1029, 1.442695
    %v1031 = vpow.pop %v1030
    %v1032 = vadd.f32 %v1031, 1.0
    %v1033 = vrcp.pop %v1032
    %v1034 = vmul.f32 1.0, %v1033
    %v1035 = vmul.f32 %v1027, %v862
    %v1036 = vmul.f32 %v1021, %v1028
    %v1037 = vadd.f32 %v1035, %v1036
    %v1038 = vtanh.pop %v1037
    %v1039 = vmul.f32 %v1034, %v1038
    %s1040 = scalar_lea.vmem [#allocation4], 96
    %v1041 = vld [vmem:[%s1040] sm:$0xff]
    %v1042 = vld [vmem:[%s1040 + $0x8] sm:$0xff]
    %v1043 = vld [vmem:[%s1040 + $0x10] sm:$0xff]
    %v1044 = vld [vmem:[%s1040 + $0x18] sm:$0xff]
    %1045 = vmatprep.subr.mxu0 %v451
    %1046 = vmatpush1.msra.mxu0 %v450
    %1047 = vmatprep.subr.mxu0 %v455
    %1048 = vmatpush1.msra.mxu0 %v454
    %1049 = vmatprep.subr.mxu0 %v459
    %1050 = vmatpush1.msra.mxu0 %v458
    %1051 = vmatprep.subr.mxu0 %v463
    %1052 = vmatpush1.msra.mxu0 %v462
    %1053 = vmatprep.subr.mxu0 %v467
    %1054 = vmatpush1.msra.mxu0 %v466
    %1055 = vmatprep.subr.mxu0 %v471
    %1056 = vmatpush1.msra.mxu0 %v470
    %1057 = vmatprep.subr.mxu0 %v475
    %1058 = vmatpush1.msra.mxu0 %v474
    %1059 = vmatprep.subr.mxu0 %v479
    %1060 = vmatpush1.msra.mxu0 %v478
    %1061 = vmatprep.subr.mxu0 %v483
    %1062 = vmatpush1.msra.mxu0 %v482
    %1063 = vmatprep.subr.mxu0 %v487
    %1064 = vmatpush1.msra.mxu0 %v486
    %1065 = vmatprep.subr.mxu0 %v491
    %1066 = vmatpush1.msra.mxu0 %v490
    %1067 = vmatprep.subr.mxu0 %v495
    %1068 = vmatpush1.msra.mxu0 %v494
    %1069 = vmatprep.subr.mxu0 %v499
    %1070 = vmatpush1.msra.mxu0 %v498
    %1071 = vmatprep.subr.mxu0 %v503
    %1072 = vmatpush1.msra.mxu0 %v502
    %1073 = vmatprep.subr.mxu0 %v507
    %1074 = vmatpush1.msra.mxu0 %v506
    %1075 = vmatprep.subr.mxu0 %v511
    %1076 = vmatpush1.msra.mxu0 %v510
    %1077 = vmatprep.subr.mxu0 0.0
    %1078 = vmatpush1.msra.mxu0 0.0
    %1079 = vmatprep.subr.mxu0 0.0
    %1080 = vmatpush1.msra.mxu0 0.0
    %1081 = vmatprep.subr.mxu0 0.0
    %1082 = vmatpush1.msra.mxu0 0.0
    %1083 = vmatprep.subr.mxu0 0.0
    %1084 = vmatpush1.msra.mxu0 0.0
    %1085 = vmatprep.subr.mxu0 0.0
    %1086 = vmatpush1.msra.mxu0 0.0
    %1087 = vmatprep.subr.mxu0 0.0
    %1088 = vmatpush1.msra.mxu0 0.0
    %1089 = vmatprep.subr.mxu0 0.0
    %1090 = vmatpush1.msra.mxu0 0.0
    %1091 = vmatprep.subr.mxu0 0.0
    %1092 = vmatpush1.msra.mxu0 0.0
    %1093 = vmatprep.subr.mxu0 0.0
    %1094 = vmatpush1.msra.mxu0 0.0
    %1095 = vmatprep.subr.mxu0 0.0
    %1096 = vmatpush1.msra.mxu0 0.0
    %1097 = vmatprep.subr.mxu0 0.0
    %1098 = vmatpush1.msra.mxu0 0.0
    %1099 = vmatprep.subr.mxu0 0.0
    %1100 = vmatpush1.msra.mxu0 0.0
    %1101 = vmatprep.subr.mxu0 0.0
    %1102 = vmatpush1.msra.mxu0 0.0
    %1103 = vmatprep.subr.mxu0 0.0
    %1104 = vmatpush1.msra.mxu0 0.0
    %1105 = vmatprep.subr.mxu0 0.0
    %1106 = vmatpush1.msra.mxu0 0.0
    %1107 = vmatprep.subr.mxu0 0.0
    %1108 = vmatpush1.msra.mxu0 0.0
    %1109 = vmatprep.mubr.f32.mxu0 0.0
    %1110 = vmatmul.mubr.f32.gmra.mrb[0].mxu0 %v1039
    %v1111 = vpop.f32.mrb[0].mxu0
    %v1112 = vadd.f32 0.0, %v1111
    %v1113 = vpop.f32.mrb[0].mxu0
    %v1114 = vadd.f32 0.0, %v1113
    %1115 = vdwg.mxu0
    %1116 = vmatprep.subr.mxu0 %v453
    %1117 = vmatpush1.msra.mxu0 %v452
    %1118 = vmatprep.subr.mxu0 %v457
    %1119 = vmatpush1.msra.mxu0 %v456
    %1120 = vmatprep.subr.mxu0 %v461
    %1121 = vmatpush1.msra.mxu0 %v460
    %1122 = vmatprep.subr.mxu0 %v465
    %1123 = vmatpush1.msra.mxu0 %v464
    %1124 = vmatprep.subr.mxu0 %v469
    %1125 = vmatpush1.msra.mxu0 %v468
    %1126 = vmatprep.subr.mxu0 %v473
    %1127 = vmatpush1.msra.mxu0 %v472
    %1128 = vmatprep.subr.mxu0 %v477
    %1129 = vmatpush1.msra.mxu0 %v476
    %1130 = vmatprep.subr.mxu0 %v481
    %1131 = vmatpush1.msra.mxu0 %v480
    %1132 = vmatprep.subr.mxu0 %v485
    %1133 = vmatpush1.msra.mxu0 %v484
    %1134 = vmatprep.subr.mxu0 %v489
    %1135 = vmatpush1.msra.mxu0 %v488
    %1136 = vmatprep.subr.mxu0 %v493
    %1137 = vmatpush1.msra.mxu0 %v492
    %1138 = vmatprep.subr.mxu0 %v497
    %1139 = vmatpush1.msra.mxu0 %v496
    %1140 = vmatprep.subr.mxu0 %v501
    %1141 = vmatpush1.msra.mxu0 %v500
    %1142 = vmatprep.subr.mxu0 %v505
    %1143 = vmatpush1.msra.mxu0 %v504
    %1144 = vmatprep.subr.mxu0 %v509
    %1145 = vmatpush1.msra.mxu0 %v508
    %1146 = vmatprep.subr.mxu0 %v513
    %1147 = vmatpush1.msra.mxu0 %v512
    %1148 = vmatprep.subr.mxu0 0.0
    %1149 = vmatpush1.msra.mxu0 0.0
    %1150 = vmatprep.subr.mxu0 0.0
    %1151 = vmatpush1.msra.mxu0 0.0
    %1152 = vmatprep.subr.mxu0 0.0
    %1153 = vmatpush1.msra.mxu0 0.0
    %1154 = vmatprep.subr.mxu0 0.0
    %1155 = vmatpush1.msra.mxu0 0.0
    %1156 = vmatprep.subr.mxu0 0.0
    %1157 = vmatpush1.msra.mxu0 0.0
    %1158 = vmatprep.subr.mxu0 0.0
    %1159 = vmatpush1.msra.mxu0 0.0
    %1160 = vmatprep.subr.mxu0 0.0
    %1161 = vmatpush1.msra.mxu0 0.0
    %1162 = vmatprep.subr.mxu0 0.0
    %1163 = vmatpush1.msra.mxu0 0.0
    %1164 = vmatprep.subr.mxu0 0.0
    %1165 = vmatpush1.msra.mxu0 0.0
    %1166 = vmatprep.subr.mxu0 0.0
    %1167 = vmatpush1.msra.mxu0 0.0
    %1168 = vmatprep.subr.mxu0 0.0
    %1169 = vmatpush1.msra.mxu0 0.0
    %1170 = vmatprep.subr.mxu0 0.0
    %1171 = vmatpush1.msra.mxu0 0.0
    %1172 = vmatprep.subr.mxu0 0.0
    %1173 = vmatpush1.msra.mxu0 0.0
    %1174 = vmatprep.subr.mxu0 0.0
    %1175 = vmatpush1.msra.mxu0 0.0
    %1176 = vmatprep.subr.mxu0 0.0
    %1177 = vmatpush1.msra.mxu0 0.0
    %1178 = vmatprep.subr.mxu0 0.0
    %1179 = vmatpush1.msra.mxu0 0.0
    %1180 = vmatprep.mubr.f32.mxu0 0.0
    %1181 = vmatmul.mubr.f32.gmra.mrb[0].mxu0 %v1039
    %v1182 = vpop.f32.mrb[0].mxu0
    %v1183 = vadd.f32 0.0, %v1182
    %v1184 = vpop.f32.mrb[0].mxu0
    %v1185 = vadd.f32 0.0, %v1184
    %1186 = vdwg.mxu0
    %v1187 = vadd.f32 %v1041, %v1112
    %v1188 = vadd.f32 %v1042, %v1114
    %v1189 = vadd.f32 %v1043, %v1183
    %v1190 = vadd.f32 %v1044, %v1185
    %v1191 = vxor.u32 %v1187, 2147483648
    %v1192 = vmul.f32 %v1191, 1.442695
    %v1193 = vpow.pop %v1192
    %v1194 = vadd.f32 %v1193, 1.0
    %v1195 = vrcp.pop %v1194
    %v1196 = vmul.f32 1.0, %v1195
    %v1197 = vxor.u32 %v1188, 2147483648
    %v1198 = vmul.f32 %v1197, 1.442695
    %v1199 = vpow.pop %v1198
    %v1200 = vadd.f32 %v1199, 1.0
    %v1201 = vrcp.pop %v1200
    %v1202 = vmul.f32 1.0, %v1201
    %v1203 = vtanh.pop %v1189
    %v1204 = vxor.u32 %v1190, 2147483648
    %v1205 = vmul.f32 %v1204, 1.442695
    %v1206 = vpow.pop %v1205
    %v1207 = vadd.f32 %v1206, 1.0
    %v1208 = vrcp.pop %v1207
    %v1209 = vmul.f32 1.0, %v1208
    %v1210 = vmul.f32 %v1202, %v1037
    %v1211 = vmul.f32 %v1196, %v1203
    %v1212 = vadd.f32 %v1210, %v1211
    %v1213 = vtanh.pop %v1212
    %v1214 = vmul.f32 %v1209, %v1213
    %s1215 = scalar_lea.vmem [#allocation4], 128
    %v1216 = vld [vmem:[%s1215] sm:$0xff]
    %v1217 = vld [vmem:[%s1215 + $0x8] sm:$0xff]
    %v1218 = vld [vmem:[%s1215 + $0x10] sm:$0xff]
    %v1219 = vld [vmem:[%s1215 + $0x18] sm:$0xff]
    %1220 = vmatprep.subr.mxu0 %v451
    %1221 = vmatpush1.msra.mxu0 %v450
    %1222 = vmatprep.subr.mxu0 %v455
    %1223 = vmatpush1.msra.mxu0 %v454
    %1224 = vmatprep.subr.mxu0 %v459
    %1225 = vmatpush1.msra.mxu0 %v458
    %1226 = vmatprep.subr.mxu0 %v463
    %1227 = vmatpush1.msra.mxu0 %v462
    %1228 = vmatprep.subr.mxu0 %v467
    %1229 = vmatpush1.msra.mxu0 %v466
    %1230 = vmatprep.subr.mxu0 %v471
    %1231 = vmatpush1.msra.mxu0 %v470
    %1232 = vmatprep.subr.mxu0 %v475
    %1233 = vmatpush1.msra.mxu0 %v474
    %1234 = vmatprep.subr.mxu0 %v479
    %1235 = vmatpush1.msra.mxu0 %v478
    %1236 = vmatprep.subr.mxu0 %v483
    %1237 = vmatpush1.msra.mxu0 %v482
    %1238 = vmatprep.subr.mxu0 %v487
    %1239 = vmatpush1.msra.mxu0 %v486
    %1240 = vmatprep.subr.mxu0 %v491
    %1241 = vmatpush1.msra.mxu0 %v490
    %1242 = vmatprep.subr.mxu0 %v495
    %1243 = vmatpush1.msra.mxu0 %v494
    %1244 = vmatprep.subr.mxu0 %v499
    %1245 = vmatpush1.msra.mxu0 %v498
    %1246 = vmatprep.subr.mxu0 %v503
    %1247 = vmatpush1.msra.mxu0 %v502
    %1248 = vmatprep.subr.mxu0 %v507
    %1249 = vmatpush1.msra.mxu0 %v506
    %1250 = vmatprep.subr.mxu0 %v511
    %1251 = vmatpush1.msra.mxu0 %v510
    %1252 = vmatprep.subr.mxu0 0.0
    %1253 = vmatpush1.msra.mxu0 0.0
    %1254 = vmatprep.subr.mxu0 0.0
    %1255 = vmatpush1.msra.mxu0 0.0
    %1256 = vmatprep.subr.mxu0 0.0
    %1257 = vmatpush1.msra.mxu0 0.0
    %1258 = vmatprep.subr.mxu0 0.0
    %1259 = vmatpush1.msra.mxu0 0.0
    %1260 = vmatprep.subr.mxu0 0.0
    %1261 = vmatpush1.msra.mxu0 0.0
    %1262 = vmatprep.subr.mxu0 0.0
    %1263 = vmatpush1.msra.mxu0 0.0
    %1264 = vmatprep.subr.mxu0 0.0
    %1265 = vmatpush1.msra.mxu0 0.0
    %1266 = vmatprep.subr.mxu0 0.0
    %1267 = vmatpush1.msra.mxu0 0.0
    %1268 = vmatprep.subr.mxu0 0.0
    %1269 = vmatpush1.msra.mxu0 0.0
    %1270 = vmatprep.subr.mxu0 0.0
    %1271 = vmatpush1.msra.mxu0 0.0
    %1272 = vmatprep.subr.mxu0 0.0
    %1273 = vmatpush1.msra.mxu0 0.0
    %1274 = vmatprep.subr.mxu0 0.0
    %1275 = vmatpush1.msra.mxu0 0.0
    %1276 = vmatprep.subr.mxu0 0.0
    %1277 = vmatpush1.msra.mxu0 0.0
    %1278 = vmatprep.subr.mxu0 0.0
    %1279 = vmatpush1.msra.mxu0 0.0
    %1280 = vmatprep.subr.mxu0 0.0
    %1281 = vmatpush1.msra.mxu0 0.0
    %1282 = vmatprep.subr.mxu0 0.0
    %1283 = vmatpush1.msra.mxu0 0.0
    %1284 = vmatprep.mubr.f32.mxu0 0.0
    %1285 = vmatmul.mubr.f32.gmra.mrb[0].mxu0 %v1214
    %v1286 = vpop.f32.mrb[0].mxu0
    %v1287 = vadd.f32 0.0, %v1286
    %v1288 = vpop.f32.mrb[0].mxu0
    %v1289 = vadd.f32 0.0, %v1288
    %1290 = vdwg.mxu0
    %1291 = vmatprep.subr.mxu0 %v453
    %1292 = vmatpush1.msra.mxu0 %v452
    %1293 = vmatprep.subr.mxu0 %v457
    %1294 = vmatpush1.msra.mxu0 %v456
    %1295 = vmatprep.subr.mxu0 %v461
    %1296 = vmatpush1.msra.mxu0 %v460
    %1297 = vmatprep.subr.mxu0 %v465
    %1298 = vmatpush1.msra.mxu0 %v464
    %1299 = vmatprep.subr.mxu0 %v469
    %1300 = vmatpush1.msra.mxu0 %v468
    %1301 = vmatprep.subr.mxu0 %v473
    %1302 = vmatpush1.msra.mxu0 %v472
    %1303 = vmatprep.subr.mxu0 %v477
    %1304 = vmatpush1.msra.mxu0 %v476
    %1305 = vmatprep.subr.mxu0 %v481
    %1306 = vmatpush1.msra.mxu0 %v480
    %1307 = vmatprep.subr.mxu0 %v485
    %1308 = vmatpush1.msra.mxu0 %v484
    %1309 = vmatprep.subr.mxu0 %v489
    %1310 = vmatpush1.msra.mxu0 %v488
    %1311 = vmatprep.subr.mxu0 %v493
    %1312 = vmatpush1.msra.mxu0 %v492
    %1313 = vmatprep.subr.mxu0 %v497
    %1314 = vmatpush1.msra.mxu0 %v496
    %1315 = vmatprep.subr.mxu0 %v501
    %1316 = vmatpush1.msra.mxu0 %v500
    %1317 = vmatprep.subr.mxu0 %v505
    %1318 = vmatpush1.msra.mxu0 %v504
    %1319 = vmatprep.subr.mxu0 %v509
    %1320 = vmatpush1.msra.mxu0 %v508
    %1321 = vmatprep.subr.mxu0 %v513
    %1322 = vmatpush1.msra.mxu0 %v512
    %1323 = vmatprep.subr.mxu0 0.0
    %1324 = vmatpush1.msra.mxu0 0.0
    %1325 = vmatprep.subr.mxu0 0.0
    %1326 = vmatpush1.msra.mxu0 0.0
    %1327 = vmatprep.subr.mxu0 0.0
    %1328 = vmatpush1.msra.mxu0 0.0
    %1329 = vmatprep.subr.mxu0 0.0
    %1330 = vmatpush1.msra.mxu0 0.0
    %1331 = vmatprep.subr.mxu0 0.0
    %1332 = vmatpush1.msra.mxu0 0.0
    %1333 = vmatprep.subr.mxu0 0.0
    %1334 = vmatpush1.msra.mxu0 0.0
    %1335 = vmatprep.subr.mxu0 0.0
    %1336 = vmatpush1.msra.mxu0 0.0
    %1337 = vmatprep.subr.mxu0 0.0
    %1338 = vmatpush1.msra.mxu0 0.0
    %1339 = vmatprep.subr.mxu0 0.0
    %1340 = vmatpush1.msra.mxu0 0.0
    %1341 = vmatprep.subr.mxu0 0.0
    %1342 = vmatpush1.msra.mxu0 0.0
    %1343 = vmatprep.subr.mxu0 0.0
    %1344 = vmatpush1.msra.mxu0 0.0
    %1345 = vmatprep.subr.mxu0 0.0
    %1346 = vmatpush1.msra.mxu0 0.0
    %1347 = vmatprep.subr.mxu0 0.0
    %1348 = vmatpush1.msra.mxu0 0.0
    %1349 = vmatprep.subr.mxu0 0.0
    %1350 = vmatpush1.msra.mxu0 0.0
    %1351 = vmatprep.subr.mxu0 0.0
    %1352 = vmatpush1.msra.mxu0 0.0
    %1353 = vmatprep.subr.mxu0 0.0
    %1354 = vmatpush1.msra.mxu0 0.0
    %1355 = vmatprep.mubr.f32.mxu0 0.0
    %1356 = vmatmul.mubr.f32.gmra.mrb[0].mxu0 %v1214
    %v1357 = vpop.f32.mrb[0].mxu0
    %v1358 = vadd.f32 0.0, %v1357
    %v1359 = vpop.f32.mrb[0].mxu0
    %v1360 = vadd.f32 0.0, %v1359
    %1361 = vdwg.mxu0
    %v1362 = vadd.f32 %v1216, %v1287
    %v1363 = vadd.f32 %v1217, %v1289
    %v1364 = vadd.f32 %v1218, %v1358
    %v1365 = vadd.f32 %v1219, %v1360
    %v1366 = vxor.u32 %v1362, 2147483648
    %v1367 = vmul.f32 %v1366, 1.442695
    %v1368 = vpow.pop %v1367
    %v1369 = vadd.f32 %v1368, 1.0
    %v1370 = vrcp.pop %v1369
    %v1371 = vmul.f32 1.0, %v1370
    %v1372 = vxor.u32 %v1363, 2147483648
    %v1373 = vmul.f32 %v1372, 1.442695
    %v1374 = vpow.pop %v1373
    %v1375 = vadd.f32 %v1374, 1.0
    %v1376 = vrcp.pop %v1375
    %v1377 = vmul.f32 1.0, %v1376
    %v1378 = vtanh.pop %v1364
    %v1379 = vxor.u32 %v1365, 2147483648
    %v1380 = vmul.f32 %v1379, 1.442695
    %v1381 = vpow.pop %v1380
    %v1382 = vadd.f32 %v1381, 1.0
    %v1383 = vrcp.pop %v1382
    %v1384 = vmul.f32 1.0, %v1383
    %v1385 = vmul.f32 %v1377, %v1212
    %v1386 = vmul.f32 %v1371, %v1378
    %v1387 = vadd.f32 %v1385, %v1386
    %v1388 = vtanh.pop %v1387
    %v1389 = vmul.f32 %v1384, %v1388
    %s1390 = scalar_lea.vmem [#allocation4], 160
    %v1391 = vld [vmem:[%s1390] sm:$0xff]
    %v1392 = vld [vmem:[%s1390 + $0x8] sm:$0xff]
    %v1393 = vld [vmem:[%s1390 + $0x10] sm:$0xff]
    %v1394 = vld [vmem:[%s1390 + $0x18] sm:$0xff]
    %1395 = vmatprep.subr.mxu0 %v451
    %1396 = vmatpush1.msra.mxu0 %v450
    %1397 = vmatprep.subr.mxu0 %v455
    %1398 = vmatpush1.msra.mxu0 %v454
    %1399 = vmatprep.subr.mxu0 %v459
    %1400 = vmatpush1.msra.mxu0 %v458
    %1401 = vmatprep.subr.mxu0 %v463
    %1402 = vmatpush1.msra.mxu0 %v462
    %1403 = vmatprep.subr.mxu0 %v467
    %1404 = vmatpush1.msra.mxu0 %v466
    %1405 = vmatprep.subr.mxu0 %v471
    %1406 = vmatpush1.msra.mxu0 %v470
    %1407 = vmatprep.subr.mxu0 %v475
    %1408 = vmatpush1.msra.mxu0 %v474
    %1409 = vmatprep.subr.mxu0 %v479
    %1410 = vmatpush1.msra.mxu0 %v478
    %1411 = vmatprep.subr.mxu0 %v483
    %1412 = vmatpush1.msra.mxu0 %v482
    %1413 = vmatprep.subr.mxu0 %v487
    %1414 = vmatpush1.msra.mxu0 %v486
    %1415 = vmatprep.subr.mxu0 %v491
    %1416 = vmatpush1.msra.mxu0 %v490
    %1417 = vmatprep.subr.mxu0 %v495
    %1418 = vmatpush1.msra.mxu0 %v494
    %1419 = vmatprep.subr.mxu0 %v499
    %1420 = vmatpush1.msra.mxu0 %v498
    %1421 = vmatprep.subr.mxu0 %v503
    %1422 = vmatpush1.msra.mxu0 %v502
    %1423 = vmatprep.subr.mxu0 %v507
    %1424 = vmatpush1.msra.mxu0 %v506
    %1425 = vmatprep.subr.mxu0 %v511
    %1426 = vmatpush1.msra.mxu0 %v510
    %1427 = vmatprep.subr.mxu0 0.0
    %1428 = vmatpush1.msra.mxu0 0.0
    %1429 = vmatprep.subr.mxu0 0.0
    %1430 = vmatpush1.msra.mxu0 0.0
    %1431 = vmatprep.subr.mxu0 0.0
    %1432 = vmatpush1.msra.mxu0 0.0
    %1433 = vmatprep.subr.mxu0 0.0
    %1434 = vmatpush1.msra.mxu0 0.0
    %1435 = vmatprep.subr.mxu0 0.0
    %1436 = vmatpush1.msra.mxu0 0.0
    %1437 = vmatprep.subr.mxu0 0.0
    %1438 = vmatpush1.msra.mxu0 0.0
    %1439 = vmatprep.subr.mxu0 0.0
    %1440 = vmatpush1.msra.mxu0 0.0
    %1441 = vmatprep.subr.mxu0 0.0
    %1442 = vmatpush1.msra.mxu0 0.0
    %1443 = vmatprep.subr.mxu0 0.0
    %1444 = vmatpush1.msra.mxu0 0.0
    %1445 = vmatprep.subr.mxu0 0.0
    %1446 = vmatpush1.msra.mxu0 0.0
    %1447 = vmatprep.subr.mxu0 0.0
    %1448 = vmatpush1.msra.mxu0 0.0
    %1449 = vmatprep.subr.mxu0 0.0
    %1450 = vmatpush1.msra.mxu0 0.0
    %1451 = vmatprep.subr.mxu0 0.0
    %1452 = vmatpush1.msra.mxu0 0.0
    %1453 = vmatprep.subr.mxu0 0.0
    %1454 = vmatpush1.msra.mxu0 0.0
    %1455 = vmatprep.subr.mxu0 0.0
    %1456 = vmatpush1.msra.mxu0 0.0
    %1457 = vmatprep.subr.mxu0 0.0
    %1458 = vmatpush1.msra.mxu0 0.0
    %1459 = vmatprep.mubr.f32.mxu0 0.0
    %1460 = vmatmul.mubr.f32.gmra.mrb[0].mxu0 %v1389
    %v1461 = vpop.f32.mrb[0].mxu0
    %v1462 = vadd.f32 0.0, %v1461
    %v1463 = vpop.f32.mrb[0].mxu0
    %v1464 = vadd.f32 0.0, %v1463
    %1465 = vdwg.mxu0
    %1466 = vmatprep.subr.mxu0 %v453
    %1467 = vmatpush1.msra.mxu0 %v452
    %1468 = vmatprep.subr.mxu0 %v457
    %1469 = vmatpush1.msra.mxu0 %v456
    %1470 = vmatprep.subr.mxu0 %v461
    %1471 = vmatpush1.msra.mxu0 %v460
    %1472 = vmatprep.subr.mxu0 %v465
    %1473 = vmatpush1.msra.mxu0 %v464
    %1474 = vmatprep.subr.mxu0 %v469
    %1475 = vmatpush1.msra.mxu0 %v468
    %1476 = vmatprep.subr.mxu0 %v473
    %1477 = vmatpush1.msra.mxu0 %v472
    %1478 = vmatprep.subr.mxu0 %v477
    %1479 = vmatpush1.msra.mxu0 %v476
    %1480 = vmatprep.subr.mxu0 %v481
    %1481 = vmatpush1.msra.mxu0 %v480
    %1482 = vmatprep.subr.mxu0 %v485
    %1483 = vmatpush1.msra.mxu0 %v484
    %1484 = vmatprep.subr.mxu0 %v489
    %1485 = vmatpush1.msra.mxu0 %v488
    %1486 = vmatprep.subr.mxu0 %v493
    %1487 = vmatpush1.msra.mxu0 %v492
    %1488 = vmatprep.subr.mxu0 %v497
    %1489 = vmatpush1.msra.mxu0 %v496
    %1490 = vmatprep.subr.mxu0 %v501
    %1491 = vmatpush1.msra.mxu0 %v500
    %1492 = vmatprep.subr.mxu0 %v505
    %1493 = vmatpush1.msra.mxu0 %v504
    %1494 = vmatprep.subr.mxu0 %v509
    %1495 = vmatpush1.msra.mxu0 %v508
    %1496 = vmatprep.subr.mxu0 %v513
    %1497 = vmatpush1.msra.mxu0 %v512
    %1498 = vmatprep.subr.mxu0 0.0
    %1499 = vmatpush1.msra.mxu0 0.0
    %1500 = vmatprep.subr.mxu0 0.0
    %1501 = vmatpush1.msra.mxu0 0.0
    %1502 = vmatprep.subr.mxu0 0.0
    %1503 = vmatpush1.msra.mxu0 0.0
    %1504 = vmatprep.subr.mxu0 0.0
    %1505 = vmatpush1.msra.mxu0 0.0
    %1506 = vmatprep.subr.mxu0 0.0
    %1507 = vmatpush1.msra.mxu0 0.0
    %1508 = vmatprep.subr.mxu0 0.0
    %1509 = vmatpush1.msra.mxu0 0.0
    %1510 = vmatprep.subr.mxu0 0.0
    %1511 = vmatpush1.msra.mxu0 0.0
    %1512 = vmatprep.subr.mxu0 0.0
    %1513 = vmatpush1.msra.mxu0 0.0
    %1514 = vmatprep.subr.mxu0 0.0
    %1515 = vmatpush1.msra.mxu0 0.0
    %1516 = vmatprep.subr.mxu0 0.0
    %1517 = vmatpush1.msra.mxu0 0.0
    %1518 = vmatprep.subr.mxu0 0.0
    %1519 = vmatpush1.msra.mxu0 0.0
    %1520 = vmatprep.subr.mxu0 0.0
    %1521 = vmatpush1.msra.mxu0 0.0
    %1522 = vmatprep.subr.mxu0 0.0
    %1523 = vmatpush1.msra.mxu0 0.0
    %1524 = vmatprep.subr.mxu0 0.0
    %1525 = vmatpush1.msra.mxu0 0.0
    %1526 = vmatprep.subr.mxu0 0.0
    %1527 = vmatpush1.msra.mxu0 0.0
    %1528 = vmatprep.subr.mxu0 0.0
    %1529 = vmatpush1.msra.mxu0 0.0
    %1530 = vmatprep.mubr.f32.mxu0 0.0
    %1531 = vmatmul.mubr.f32.gmra.mrb[0].mxu0 %v1389
    %v1532 = vpop.f32.mrb[0].mxu0
    %v1533 = vadd.f32 0.0, %v1532
    %v1534 = vpop.f32.mrb[0].mxu0
    %v1535 = vadd.f32 0.0, %v1534
    %1536 = vdwg.mxu0
    %v1537 = vadd.f32 %v1391, %v1462
    %v1538 = vadd.f32 %v1392, %v1464
    %v1539 = vadd.f32 %v1393, %v1533
    %v1540 = vadd.f32 %v1394, %v1535
    %v1541 = vxor.u32 %v1537, 2147483648
    %v1542 = vmul.f32 %v1541, 1.442695
    %v1543 = vpow.pop %v1542
    %v1544 = vadd.f32 %v1543, 1.0
    %v1545 = vrcp.pop %v1544
    %v1546 = vmul.f32 1.0, %v1545
    %v1547 = vxor.u32 %v1538, 2147483648
    %v1548 = vmul.f32 %v1547, 1.442695
    %v1549 = vpow.pop %v1548
    %v1550 = vadd.f32 %v1549, 1.0
    %v1551 = vrcp.pop %v1550
    %v1552 = vmul.f32 1.0, %v1551
    %v1553 = vtanh.pop %v1539
    %v1554 = vxor.u32 %v1540, 2147483648
    %v1555 = vmul.f32 %v1554, 1.442695
    %v1556 = vpow.pop %v1555
    %v1557 = vadd.f32 %v1556, 1.0
    %v1558 = vrcp.pop %v1557
    %v1559 = vmul.f32 1.0, %v1558
    %v1560 = vmul.f32 %v1552, %v1387
    %v1561 = vmul.f32 %v1546, %v1553
    %v1562 = vadd.f32 %v1560, %v1561
    %v1563 = vtanh.pop %v1562
    %v1564 = vmul.f32 %v1559, %v1563
    %s1565 = scalar_lea.vmem [#allocation4], 192
    %v1566 = vld [vmem:[%s1565] sm:$0xff]
    %v1567 = vld [vmem:[%s1565 + $0x8] sm:$0xff]
    %v1568 = vld [vmem:[%s1565 + $0x10] sm:$0xff]
    %v1569 = vld [vmem:[%s1565 + $0x18] sm:$0xff]
    %1570 = vmatprep.subr.mxu0 %v451
    %1571 = vmatpush1.msra.mxu0 %v450
    %1572 = vmatprep.subr.mxu0 %v455
    %1573 = vmatpush1.msra.mxu0 %v454
    %1574 = vmatprep.subr.mxu0 %v459
    %1575 = vmatpush1.msra.mxu0 %v458
    %1576 = vmatprep.subr.mxu0 %v463
    %1577 = vmatpush1.msra.mxu0 %v462
    %1578 = vmatprep.subr.mxu0 %v467
    %1579 = vmatpush1.msra.mxu0 %v466
    %1580 = vmatprep.subr.mxu0 %v471
    %1581 = vmatpush1.msra.mxu0 %v470
    %1582 = vmatprep.subr.mxu0 %v475
    %1583 = vmatpush1.msra.mxu0 %v474
    %1584 = vmatprep.subr.mxu0 %v479
    %1585 = vmatpush1.msra.mxu0 %v478
    %1586 = vmatprep.subr.mxu0 %v483
    %1587 = vmatpush1.msra.mxu0 %v482
    %1588 = vmatprep.subr.mxu0 %v487
    %1589 = vmatpush1.msra.mxu0 %v486
    %1590 = vmatprep.subr.mxu0 %v491
    %1591 = vmatpush1.msra.mxu0 %v490
    %1592 = vmatprep.subr.mxu0 %v495
    %1593 = vmatpush1.msra.mxu0 %v494
    %1594 = vmatprep.subr.mxu0 %v499
    %1595 = vmatpush1.msra.mxu0 %v498
    %1596 = vmatprep.subr.mxu0 %v503
    %1597 = vmatpush1.msra.mxu0 %v502
    %1598 = vmatprep.subr.mxu0 %v507
    %1599 = vmatpush1.msra.mxu0 %v506
    %1600 = vmatprep.subr.mxu0 %v511
    %1601 = vmatpush1.msra.mxu0 %v510
    %1602 = vmatprep.subr.mxu0 0.0
    %1603 = vmatpush1.msra.mxu0 0.0
    %1604 = vmatprep.subr.mxu0 0.0
    %1605 = vmatpush1.msra.mxu0 0.0
    %1606 = vmatprep.subr.mxu0 0.0
    %1607 = vmatpush1.msra.mxu0 0.0
    %1608 = vmatprep.subr.mxu0 0.0
    %1609 = vmatpush1.msra.mxu0 0.0
    %1610 = vmatprep.subr.mxu0 0.0
    %1611 = vmatpush1.msra.mxu0 0.0
    %1612 = vmatprep.subr.mxu0 0.0
    %1613 = vmatpush1.msra.mxu0 0.0
    %1614 = vmatprep.subr.mxu0 0.0
    %1615 = vmatpush1.msra.mxu0 0.0
    %1616 = vmatprep.subr.mxu0 0.0
    %1617 = vmatpush1.msra.mxu0 0.0
    %1618 = vmatprep.subr.mxu0 0.0
    %1619 = vmatpush1.msra.mxu0 0.0
    %1620 = vmatprep.subr.mxu0 0.0
    %1621 = vmatpush1.msra.mxu0 0.0
    %1622 = vmatprep.subr.mxu0 0.0
    %1623 = vmatpush1.msra.mxu0 0.0
    %1624 = vmatprep.subr.mxu0 0.0
    %1625 = vmatpush1.msra.mxu0 0.0
    %1626 = vmatprep.subr.mxu0 0.0
    %1627 = vmatpush1.msra.mxu0 0.0
    %1628 = vmatprep.subr.mxu0 0.0
    %1629 = vmatpush1.msra.mxu0 0.0
    %1630 = vmatprep.subr.mxu0 0.0
    %1631 = vmatpush1.msra.mxu0 0.0
    %1632 = vmatprep.subr.mxu0 0.0
    %1633 = vmatpush1.msra.mxu0 0.0
    %1634 = vmatprep.mubr.f32.mxu0 0.0
    %1635 = vmatmul.mubr.f32.gmra.mrb[0].mxu0 %v1564
    %v1636 = vpop.f32.mrb[0].mxu0
    %v1637 = vadd.f32 0.0, %v1636
    %v1638 = vpop.f32.mrb[0].mxu0
    %v1639 = vadd.f32 0.0, %v1638
    %1640 = vdwg.mxu0
    %1641 = vmatprep.subr.mxu0 %v453
    %1642 = vmatpush1.msra.mxu0 %v452
    %1643 = vmatprep.subr.mxu0 %v457
    %1644 = vmatpush1.msra.mxu0 %v456
    %1645 = vmatprep.subr.mxu0 %v461
    %1646 = vmatpush1.msra.mxu0 %v460
    %1647 = vmatprep.subr.mxu0 %v465
    %1648 = vmatpush1.msra.mxu0 %v464
    %1649 = vmatprep.subr.mxu0 %v469
    %1650 = vmatpush1.msra.mxu0 %v468
    %1651 = vmatprep.subr.mxu0 %v473
    %1652 = vmatpush1.msra.mxu0 %v472
    %1653 = vmatprep.subr.mxu0 %v477
    %1654 = vmatpush1.msra.mxu0 %v476
    %1655 = vmatprep.subr.mxu0 %v481
    %1656 = vmatpush1.msra.mxu0 %v480
    %1657 = vmatprep.subr.mxu0 %v485
    %1658 = vmatpush1.msra.mxu0 %v484
    %1659 = vmatprep.subr.mxu0 %v489
    %1660 = vmatpush1.msra.mxu0 %v488
    %1661 = vmatprep.subr.mxu0 %v493
    %1662 = vmatpush1.msra.mxu0 %v492
    %1663 = vmatprep.subr.mxu0 %v497
    %1664 = vmatpush1.msra.mxu0 %v496
    %1665 = vmatprep.subr.mxu0 %v501
    %1666 = vmatpush1.msra.mxu0 %v500
    %1667 = vmatprep.subr.mxu0 %v505
    %1668 = vmatpush1.msra.mxu0 %v504
    %1669 = vmatprep.subr.mxu0 %v509
    %1670 = vmatpush1.msra.mxu0 %v508
    %1671 = vmatprep.subr.mxu0 %v513
    %1672 = vmatpush1.msra.mxu0 %v512
    %1673 = vmatprep.subr.mxu0 0.0
    %1674 = vmatpush1.msra.mxu0 0.0
    %1675 = vmatprep.subr.mxu0 0.0
    %1676 = vmatpush1.msra.mxu0 0.0
    %1677 = vmatprep.subr.mxu0 0.0
    %1678 = vmatpush1.msra.mxu0 0.0
    %1679 = vmatprep.subr.mxu0 0.0
    %1680 = vmatpush1.msra.mxu0 0.0
    %1681 = vmatprep.subr.mxu0 0.0
    %1682 = vmatpush1.msra.mxu0 0.0
    %1683 = vmatprep.subr.mxu0 0.0
    %1684 = vmatpush1.msra.mxu0 0.0
    %1685 = vmatprep.subr.mxu0 0.0
    %1686 = vmatpush1.msra.mxu0 0.0
    %1687 = vmatprep.subr.mxu0 0.0
    %1688 = vmatpush1.msra.mxu0 0.0
    %1689 = vmatprep.subr.mxu0 0.0
    %1690 = vmatpush1.msra.mxu0 0.0
    %1691 = vmatprep.subr.mxu0 0.0
    %1692 = vmatpush1.msra.mxu0 0.0
    %1693 = vmatprep.subr.mxu0 0.0
    %1694 = vmatpush1.msra.mxu0 0.0
    %1695 = vmatprep.subr.mxu0 0.0
    %1696 = vmatpush1.msra.mxu0 0.0
    %1697 = vmatprep.subr.mxu0 0.0
    %1698 = vmatpush1.msra.mxu0 0.0
    %1699 = vmatprep.subr.mxu0 0.0
    %1700 = vmatpush1.msra.mxu0 0.0
    %1701 = vmatprep.subr.mxu0 0.0
    %1702 = vmatpush1.msra.mxu0 0.0
    %1703 = vmatprep.subr.mxu0 0.0
    %1704 = vmatpush1.msra.mxu0 0.0
    %1705 = vmatprep.mubr.f32.mxu0 0.0
    %1706 = vmatmul.mubr.f32.gmra.mrb[0].mxu0 %v1564
    %v1707 = vpop.f32.mrb[0].mxu0
    %v1708 = vadd.f32 0.0, %v1707
    %v1709 = vpop.f32.mrb[0].mxu0
    %v1710 = vadd.f32 0.0, %v1709
    %1711 = vdwg.mxu0
    %v1712 = vadd.f32 %v1566, %v1637
    %v1713 = vadd.f32 %v1567, %v1639
    %v1714 = vadd.f32 %v1568, %v1708
    %v1715 = vadd.f32 %v1569, %v1710
    %v1716 = vxor.u32 %v1712, 2147483648
    %v1717 = vmul.f32 %v1716, 1.442695
    %v1718 = vpow.pop %v1717
    %v1719 = vadd.f32 %v1718, 1.0
    %v1720 = vrcp.pop %v1719
    %v1721 = vmul.f32 1.0, %v1720
    %v1722 = vxor.u32 %v1713, 2147483648
    %v1723 = vmul.f32 %v1722, 1.442695
    %v1724 = vpow.pop %v1723
    %v1725 = vadd.f32 %v1724, 1.0
    %v1726 = vrcp.pop %v1725
    %v1727 = vmul.f32 1.0, %v1726
    %v1728 = vtanh.pop %v1714
    %v1729 = vxor.u32 %v1715, 2147483648
    %v1730 = vmul.f32 %v1729, 1.442695
    %v1731 = vpow.pop %v1730
    %v1732 = vadd.f32 %v1731, 1.0
    %v1733 = vrcp.pop %v1732
    %v1734 = vmul.f32 1.0, %v1733
    %v1735 = vmul.f32 %v1727, %v1562
    %v1736 = vmul.f32 %v1721, %v1728
    %v1737 = vadd.f32 %v1735, %v1736
    %v1738 = vtanh.pop %v1737
    %v1739 = vmul.f32 %v1734, %v1738
    %s1740 = scalar_lea.vmem [#allocation4], 224
    %v1741 = vld [vmem:[%s1740] sm:$0xff]
    %v1742 = vld [vmem:[%s1740 + $0x8] sm:$0xff]
    %v1743 = vld [vmem:[%s1740 + $0x10] sm:$0xff]
    %v1744 = vld [vmem:[%s1740 + $0x18] sm:$0xff]
    %1745 = vmatprep.subr.mxu0 %v451
    %1746 = vmatpush1.msra.mxu0 %v450
    %1747 = vmatprep.subr.mxu0 %v455
    %1748 = vmatpush1.msra.mxu0 %v454
    %1749 = vmatprep.subr.mxu0 %v459
    %1750 = vmatpush1.msra.mxu0 %v458
    %1751 = vmatprep.subr.mxu0 %v463
    %1752 = vmatpush1.msra.mxu0 %v462
    %1753 = vmatprep.subr.mxu0 %v467
    %1754 = vmatpush1.msra.mxu0 %v466
    %1755 = vmatprep.subr.mxu0 %v471
    %1756 = vmatpush1.msra.mxu0 %v470
    %1757 = vmatprep.subr.mxu0 %v475
    %1758 = vmatpush1.msra.mxu0 %v474
    %1759 = vmatprep.subr.mxu0 %v479
    %1760 = vmatpush1.msra.mxu0 %v478
    %1761 = vmatprep.subr.mxu0 %v483
    %1762 = vmatpush1.msra.mxu0 %v482
    %1763 = vmatprep.subr.mxu0 %v487
    %1764 = vmatpush1.msra.mxu0 %v486
    %1765 = vmatprep.subr.mxu0 %v491
    %1766 = vmatpush1.msra.mxu0 %v490
    %1767 = vmatprep.subr.mxu0 %v495
    %1768 = vmatpush1.msra.mxu0 %v494
    %1769 = vmatprep.subr.mxu0 %v499
    %1770 = vmatpush1.msra.mxu0 %v498
    %1771 = vmatprep.subr.mxu0 %v503
    %1772 = vmatpush1.msra.mxu0 %v502
    %1773 = vmatprep.subr.mxu0 %v507
    %1774 = vmatpush1.msra.mxu0 %v506
    %1775 = vmatprep.subr.mxu0 %v511
    %1776 = vmatpush1.msra.mxu0 %v510
    %1777 = vmatprep.subr.mxu0 0.0
    %1778 = vmatpush1.msra.mxu0 0.0
    %1779 = vmatprep.subr.mxu0 0.0
    %1780 = vmatpush1.msra.mxu0 0.0
    %1781 = vmatprep.subr.mxu0 0.0
    %1782 = vmatpush1.msra.mxu0 0.0
    %1783 = vmatprep.subr.mxu0 0.0
    %1784 = vmatpush1.msra.mxu0 0.0
    %1785 = vmatprep.subr.mxu0 0.0
    %1786 = vmatpush1.msra.mxu0 0.0
    %1787 = vmatprep.subr.mxu0 0.0
    %1788 = vmatpush1.msra.mxu0 0.0
    %1789 = vmatprep.subr.mxu0 0.0
    %1790 = vmatpush1.msra.mxu0 0.0
    %1791 = vmatprep.subr.mxu0 0.0
    %1792 = vmatpush1.msra.mxu0 0.0
    %1793 = vmatprep.subr.mxu0 0.0
    %1794 = vmatpush1.msra.mxu0 0.0
    %1795 = vmatprep.subr.mxu0 0.0
    %1796 = vmatpush1.msra.mxu0 0.0
    %1797 = vmatprep.subr.mxu0 0.0
    %1798 = vmatpush1.msra.mxu0 0.0
    %1799 = vmatprep.subr.mxu0 0.0
    %1800 = vmatpush1.msra.mxu0 0.0
    %1801 = vmatprep.subr.mxu0 0.0
    %1802 = vmatpush1.msra.mxu0 0.0
    %1803 = vmatprep.subr.mxu0 0.0
    %1804 = vmatpush1.msra.mxu0 0.0
    %1805 = vmatprep.subr.mxu0 0.0
    %1806 = vmatpush1.msra.mxu0 0.0
    %1807 = vmatprep.subr.mxu0 0.0
    %1808 = vmatpush1.msra.mxu0 0.0
    %1809 = vmatprep.mubr.f32.mxu0 0.0
    %1810 = vmatmul.mubr.f32.gmra.mrb[0].mxu0 %v1739
    %v1811 = vpop.f32.mrb[0].mxu0
    %v1812 = vadd.f32 0.0, %v1811
    %v1813 = vpop.f32.mrb[0].mxu0
    %v1814 = vadd.f32 0.0, %v1813
    %1815 = vdwg.mxu0
    %1816 = vmatprep.subr.mxu0 %v453
    %1817 = vmatpush1.msra.mxu0 %v452
    %1818 = vmatprep.subr.mxu0 %v457
    %1819 = vmatpush1.msra.mxu0 %v456
    %1820 = vmatprep.subr.mxu0 %v461
    %1821 = vmatpush1.msra.mxu0 %v460
    %1822 = vmatprep.subr.mxu0 %v465
    %1823 = vmatpush1.msra.mxu0 %v464
    %1824 = vmatprep.subr.mxu0 %v469
    %1825 = vmatpush1.msra.mxu0 %v468
    %1826 = vmatprep.subr.mxu0 %v473
    %1827 = vmatpush1.msra.mxu0 %v472
    %1828 = vmatprep.subr.mxu0 %v477
    %1829 = vmatpush1.msra.mxu0 %v476
    %1830 = vmatprep.subr.mxu0 %v481
    %1831 = vmatpush1.msra.mxu0 %v480
    %1832 = vmatprep.subr.mxu0 %v485
    %1833 = vmatpush1.msra.mxu0 %v484
    %1834 = vmatprep.subr.mxu0 %v489
    %1835 = vmatpush1.msra.mxu0 %v488
    %1836 = vmatprep.subr.mxu0 %v493
    %1837 = vmatpush1.msra.mxu0 %v492
    %1838 = vmatprep.subr.mxu0 %v497
    %1839 = vmatpush1.msra.mxu0 %v496
    %1840 = vmatprep.subr.mxu0 %v501
    %1841 = vmatpush1.msra.mxu0 %v500
    %1842 = vmatprep.subr.mxu0 %v505
    %1843 = vmatpush1.msra.mxu0 %v504
    %1844 = vmatprep.subr.mxu0 %v509
    %1845 = vmatpush1.msra.mxu0 %v508
    %1846 = vmatprep.subr.mxu0 %v513
    %1847 = vmatpush1.msra.mxu0 %v512
    %1848 = vmatprep.subr.mxu0 0.0
    %1849 = vmatpush1.msra.mxu0 0.0
    %1850 = vmatprep.subr.mxu0 0.0
    %1851 = vmatpush1.msra.mxu0 0.0
    %1852 = vmatprep.subr.mxu0 0.0
    %1853 = vmatpush1.msra.mxu0 0.0
    %1854 = vmatprep.subr.mxu0 0.0
    %1855 = vmatpush1.msra.mxu0 0.0
    %1856 = vmatprep.subr.mxu0 0.0
    %1857 = vmatpush1.msra.mxu0 0.0
    %1858 = vmatprep.subr.mxu0 0.0
    %1859 = vmatpush1.msra.mxu0 0.0
    %1860 = vmatprep.subr.mxu0 0.0
    %1861 = vmatpush1.msra.mxu0 0.0
    %1862 = vmatprep.subr.mxu0 0.0
    %1863 = vmatpush1.msra.mxu0 0.0
    %1864 = vmatprep.subr.mxu0 0.0
    %1865 = vmatpush1.msra.mxu0 0.0
    %1866 = vmatprep.subr.mxu0 0.0
    %1867 = vmatpush1.msra.mxu0 0.0
    %1868 = vmatprep.subr.mxu0 0.0
    %1869 = vmatpush1.msra.mxu0 0.0
    %1870 = vmatprep.subr.mxu0 0.0
    %1871 = vmatpush1.msra.mxu0 0.0
    %1872 = vmatprep.subr.mxu0 0.0
    %1873 = vmatpush1.msra.mxu0 0.0
    %1874 = vmatprep.subr.mxu0 0.0
    %1875 = vmatpush1.msra.mxu0 0.0
    %1876 = vmatprep.subr.mxu0 0.0
    %1877 = vmatpush1.msra.mxu0 0.0
    %1878 = vmatprep.subr.mxu0 0.0
    %1879 = vmatpush1.msra.mxu0 0.0
    %1880 = vmatprep.mubr.f32.mxu0 0.0
    %1881 = vmatmul.mubr.f32.gmra.mrb[0].mxu0 %v1739
    %v1882 = vpop.f32.mrb[0].mxu0
    %v1883 = vadd.f32 0.0, %v1882
    %v1884 = vpop.f32.mrb[0].mxu0
    %v1885 = vadd.f32 0.0, %v1884
    %1886 = vdwg.mxu0
    %v1887 = vadd.f32 %v1741, %v1812
    %v1888 = vadd.f32 %v1742, %v1814
    %v1889 = vadd.f32 %v1743, %v1883
    %v1890 = vadd.f32 %v1744, %v1885
    %v1891 = vxor.u32 %v1887, 2147483648
    %v1892 = vmul.f32 %v1891, 1.442695
    %v1893 = vpow.pop %v1892
    %v1894 = vadd.f32 %v1893, 1.0
    %v1895 = vrcp.pop %v1894
    %v1896 = vmul.f32 1.0, %v1895
    %v1897 = vxor.u32 %v1888, 2147483648
    %v1898 = vmul.f32 %v1897, 1.442695
    %v1899 = vpow.pop %v1898
    %v1900 = vadd.f32 %v1899, 1.0
    %v1901 = vrcp.pop %v1900
    %v1902 = vmul.f32 1.0, %v1901
    %v1903 = vtanh.pop %v1889
    %v1904 = vxor.u32 %v1890, 2147483648
    %v1905 = vmul.f32 %v1904, 1.442695
    %v1906 = vpow.pop %v1905
    %v1907 = vadd.f32 %v1906, 1.0
    %v1908 = vrcp.pop %v1907
    %v1909 = vmul.f32 1.0, %v1908
    %v1910 = vmul.f32 %v1902, %v1737
    %v1911 = vmul.f32 %v1896, %v1903
    %v1912 = vadd.f32 %v1910, %v1911
    %v1913 = vtanh.pop %v1912
    %v1914 = vmul.f32 %v1909, %v1913
    %1915 = vst [vmem:[#allocation2] sm:$0xff] %v1914
    %1916 = vst [vmem:[#allocation3] sm:$0xff] %v1912
    // Predicated region
    $region50: #{lstm_model_forward.3} parent=1 // pred_check
      %p1917 = pneg %p92
    $region51: #{lstm_model_forward.3} parent=1 // pred_check_branch
      %1919 = sbr.rel (%p1917) target = $region53
    $region52: #{lstm_model_forward.3} parent=1 // pred_region
      %v1920 = vld [vmem:[#allocation2] sm:$0xff]
      %v1921 = vld [vmem:[#allocation14] sm:$0xff]
      %v1922 = vld [vmem:[#allocation14 + $0x8] sm:$0xff]
      %v1923 = vld [vmem:[#allocation14 + $0x10] sm:$0xff]
      %v1924 = vld [vmem:[#allocation14 + $0x18] sm:$0xff]
      %v1925 = vld [vmem:[#allocation14 + $0x20] sm:$0xff]
      %v1926 = vld [vmem:[#allocation14 + $0x28] sm:$0xff]
      %v1927 = vld [vmem:[#allocation14 + $0x30] sm:$0xff]
      %v1928 = vld [vmem:[#allocation14 + $0x38] sm:$0xff]
      %v1929 = vld [vmem:[#allocation14 + $0x40] sm:$0xff]
      %v1930 = vld [vmem:[#allocation14 + $0x48] sm:$0xff]
      %v1931 = vld [vmem:[#allocation14 + $0x50] sm:$0xff]
      %v1932 = vld [vmem:[#allocation14 + $0x58] sm:$0xff]
      %v1933 = vld [vmem:[#allocation14 + $0x60] sm:$0xff]
      %v1934 = vld [vmem:[#allocation14 + $0x68] sm:$0xff]
      %v1935 = vld [vmem:[#allocation14 + $0x70] sm:$0xff]
      %v1936 = vld [vmem:[#allocation14 + $0x78] sm:$0xff]
      %v1937 = vld [vmem:[#allocation5] sm:$0x1]
      %v1939 = vlaneseq
      %v1940 = vshrl.u32 %v1939, 7
      %v1941 = vsub.s32 0, %v1940
      %v1942 = vrot.slane %v1937, %v1941
      %1944 = vmatprep.subr.mxu0 0.0
      %1945 = vmatpush1.msra.mxu0 %v1921
      %1946 = vmatprep.subr.mxu0 0.0
      %1947 = vmatpush1.msra.mxu0 %v1922
      %1948 = vmatprep.subr.mxu0 0.0
      %1949 = vmatpush1.msra.mxu0 %v1923
      %1950 = vmatprep.subr.mxu0 0.0
      %1951 = vmatpush1.msra.mxu0 %v1924
      %1952 = vmatprep.subr.mxu0 0.0
      %1953 = vmatpush1.msra.mxu0 %v1925
      %1954 = vmatprep.subr.mxu0 0.0
      %1955 = vmatpush1.msra.mxu0 %v1926
      %1956 = vmatprep.subr.mxu0 0.0
      %1957 = vmatpush1.msra.mxu0 %v1927
      %1958 = vmatprep.subr.mxu0 0.0
      %1959 = vmatpush1.msra.mxu0 %v1928
      %1960 = vmatprep.subr.mxu0 0.0
      %1961 = vmatpush1.msra.mxu0 %v1929
      %1962 = vmatprep.subr.mxu0 0.0
      %1963 = vmatpush1.msra.mxu0 %v1930
      %1964 = vmatprep.subr.mxu0 0.0
      %1965 = vmatpush1.msra.mxu0 %v1931
      %1966 = vmatprep.subr.mxu0 0.0
      %1967 = vmatpush1.msra.mxu0 %v1932
      %1968 = vmatprep.subr.mxu0 0.0
      %1969 = vmatpush1.msra.mxu0 %v1933
      %1970 = vmatprep.subr.mxu0 0.0
      %1971 = vmatpush1.msra.mxu0 %v1934
      %1972 = vmatprep.subr.mxu0 0.0
      %1973 = vmatpush1.msra.mxu0 %v1935
      %1974 = vmatprep.subr.mxu0 0.0
      %1975 = vmatpush1.msra.mxu0 %v1936
      %1976 = vmatprep.subr.mxu0 0.0
      %1977 = vmatpush1.msra.mxu0 0.0
      %1978 = vmatprep.subr.mxu0 0.0
      %1979 = vmatpush1.msra.mxu0 0.0
      %1980 = vmatprep.subr.mxu0 0.0
      %1981 = vmatpush1.msra.mxu0 0.0
      %1982 = vmatprep.subr.mxu0 0.0
      %1983 = vmatpush1.msra.mxu0 0.0
      %1984 = vmatprep.subr.mxu0 0.0
      %1985 = vmatpush1.msra.mxu0 0.0
      %1986 = vmatprep.subr.mxu0 0.0
      %1987 = vmatpush1.msra.mxu0 0.0
      %1988 = vmatprep.subr.mxu0 0.0
      %1989 = vmatpush1.msra.mxu0 0.0
      %1990 = vmatprep.subr.mxu0 0.0
      %1991 = vmatpush1.msra.mxu0 0.0
      %1992 = vmatprep.subr.mxu0 0.0
      %1993 = vmatpush1.msra.mxu0 0.0
      %1994 = vmatprep.subr.mxu0 0.0
      %1995 = vmatpush1.msra.mxu0 0.0
      %1996 = vmatprep.subr.mxu0 0.0
      %1997 = vmatpush1.msra.mxu0 0.0
      %1998 = vmatprep.subr.mxu0 0.0
      %1999 = vmatpush1.msra.mxu0 0.0
      %2000 = vmatprep.subr.mxu0 0.0
      %2001 = vmatpush1.msra.mxu0 0.0
      %2002 = vmatprep.subr.mxu0 0.0
      %2003 = vmatpush1.msra.mxu0 0.0
      %2004 = vmatprep.subr.mxu0 0.0
      %2005 = vmatpush1.msra.mxu0 0.0
      %2006 = vmatprep.subr.mxu0 0.0
      %2007 = vmatpush1.msra.mxu0 0.0
      %2008 = vmatprep.mubr.f32.mxu0 0.0
      %2009 = vmatmul.mubr.f32.gmra.mrb[0].mxu0 %v1920
      %v2010 = vpop.f32.mrb[0].mxu0
      %v2011 = vadd.f32 %v1942, %v2010
      %v2012 = vpop.f32.mrb[0].mxu0
      %2013 = vdwg.mxu0
      %vm2014 = vcmask 7168
      %2015 = vst.msk [vmem:[#allocation15] sm:$0xff] %vm2014, %v2011
    $region53: #{lstm_model_forward.3} parent=1 // pred_fallthru
      _
    // Predicated region
    $region54: #{lstm_model_forward.3} parent=1 // pred_check
      _
    $region55: #{lstm_model_forward.3} parent=1 // pred_check_branch
      %2017 = sbr.rel (0) target = $region57
    $region56: #{lstm_model_forward.3} parent=1 // pred_region
      %s2019 = ssub.s32 128, 128
      %2020 = vsyncadd [#allocation8], %s2019
      %s2022 = sshll.u32 [#allocation15], 4
      %s2023 = int_to_ptr.vmem [resolvable:$true] %s2022
      %2025 = dma.vmem_to_hbm [thread:$0]  %s2023, 128, %s6, [#allocation8]
    $region57: #{lstm_model_forward.3} parent=1 // pred_fallthru
      _
    // Predicated region
    $region58: #{lstm_model_forward.3} parent=1 // pred_check
      _
    $region59: #{lstm_model_forward.3} parent=1 // pred_check_branch
      %2027 = sbr.rel (0) target = $region61
    $region60: #{lstm_model_forward.3} parent=1 // pred_region
      %2028 = dma.done [#allocation8], 128
    $region61: #{lstm_model_forward.3} parent=1 // pred_fallthru
      _
    %2029 = vsyncpa [#allocation7], 1
    %2030 = vsyncpa [#allocation10], 1
    %2031 = vsyncpa [#allocation13], 1
    %2032 = vsyncpa [#allocation8], 1

</llo_original>
